<compile_context>
chip_gen: v5e
topology: v5e:2x2
jax: 0.10.0
libtpu: 0.0.40
codegen_flags: <defaults>
</compile_context>

<pallas_src>
import functools

import jax
import jax.numpy as jnp
from jax.experimental import pallas as pl
from jax.experimental.pallas import tpu as pltpu


# ----------------------------- Pallas kernel --------------------------------
def _window_attn_kernel(x_ref, wq_ref, wk_ref, wv_ref, bq_ref, bk_ref, bv_ref,
                        rel_ref, mask_ref, wproj_ref, bproj_ref, o_ref, head_scr,
                        *, num_heads, seq_len, n_mask_windows, has_mask):
    BbN, C = x_ref.shape
    N = seq_len
    Bb = BbN // N
    nW = n_mask_windows
    hd = C // num_heads

    # In-kernel cast to bf16 (VPU, hidden under MXU) -> no wrapper-side HBM round trip.
    x2d = x_ref[...].astype(jnp.bfloat16)                                # (Bb*N, C)

    def proj(w_ref, b_ref):
        # Full-C contraction, M = Bb*N (wide MXU work); qk scale folded in wrapper.
        y = jnp.dot(x2d, w_ref[...], preferred_element_type=jnp.float32) + b_ref[...]
        return y.astype(jnp.bfloat16).reshape(Bb, N, C)                  # leading split only

    q3 = proj(wq_ref, bq_ref)                                            # (Bb, N, C) bf16
    k3 = proj(wk_ref, bk_ref)
    v3 = proj(wv_ref, bv_ref)

    if has_mask:
        mask_all = mask_ref[...]                                         # (nW, N, N) f32

    # TODO(synk): replace the per-head loop with a single batched-over-heads einsum
    # once Mosaic supports the two-batch-dim dot_general / head-major relayout.
    for h in range(num_heads):
        q = q3[:, :, h * hd:(h + 1) * hd]                                # (Bb, N, hd) bf16
        k = k3[:, :, h * hd:(h + 1) * hd]
        v = v3[:, :, h * hd:(h + 1) * hd]

        # batched q @ k^T, contracting the last axes (single leading batch dim)
        s = jnp.einsum("bnd,bmd->bnm", q, k,
                       preferred_element_type=jnp.float32)               # (Bb, N, N) f32

        bias_h = rel_ref[h]                                              # (N, N) f32
        if has_mask:
            bias_h = bias_h[None] + mask_all                             # (nW, N, N) tiny
            s = (s.reshape(Bb // nW, nW, N, N) + bias_h[None]).reshape(Bb, N, N)
        else:
            s = s + bias_h

        # lean, numerically stable f32 softmax; reciprocal on the EUP slot
        s = s - jnp.max(s, axis=-1, keepdims=True)
        p = jnp.exp(s)
        p = p * pl.reciprocal(jnp.sum(p, axis=-1, keepdims=True), approx=True)

        o_h = jnp.einsum("bnm,bmd->bnd", p.astype(jnp.bfloat16), v,
                         preferred_element_type=jnp.float32)             # (Bb, N, hd)
        head_scr[:, h * hd:(h + 1) * hd] = o_h.astype(head_scr.dtype).reshape(BbN, hd)

    # Output projection on the full (Bb*N, C) slab (wide, full-C contraction).
    y = jnp.dot(head_scr[...], wproj_ref[...],
                preferred_element_type=jnp.float32) + bproj_ref[...]
    o_ref[...] = y.astype(o_ref.dtype)
    # attn_drop / proj_drop are 0.0 (eval mode) -> identity.


# ------------------------------- sizing helpers ------------------------------
def _vmem_budget_bytes():
    """Per-generation VMEM budget (v7x floor = 64 MiB) with 20% headroom."""
    cap = 64 * 1024 * 1024
    try:
        info = pltpu.get_tpu_info()
        cap = int(getattr(info, "vmem_capacity_bytes", cap))
    except Exception:
        pass
    return int(cap * 0.8)


def _vmem_bytes_estimate(block_b, N, C, num_heads, nW):
    """Rough VMEM footprint: pipelined blocks + constants + scratch + live temps."""
    bbn = block_b * N
    x_blk = bbn * C * 4                       # f32 input block
    o_blk = bbn * C * 4                       # f32 output block
    weights = 4 * C * C * 2                   # wq, wk, wv, wproj (bf16, single-buffered)
    biases = 4 * C * 4
    rel = num_heads * N * N * 4
    msk = nW * N * N * 4
    scratch = bbn * C * 2                     # head output slab (bf16)
    temps = 3 * bbn * C * 2 + bbn * C * 4 + 2 * block_b * N * N * 4
    return 2 * (x_blk + o_blk) + weights + biases + rel + msk + scratch + temps


def _choose_block_b(B_, N, C, num_heads, nW, vmem_budget, target_m=512):
    """block_b: multiple of nW, divides B_, fits VMEM; prefer even grid (v7x 2 TCs)
    and the smallest block whose M-dim (block_b*N) fills the 256-wide MXU target."""
    cands = [b for b in range(nW, B_ + 1, nW)
             if B_ % b == 0
             and _vmem_bytes_estimate(b, N, C, num_heads, nW) <= vmem_budget]
    if not cands:
        return nW
    even = [b for b in cands if (B_ // b) % 2 == 0]
    pool = even if even else cands
    big = [b for b in pool if b * N >= target_m]
    return min(big) if big else max(pool)


# ------------------------------- wrapper -------------------------------------
def window_attention(x, params, rel_pos_index, mask=None, *, num_heads, scale,
                     block_b=None):
    """x: (B_, N, C) float32; mask: (nW, N, N) or None. Returns (B_, N, C) float32."""
    B_, N, C = x.shape
    nH = num_heads

    # Gather the relative position bias table into (nH, N, N)   (parameter glue).
    rel_bias = params["table"][rel_pos_index.reshape(-1)]                # (N*N, nH)
    rel_bias = rel_bias.reshape(N, N, nH).transpose(2, 0, 1).astype(jnp.float32)

    has_mask = mask is not None
    if has_mask:
        mask_arr = mask.astype(jnp.float32)                              # (nW, N, N)
        nW = mask_arr.shape[0]
        assert B_ % nW == 0, "B_ must be a multiple of the number of windows"
    else:
        mask_arr = jnp.zeros((1, N, N), jnp.float32)
        nW = 1

    # Split W_qkv into Q/K/V; fold qk scale into Q in f32, then cast to bf16 MXU operands.
    wqkv = params["wqkv"]
    bqkv = params["bqkv"]
    wq = (wqkv[:, :C] * scale).astype(jnp.bfloat16)                      # (C, C)
    wk = wqkv[:, C:2 * C].astype(jnp.bfloat16)
    wv = wqkv[:, 2 * C:].astype(jnp.bfloat16)
    bq = (bqkv[:C] * scale).reshape(1, C).astype(jnp.float32)
    bk = bqkv[C:2 * C].reshape(1, C).astype(jnp.float32)
    bv = bqkv[2 * C:].reshape(1, C).astype(jnp.float32)
    wproj = params["wproj"].astype(jnp.bfloat16)                         # (C, C)
    bproj = params["bproj"].reshape(1, C).astype(jnp.float32)

    vmem_budget = _vmem_budget_bytes()
    if block_b is None:
        block_b = _choose_block_b(B_, N, C, nH, nW, vmem_budget)
    assert B_ % block_b == 0 and block_b % nW == 0
    grid = (B_ // block_b,)

    est = _vmem_bytes_estimate(block_b, N, C, nH, nW)
    vmem_limit = int(min(vmem_budget, max(2 * est, 32 * 1024 * 1024)))

    # Free XLA reshape: present x / out as flat (B_*N, C) slabs so the kernel's
    # matmul M dim is block_b*N with no in-kernel reshapes for the projections.
    x2d = x.reshape(B_ * N, C)

    kernel = functools.partial(_window_attn_kernel, num_heads=nH, seq_len=N,
                               n_mask_windows=nW, has_mask=has_mask)

    def run(single_buffer_consts):
        def const_spec(shape):
            idx = lambda i: (0,) * len(shape)
            if single_buffer_consts:
                # grid-invariant operands: no re-DMA and no double buffer
                return pl.BlockSpec(shape, idx, pipeline_mode=pl.Buffered(1))
            return pl.BlockSpec(shape, idx)

        in_specs = [
            pl.BlockSpec((block_b * N, C), lambda i: (i, 0)),            # x slab (f32)
            const_spec((C, C)), const_spec((C, C)), const_spec((C, C)),  # Wq, Wk, Wv (bf16)
            const_spec((1, C)), const_spec((1, C)), const_spec((1, C)),  # bq, bk, bv (f32)
            const_spec((nH, N, N)),                                      # rel-pos bias
            const_spec((nW, N, N)),                                      # shifted-window mask
            const_spec((C, C)), const_spec((1, C)),                      # W_proj, b_proj
        ]
        return pl.pallas_call(
            kernel,
            out_shape=jax.ShapeDtypeStruct((B_ * N, C), jnp.float32),
            grid=grid,
            in_specs=in_specs,
            out_specs=pl.BlockSpec((block_b * N, C), lambda i: (i, 0)),
            scratch_shapes=[pltpu.VMEM((block_b * N, C), jnp.bfloat16)],  # head-output slab
            compiler_params=pltpu.CompilerParams(
                dimension_semantics=("parallel",),
                vmem_limit_bytes=vmem_limit),
        )(x2d, wq, wk, wv, bq, bk, bv, rel_bias, mask_arr, wproj, bproj)

    try:
        out2d = run(True)
    except Exception:
        # Fallback if pipeline_mode=pl.Buffered(1) is unsupported by the running JAX.
        out2d = run(False)

    return out2d.reshape(B_, N, C)


# ------------------------- parameter / index setup ---------------------------
def make_relative_position_index(window_size):
    Wh, Ww = window_size
    coords = jnp.stack(jnp.meshgrid(jnp.arange(Wh), jnp.arange(Ww), indexing="ij"))
    coords_flatten = coords.reshape(2, -1)                               # (2, N)
    rel = coords_flatten[:, :, None] - coords_flatten[:, None, :]        # (2, N, N)
    rel = jnp.transpose(rel, (1, 2, 0))                                  # (N, N, 2)
    rel = rel.at[:, :, 0].add(Wh - 1)
    rel = rel.at[:, :, 1].add(Ww - 1)
    rel = rel.at[:, :, 0].multiply(2 * Ww - 1)
    return rel.sum(-1)                                                   # (N, N) int32


def init_params(key, dim, window_size, num_heads):
    Wh, Ww = window_size
    k1, k2, k3, k4, k5 = jax.random.split(key, 5)
    table_len = (2 * Wh - 1) * (2 * Ww - 1)
    # trunc_normal_(std=0.02) approximated deterministically with clipped normal.
    table = jnp.clip(0.02 * jax.random.normal(k1, (table_len, num_heads)), -0.04, 0.04)
    return {
        "table": table.astype(jnp.float32),
        # weights stored as (in_features, out_features)
        "wqkv": (0.02 * jax.random.normal(k2, (dim, 3 * dim))).astype(jnp.float32),
        "bqkv": (0.02 * jax.random.normal(k3, (3 * dim,))).astype(jnp.float32),
        "wproj": (0.02 * jax.random.normal(k4, (dim, dim))).astype(jnp.float32),
        "bproj": (0.02 * jax.random.normal(k5, (dim,))).astype(jnp.float32),
    }


# ------------------------------ pure-JAX reference ----------------------------
def reference_forward(x, params, rel_pos_index, mask, num_heads, scale):
    B_, N, C = x.shape
    hd = C // num_heads
    qkv = x @ params["wqkv"] + params["bqkv"]
    qkv = qkv.reshape(B_, N, 3, num_heads, hd).transpose(2, 0, 3, 1, 4)
    q, k, v = qkv[0] * scale, qkv[1], qkv[2]
    attn = jnp.einsum("bhnd,bhmd->bhnm", q, k)
    rel_bias = params["table"][rel_pos_index.reshape(-1)].reshape(N, N, num_heads)
    attn = attn + jnp.transpose(rel_bias, (2, 0, 1))[None]
    if mask is not None:
        nW = mask.shape[0]
        attn = attn.reshape(B_ // nW, nW, num_heads, N, N) + mask[None, :, None]
        attn = attn.reshape(B_, num_heads, N, N)
    attn = jax.nn.softmax(attn, axis=-1)
    out = jnp.einsum("bhnm,bhmd->bhnd", attn, v).transpose(0, 2, 1, 3).reshape(B_, N, C)
    return out @ params["wproj"] + params["bproj"]


# ---------------------------------- main --------------------------------------
if __name__ == "__main__":
    dim = 64
    window_size = (8, 8)
    num_heads = 2
    head_dim = dim // num_heads
    scale = head_dim ** (-0.5)

    Wh, Ww = window_size
    N = Wh * Ww                 # 64 tokens per window
    batch = 2
    nW = 2                      # number of windows per image
    B_ = batch * nW             # 4

    key = jax.random.PRNGKey(0)
    kx, kp, km = jax.random.split(key, 3)

    x = jax.random.normal(kx, (B_, N, dim), dtype=jnp.float32)
    params = init_params(kp, dim, window_size, num_heads)
    rel_pos_index = make_relative_position_index(window_size)

    # synthetic shifted-window style 0 / -100 mask, shape (nW, N, N)
    mask = jnp.where(jax.random.uniform(km, (nW, N, N)) > 0.5, 0.0, -100.0).astype(jnp.float32)

    out = window_attention(x, params, rel_pos_index, mask, num_heads=num_heads, scale=scale)
    out = jax.block_until_ready(out)

    ref = reference_forward(x, params, rel_pos_index, mask, num_heads, scale)
    assert out.shape == (B_, N, dim)
    # bf16 MXU operands + approx reciprocal -> slightly looser tolerance than pure f32
    assert jnp.allclose(out, ref, atol=2e-2, rtol=2e-2), "mismatch vs reference"

    print("KERNEL_OK")
</pallas_src>

<mosaic_0001>
module attributes {stable_mosaic.version = 11 : i64} {
  func.func @_window_attn_kernel(%arg0: i32, %arg1: memref<128x64xf32, #tpu.memory_space<vmem>>, %arg2: memref<64x64xbf16, #tpu.memory_space<vmem>>, %arg3: memref<64x64xbf16, #tpu.memory_space<vmem>>, %arg4: memref<64x64xbf16, #tpu.memory_space<vmem>>, %arg5: memref<1x64xf32, #tpu.memory_space<vmem>>, %arg6: memref<1x64xf32, #tpu.memory_space<vmem>>, %arg7: memref<1x64xf32, #tpu.memory_space<vmem>>, %arg8: memref<2x64x64xf32, #tpu.memory_space<vmem>>, %arg9: memref<2x64x64xf32, #tpu.memory_space<vmem>>, %arg10: memref<64x64xbf16, #tpu.memory_space<vmem>>, %arg11: memref<1x64xf32, #tpu.memory_space<vmem>>, %arg12: memref<128x64xf32, #tpu.memory_space<vmem>>, %arg13: memref<128x64xbf16, #tpu.memory_space<vmem>>) attributes {dimension_semantics = [#tpu.dimension_semantics<parallel>], iteration_bounds = array<i64: 2>, scalar_prefetch = 0 : i64, scratch_operands = 1 : i64, tpu.core_type = #tpu.core_type<tc>, window_params = [{transform_indices = @transform_0, window_bounds = array<i64: 128, 64>}, {pipeline_mode = #tpu.pipeline_mode<synchronous>, transform_indices = @transform_1, window_bounds = array<i64: 64, 64>}, {pipeline_mode = #tpu.pipeline_mode<synchronous>, transform_indices = @transform_2, window_bounds = array<i64: 64, 64>}, {pipeline_mode = #tpu.pipeline_mode<synchronous>, transform_indices = @transform_3, window_bounds = array<i64: 64, 64>}, {pipeline_mode = #tpu.pipeline_mode<synchronous>, transform_indices = @transform_4, window_bounds = array<i64: 1, 64>}, {pipeline_mode = #tpu.pipeline_mode<synchronous>, transform_indices = @transform_5, window_bounds = array<i64: 1, 64>}, {pipeline_mode = #tpu.pipeline_mode<synchronous>, transform_indices = @transform_6, window_bounds = array<i64: 1, 64>}, {pipeline_mode = #tpu.pipeline_mode<synchronous>, transform_indices = @transform_7, window_bounds = array<i64: 2, 64, 64>}, {pipeline_mode = #tpu.pipeline_mode<synchronous>, transform_indices = @transform_8, window_bounds = array<i64: 2, 64, 64>}, {pipeline_mode = #tpu.pipeline_mode<synchronous>, transform_indices = @transform_9, window_bounds = array<i64: 64, 64>}, {pipeline_mode = #tpu.pipeline_mode<synchronous>, transform_indices = @transform_10, window_bounds = array<i64: 1, 64>}, {transform_indices = @transform_11, window_bounds = array<i64: 128, 64>}]} {
    %c0 = arith.constant 0 : index
    %c0_0 = arith.constant 0 : index
    %0 = vector.load %arg1[%c0, %c0_0] : memref<128x64xf32, #tpu.memory_space<vmem>>, vector<128x64xf32>
    %1 = arith.truncf %0 : vector<128x64xf32> to vector<128x64xbf16>
    %c0_1 = arith.constant 0 : index
    %c0_2 = arith.constant 0 : index
    %2 = vector.load %arg2[%c0_1, %c0_2] : memref<64x64xbf16, #tpu.memory_space<vmem>>, vector<64x64xbf16>
    %cst = arith.constant dense<0.000000e+00> : vector<128x64xf32>
    %3 = tpu.matmul %1, %2, %cst {dimension_numbers = #tpu.dot_dimension_numbers<[1], [0], [0], [1], [0, 0, 1, 1], [], []>} : vector<128x64xbf16>, vector<64x64xbf16>, vector<128x64xf32> -> vector<128x64xf32>
    %c0_3 = arith.constant 0 : index
    %c0_4 = arith.constant 0 : index
    %4 = vector.load %arg5[%c0_3, %c0_4] : memref<1x64xf32, #tpu.memory_space<vmem>>, vector<1x64xf32>
    %5 = vector.broadcast %4 : vector<1x64xf32> to vector<128x64xf32>
    %6 = arith.addf %3, %5 : vector<128x64xf32>
    %7 = arith.truncf %6 : vector<128x64xf32> to vector<128x64xbf16>
    %8 = vector.shape_cast %7 : vector<128x64xbf16> to vector<2x64x64xbf16>
    %c0_5 = arith.constant 0 : index
    %c0_6 = arith.constant 0 : index
    %9 = vector.load %arg3[%c0_5, %c0_6] : memref<64x64xbf16, #tpu.memory_space<vmem>>, vector<64x64xbf16>
    %cst_7 = arith.constant dense<0.000000e+00> : vector<128x64xf32>
    %10 = tpu.matmul %1, %9, %cst_7 {dimension_numbers = #tpu.dot_dimension_numbers<[1], [0], [0], [1], [0, 0, 1, 1], [], []>} : vector<128x64xbf16>, vector<64x64xbf16>, vector<128x64xf32> -> vector<128x64xf32>
    %c0_8 = arith.constant 0 : index
    %c0_9 = arith.constant 0 : index
    %11 = vector.load %arg6[%c0_8, %c0_9] : memref<1x64xf32, #tpu.memory_space<vmem>>, vector<1x64xf32>
    %12 = vector.broadcast %11 : vector<1x64xf32> to vector<128x64xf32>
    %13 = arith.addf %10, %12 : vector<128x64xf32>
    %14 = arith.truncf %13 : vector<128x64xf32> to vector<128x64xbf16>
    %15 = vector.shape_cast %14 : vector<128x64xbf16> to vector<2x64x64xbf16>
    %c0_10 = arith.constant 0 : index
    %c0_11 = arith.constant 0 : index
    %16 = vector.load %arg4[%c0_10, %c0_11] : memref<64x64xbf16, #tpu.memory_space<vmem>>, vector<64x64xbf16>
    %cst_12 = arith.constant dense<0.000000e+00> : vector<128x64xf32>
    %17 = tpu.matmul %1, %16, %cst_12 {dimension_numbers = #tpu.dot_dimension_numbers<[1], [0], [0], [1], [0, 0, 1, 1], [], []>} : vector<128x64xbf16>, vector<64x64xbf16>, vector<128x64xf32> -> vector<128x64xf32>
    %c0_13 = arith.constant 0 : index
    %c0_14 = arith.constant 0 : index
    %18 = vector.load %arg7[%c0_13, %c0_14] : memref<1x64xf32, #tpu.memory_space<vmem>>, vector<1x64xf32>
    %19 = vector.broadcast %18 : vector<1x64xf32> to vector<128x64xf32>
    %20 = arith.addf %17, %19 : vector<128x64xf32>
    %21 = arith.truncf %20 : vector<128x64xf32> to vector<128x64xbf16>
    %22 = vector.shape_cast %21 : vector<128x64xbf16> to vector<2x64x64xbf16>
    %c0_15 = arith.constant 0 : index
    %c0_16 = arith.constant 0 : index
    %c0_17 = arith.constant 0 : index
    %23 = vector.load %arg9[%c0_15, %c0_16, %c0_17] : memref<2x64x64xf32, #tpu.memory_space<vmem>>, vector<2x64x64xf32>
    %24 = vector.extract_strided_slice %8 {offsets = [0, 0, 0], sizes = [2, 64, 32], strides = [1, 1, 1]} : vector<2x64x64xbf16> to vector<2x64x32xbf16>
    %25 = vector.extract_strided_slice %15 {offsets = [0, 0, 0], sizes = [2, 64, 32], strides = [1, 1, 1]} : vector<2x64x64xbf16> to vector<2x64x32xbf16>
    %26 = vector.extract_strided_slice %22 {offsets = [0, 0, 0], sizes = [2, 64, 32], strides = [1, 1, 1]} : vector<2x64x64xbf16> to vector<2x64x32xbf16>
    "tpu.trace_start"() <{level = 10 : i32, message = "bnd,bmd->bnm"}> : () -> ()
    %cst_18 = arith.constant dense<0.000000e+00> : vector<2x64x64xf32>
    %27 = tpu.matmul %24, %25, %cst_18 {dimension_numbers = #tpu.dot_dimension_numbers<[2], [2], [1], [1], [0, 0, 0, 1, 1, 1], [0], [0]>} : vector<2x64x32xbf16>, vector<2x64x32xbf16>, vector<2x64x64xf32> -> vector<2x64x64xf32>
    "tpu.trace_stop"() : () -> ()
    %c0_19 = arith.constant 0 : index
    %c0_20 = arith.constant 0 : index
    %c0_21 = arith.constant 0 : index
    %28 = vector.load %arg8[%c0_19, %c0_20, %c0_21] : memref<2x64x64xf32, #tpu.memory_space<vmem>>, vector<1x64x64xf32>
    %29 = vector.shape_cast %28 : vector<1x64x64xf32> to vector<64x64xf32>
    %30 = vector.shape_cast %29 : vector<64x64xf32> to vector<1x64x64xf32>
    %31 = vector.broadcast %30 : vector<1x64x64xf32> to vector<2x64x64xf32>
    %32 = arith.addf %31, %23 : vector<2x64x64xf32>
    %33 = vector.shape_cast %27 : vector<2x64x64xf32> to vector<1x2x64x64xf32>
    %34 = vector.shape_cast %32 : vector<2x64x64xf32> to vector<1x2x64x64xf32>
    %35 = arith.addf %33, %34 : vector<1x2x64x64xf32>
    %36 = vector.shape_cast %35 : vector<1x2x64x64xf32> to vector<2x64x64xf32>
    %cst_22 = arith.constant dense<0xFF800000> : vector<2x64xf32>
    %37 = vector.multi_reduction <maximumf>, %36, %cst_22 [2] : vector<2x64x64xf32> to vector<2x64xf32>
    %38 = vector.shape_cast %37 : vector<2x64xf32> to vector<2x64x1xf32>
    %39 = vector.broadcast %38 : vector<2x64x1xf32> to vector<2x64x64xf32>
    %40 = arith.subf %36, %39 : vector<2x64x64xf32>
    %41 = math.exp %40 : vector<2x64x64xf32>
    %cst_23 = arith.constant dense<0.000000e+00> : vector<2x64xf32>
    %42 = vector.multi_reduction <add>, %41, %cst_23 [2] : vector<2x64x64xf32> to vector<2x64xf32>
    %43 = vector.shape_cast %42 : vector<2x64xf32> to vector<2x64x1xf32>
    %44 = tpu.reciprocal %43 {approx = true} : vector<2x64x1xf32> -> vector<2x64x1xf32>
    %45 = vector.broadcast %44 : vector<2x64x1xf32> to vector<2x64x64xf32>
    %46 = arith.mulf %41, %45 : vector<2x64x64xf32>
    %47 = arith.truncf %46 : vector<2x64x64xf32> to vector<2x64x64xbf16>
    "tpu.trace_start"() <{level = 10 : i32, message = "bnm,bmd->bnd"}> : () -> ()
    %cst_24 = arith.constant dense<0.000000e+00> : vector<2x64x32xf32>
    %48 = tpu.matmul %47, %26, %cst_24 {dimension_numbers = #tpu.dot_dimension_numbers<[2], [1], [1], [2], [0, 0, 0, 1, 1, 2], [0], [0]>} : vector<2x64x64xbf16>, vector<2x64x32xbf16>, vector<2x64x32xf32> -> vector<2x64x32xf32>
    "tpu.trace_stop"() : () -> ()
    %49 = arith.truncf %48 : vector<2x64x32xf32> to vector<2x64x32xbf16>
    %50 = vector.shape_cast %49 : vector<2x64x32xbf16> to vector<128x32xbf16>
    %c0_25 = arith.constant 0 : index
    %c0_26 = arith.constant 0 : index
    %51 = vector.load %arg13[%c0_25, %c0_26] : memref<128x64xbf16, #tpu.memory_space<vmem>>, vector<128x32xbf16>
    tpu.vector_store %arg13[%c0_25, %c0_26], %50 {strides = array<i32>} : memref<128x64xbf16, #tpu.memory_space<vmem>>, vector<128x32xbf16>,
    %52 = vector.extract_strided_slice %8 {offsets = [0, 0, 32], sizes = [2, 64, 32], strides = [1, 1, 1]} : vector<2x64x64xbf16> to vector<2x64x32xbf16>
    %53 = vector.extract_strided_slice %15 {offsets = [0, 0, 32], sizes = [2, 64, 32], strides = [1, 1, 1]} : vector<2x64x64xbf16> to vector<2x64x32xbf16>
    %54 = vector.extract_strided_slice %22 {offsets = [0, 0, 32], sizes = [2, 64, 32], strides = [1, 1, 1]} : vector<2x64x64xbf16> to vector<2x64x32xbf16>
    "tpu.trace_start"() <{level = 10 : i32, message = "bnd,bmd->bnm"}> : () -> ()
    %cst_27 = arith.constant dense<0.000000e+00> : vector<2x64x64xf32>
    %55 = tpu.matmul %52, %53, %cst_27 {dimension_numbers = #tpu.dot_dimension_numbers<[2], [2], [1], [1], [0, 0, 0, 1, 1, 1], [0], [0]>} : vector<2x64x32xbf16>, vector<2x64x32xbf16>, vector<2x64x64xf32> -> vector<2x64x64xf32>
    "tpu.trace_stop"() : () -> ()
    %c1 = arith.constant 1 : index
    %c0_28 = arith.constant 0 : index
    %c0_29 = arith.constant 0 : index
    %56 = vector.load %arg8[%c1, %c0_28, %c0_29] : memref<2x64x64xf32, #tpu.memory_space<vmem>>, vector<1x64x64xf32>
    %57 = vector.shape_cast %56 : vector<1x64x64xf32> to vector<64x64xf32>
    %58 = vector.shape_cast %57 : vector<64x64xf32> to vector<1x64x64xf32>
    %59 = vector.broadcast %58 : vector<1x64x64xf32> to vector<2x64x64xf32>
    %60 = arith.addf %59, %23 : vector<2x64x64xf32>
    %61 = vector.shape_cast %55 : vector<2x64x64xf32> to vector<1x2x64x64xf32>
    %62 = vector.shape_cast %60 : vector<2x64x64xf32> to vector<1x2x64x64xf32>
    %63 = arith.addf %61, %62 : vector<1x2x64x64xf32>
    %64 = vector.shape_cast %63 : vector<1x2x64x64xf32> to vector<2x64x64xf32>
    %cst_30 = arith.constant dense<0xFF800000> : vector<2x64xf32>
    %65 = vector.multi_reduction <maximumf>, %64, %cst_30 [2] : vector<2x64x64xf32> to vector<2x64xf32>
    %66 = vector.shape_cast %65 : vector<2x64xf32> to vector<2x64x1xf32>
    %67 = vector.broadcast %66 : vector<2x64x1xf32> to vector<2x64x64xf32>
    %68 = arith.subf %64, %67 : vector<2x64x64xf32>
    %69 = math.exp %68 : vector<2x64x64xf32>
    %cst_31 = arith.constant dense<0.000000e+00> : vector<2x64xf32>
    %70 = vector.multi_reduction <add>, %69, %cst_31 [2] : vector<2x64x64xf32> to vector<2x64xf32>
    %71 = vector.shape_cast %70 : vector<2x64xf32> to vector<2x64x1xf32>
    %72 = tpu.reciprocal %71 {approx = true} : vector<2x64x1xf32> -> vector<2x64x1xf32>
    %73 = vector.broadcast %72 : vector<2x64x1xf32> to vector<2x64x64xf32>
    %74 = arith.mulf %69, %73 : vector<2x64x64xf32>
    %75 = arith.truncf %74 : vector<2x64x64xf32> to vector<2x64x64xbf16>
    "tpu.trace_start"() <{level = 10 : i32, message = "bnm,bmd->bnd"}> : () -> ()
    %cst_32 = arith.constant dense<0.000000e+00> : vector<2x64x32xf32>
    %76 = tpu.matmul %75, %54, %cst_32 {dimension_numbers = #tpu.dot_dimension_numbers<[2], [1], [1], [2], [0, 0, 0, 1, 1, 2], [0], [0]>} : vector<2x64x64xbf16>, vector<2x64x32xbf16>, vector<2x64x32xf32> -> vector<2x64x32xf32>
    "tpu.trace_stop"() : () -> ()
    %77 = arith.truncf %76 : vector<2x64x32xf32> to vector<2x64x32xbf16>
    %78 = vector.shape_cast %77 : vector<2x64x32xbf16> to vector<128x32xbf16>
    %c0_33 = arith.constant 0 : index
    %c32 = arith.constant 32 : index
    %79 = vector.load %arg13[%c0_33, %c32] : memref<128x64xbf16, #tpu.memory_space<vmem>>, vector<128x32xbf16>
    tpu.vector_store %arg13[%c0_33, %c32], %78 {strides = array<i32>} : memref<128x64xbf16, #tpu.memory_space<vmem>>, vector<128x32xbf16>,
    %c0_34 = arith.constant 0 : index
    %c0_35 = arith.constant 0 : index
    %80 = vector.load %arg13[%c0_34, %c0_35] : memref<128x64xbf16, #tpu.memory_space<vmem>>, vector<128x64xbf16>
    %c0_36 = arith.constant 0 : index
    %c0_37 = arith.constant 0 : index
    %81 = vector.load %arg10[%c0_36, %c0_37] : memref<64x64xbf16, #tpu.memory_space<vmem>>, vector<64x64xbf16>
    %cst_38 = arith.constant dense<0.000000e+00> : vector<128x64xf32>
    %82 = tpu.matmul %80, %81, %cst_38 {dimension_numbers = #tpu.dot_dimension_numbers<[1], [0], [0], [1], [0, 0, 1, 1], [], []>} : vector<128x64xbf16>, vector<64x64xbf16>, vector<128x64xf32> -> vector<128x64xf32>
    %c0_39 = arith.constant 0 : index
    %c0_40 = arith.constant 0 : index
    %83 = vector.load %arg11[%c0_39, %c0_40] : memref<1x64xf32, #tpu.memory_space<vmem>>, vector<1x64xf32>
    %84 = vector.broadcast %83 : vector<1x64xf32> to vector<128x64xf32>
    %85 = arith.addf %82, %84 : vector<128x64xf32>
    %c0_41 = arith.constant 0 : index
    %c0_42 = arith.constant 0 : index
    %86 = vector.load %arg12[%c0_41, %c0_42] : memref<128x64xf32, #tpu.memory_space<vmem>>, vector<128x64xf32>
    tpu.vector_store %arg12[%c0_41, %c0_42], %85 {strides = array<i32>} : memref<128x64xf32, #tpu.memory_space<vmem>>, vector<128x64xf32>,
    return
  }
  func.func @transform_0(%arg0: i32) -> (i32, i32) {
    %c0_i32 = arith.constant 0 : i32
    %c0_i32_0 = arith.constant 0 : i32
    return %arg0, %c0_i32 : i32, i32
  }
  func.func @transform_1(%arg0: i32) -> (i32, i32) {
    %c0_i32 = arith.constant 0 : i32
    %c0_i32_0 = arith.constant 0 : i32
    %c0_i32_1 = arith.constant 0 : i32
    return %c0_i32, %c0_i32_0 : i32, i32
  }
  func.func @transform_2(%arg0: i32) -> (i32, i32) {
    %c0_i32 = arith.constant 0 : i32
    %c0_i32_0 = arith.constant 0 : i32
    %c0_i32_1 = arith.constant 0 : i32
    return %c0_i32, %c0_i32_0 : i32, i32
  }
  func.func @transform_3(%arg0: i32) -> (i32, i32) {
    %c0_i32 = arith.constant 0 : i32
    %c0_i32_0 = arith.constant 0 : i32
    %c0_i32_1 = arith.constant 0 : i32
    return %c0_i32, %c0_i32_0 : i32, i32
  }
  func.func @transform_4(%arg0: i32) -> (i32, i32) {
    %c0_i32 = arith.constant 0 : i32
    %c0_i32_0 = arith.constant 0 : i32
    %c0_i32_1 = arith.constant 0 : i32
    return %c0_i32, %c0_i32_0 : i32, i32
  }
  func.func @transform_5(%arg0: i32) -> (i32, i32) {
    %c0_i32 = arith.constant 0 : i32
    %c0_i32_0 = arith.constant 0 : i32
    %c0_i32_1 = arith.constant 0 : i32
    return %c0_i32, %c0_i32_0 : i32, i32
  }
  func.func @transform_6(%arg0: i32) -> (i32, i32) {
    %c0_i32 = arith.constant 0 : i32
    %c0_i32_0 = arith.constant 0 : i32
    %c0_i32_1 = arith.constant 0 : i32
    return %c0_i32, %c0_i32_0 : i32, i32
  }
  func.func @transform_7(%arg0: i32) -> (i32, i32, i32) {
    %c0_i32 = arith.constant 0 : i32
    %c0_i32_0 = arith.constant 0 : i32
    %c0_i32_1 = arith.constant 0 : i32
    %c0_i32_2 = arith.constant 0 : i32
    return %c0_i32, %c0_i32_0, %c0_i32_1 : i32, i32, i32
  }
  func.func @transform_8(%arg0: i32) -> (i32, i32, i32) {
    %c0_i32 = arith.constant 0 : i32
    %c0_i32_0 = arith.constant 0 : i32
    %c0_i32_1 = arith.constant 0 : i32
    %c0_i32_2 = arith.constant 0 : i32
    return %c0_i32, %c0_i32_0, %c0_i32_1 : i32, i32, i32
  }
  func.func @transform_9(%arg0: i32) -> (i32, i32) {
    %c0_i32 = arith.constant 0 : i32
    %c0_i32_0 = arith.constant 0 : i32
    %c0_i32_1 = arith.constant 0 : i32
    return %c0_i32, %c0_i32_0 : i32, i32
  }
  func.func @transform_10(%arg0: i32) -> (i32, i32) {
    %c0_i32 = arith.constant 0 : i32
    %c0_i32_0 = arith.constant 0 : i32
    %c0_i32_1 = arith.constant 0 : i32
    return %c0_i32, %c0_i32_0 : i32, i32
  }
  func.func @transform_11(%arg0: i32) -> (i32, i32) {
    %c0_i32 = arith.constant 0 : i32
    %c0_i32_0 = arith.constant 0 : i32
    return %arg0, %c0_i32 : i32, i32
  }
}

module attributes {stable_mosaic.version = 11 : i64} {
  func.func @_window_attn_kernel(%arg0: i32, %arg1: memref<128x64xf32, #tpu.memory_space<vmem>>, %arg2: memref<64x64xbf16, #tpu.memory_space<vmem>>, %arg3: memref<64x64xbf16, #tpu.memory_space<vmem>>, %arg4: memref<64x64xbf16, #tpu.memory_space<vmem>>, %arg5: memref<1x64xf32, #tpu.memory_space<vmem>>, %arg6: memref<1x64xf32, #tpu.memory_space<vmem>>, %arg7: memref<1x64xf32, #tpu.memory_space<vmem>>, %arg8: memref<2x64x64xf32, #tpu.memory_space<vmem>>, %arg9: memref<2x64x64xf32, #tpu.memory_space<vmem>>, %arg10: memref<64x64xbf16, #tpu.memory_space<vmem>>, %arg11: memref<1x64xf32, #tpu.memory_space<vmem>>, %arg12: memref<128x64xf32, #tpu.memory_space<vmem>>, %arg13: memref<128x64xbf16, #tpu.memory_space<vmem>>) attributes {dimension_semantics = [#tpu.dimension_semantics<parallel>], iteration_bounds = array<i64: 2>, scalar_prefetch = 0 : i64, scratch_operands = 1 : i64, tpu.core_type = #tpu.core_type<tc>, window_params = [{transform_indices = @transform_0, window_bounds = array<i64: 128, 64>}, {pipeline_mode = #tpu.pipeline_mode<synchronous>, transform_indices = @transform_1, window_bounds = array<i64: 64, 64>}, {pipeline_mode = #tpu.pipeline_mode<synchronous>, transform_indices = @transform_2, window_bounds = array<i64: 64, 64>}, {pipeline_mode = #tpu.pipeline_mode<synchronous>, transform_indices = @transform_3, window_bounds = array<i64: 64, 64>}, {pipeline_mode = #tpu.pipeline_mode<synchronous>, transform_indices = @transform_4, window_bounds = array<i64: 1, 64>}, {pipeline_mode = #tpu.pipeline_mode<synchronous>, transform_indices = @transform_5, window_bounds = array<i64: 1, 64>}, {pipeline_mode = #tpu.pipeline_mode<synchronous>, transform_indices = @transform_6, window_bounds = array<i64: 1, 64>}, {pipeline_mode = #tpu.pipeline_mode<synchronous>, transform_indices = @transform_7, window_bounds = array<i64: 2, 64, 64>}, {pipeline_mode = #tpu.pipeline_mode<synchronous>, transform_indices = @transform_8, window_bounds = array<i64: 2, 64, 64>}, {pipeline_mode = #tpu.pipeline_mode<synchronous>, transform_indices = @transform_9, window_bounds = array<i64: 64, 64>}, {pipeline_mode = #tpu.pipeline_mode<synchronous>, transform_indices = @transform_10, window_bounds = array<i64: 1, 64>}, {transform_indices = @transform_11, window_bounds = array<i64: 128, 64>}]} {
    %c0 = arith.constant 0 : index
    %c0_0 = arith.constant 0 : index
    %0 = vector.load %arg1[%c0, %c0_0] : memref<128x64xf32, #tpu.memory_space<vmem>>, vector<128x64xf32>
    %1 = arith.truncf %0 : vector<128x64xf32> to vector<128x64xbf16>
    %c0_1 = arith.constant 0 : index
    %c0_2 = arith.constant 0 : index
    %2 = vector.load %arg2[%c0_1, %c0_2] : memref<64x64xbf16, #tpu.memory_space<vmem>>, vector<64x64xbf16>
    %cst = arith.constant dense<0.000000e+00> : vector<128x64xf32>
    %3 = tpu.matmul %1, %2, %cst {dimension_numbers = #tpu.dot_dimension_numbers<[1], [0], [0], [1], [0, 0, 1, 1], [], []>} : vector<128x64xbf16>, vector<64x64xbf16>, vector<128x64xf32> -> vector<128x64xf32>
    %c0_3 = arith.constant 0 : index
    %c0_4 = arith.constant 0 : index
    %4 = vector.load %arg5[%c0_3, %c0_4] : memref<1x64xf32, #tpu.memory_space<vmem>>, vector<1x64xf32>
    %5 = vector.broadcast %4 : vector<1x64xf32> to vector<128x64xf32>
    %6 = arith.addf %3, %5 : vector<128x64xf32>
    %7 = arith.truncf %6 : vector<128x64xf32> to vector<128x64xbf16>
    %8 = vector.shape_cast %7 : vector<128x64xbf16> to vector<2x64x64xbf16>
    %c0_5 = arith.constant 0 : index
    %c0_6 = arith.constant 0 : index
    %9 = vector.load %arg3[%c0_5, %c0_6] : memref<64x64xbf16, #tpu.memory_space<vmem>>, vector<64x64xbf16>
    %cst_7 = arith.constant dense<0.000000e+00> : vector<128x64xf32>
    %10 = tpu.matmul %1, %9, %cst_7 {dimension_numbers = #tpu.dot_dimension_numbers<[1], [0], [0], [1], [0, 0, 1, 1], [], []>} : vector<128x64xbf16>, vector<64x64xbf16>, vector<128x64xf32> -> vector<128x64xf32>
    %c0_8 = arith.constant 0 : index
    %c0_9 = arith.constant 0 : index
    %11 = vector.load %arg6[%c0_8, %c0_9] : memref<1x64xf32, #tpu.memory_space<vmem>>, vector<1x64xf32>
    %12 = vector.broadcast %11 : vector<1x64xf32> to vector<128x64xf32>
    %13 = arith.addf %10, %12 : vector<128x64xf32>
    %14 = arith.truncf %13 : vector<128x64xf32> to vector<128x64xbf16>
    %15 = vector.shape_cast %14 : vector<128x64xbf16> to vector<2x64x64xbf16>
    %c0_10 = arith.constant 0 : index
    %c0_11 = arith.constant 0 : index
    %16 = vector.load %arg4[%c0_10, %c0_11] : memref<64x64xbf16, #tpu.memory_space<vmem>>, vector<64x64xbf16>
    %cst_12 = arith.constant dense<0.000000e+00> : vector<128x64xf32>
    %17 = tpu.matmul %1, %16, %cst_12 {dimension_numbers = #tpu.dot_dimension_numbers<[1], [0], [0], [1], [0, 0, 1, 1], [], []>} : vector<128x64xbf16>, vector<64x64xbf16>, vector<128x64xf32> -> vector<128x64xf32>
    %c0_13 = arith.constant 0 : index
    %c0_14 = arith.constant 0 : index
    %18 = vector.load %arg7[%c0_13, %c0_14] : memref<1x64xf32, #tpu.memory_space<vmem>>, vector<1x64xf32>
    %19 = vector.broadcast %18 : vector<1x64xf32> to vector<128x64xf32>
    %20 = arith.addf %17, %19 : vector<128x64xf32>
    %21 = arith.truncf %20 : vector<128x64xf32> to vector<128x64xbf16>
    %22 = vector.shape_cast %21 : vector<128x64xbf16> to vector<2x64x64xbf16>
    %c0_15 = arith.constant 0 : index
    %c0_16 = arith.constant 0 : index
    %c0_17 = arith.constant 0 : index
    %23 = vector.load %arg9[%c0_15, %c0_16, %c0_17] : memref<2x64x64xf32, #tpu.memory_space<vmem>>, vector<2x64x64xf32>
    %24 = vector.extract_strided_slice %8 {offsets = [0, 0, 0], sizes = [2, 64, 32], strides = [1, 1, 1]} : vector<2x64x64xbf16> to vector<2x64x32xbf16>
    %25 = vector.extract_strided_slice %15 {offsets = [0, 0, 0], sizes = [2, 64, 32], strides = [1, 1, 1]} : vector<2x64x64xbf16> to vector<2x64x32xbf16>
    %26 = vector.extract_strided_slice %22 {offsets = [0, 0, 0], sizes = [2, 64, 32], strides = [1, 1, 1]} : vector<2x64x64xbf16> to vector<2x64x32xbf16>
    "tpu.trace_start"() <{level = 10 : i32, message = "bnd,bmd->bnm"}> : () -> ()
    %cst_18 = arith.constant dense<0.000000e+00> : vector<2x64x64xf32>
    %27 = tpu.matmul %24, %25, %cst_18 {dimension_numbers = #tpu.dot_dimension_numbers<[2], [2], [1], [1], [0, 0, 0, 1, 1, 1], [0], [0]>} : vector<2x64x32xbf16>, vector<2x64x32xbf16>, vector<2x64x64xf32> -> vector<2x64x64xf32>
    "tpu.trace_stop"() : () -> ()
    %c0_19 = arith.constant 0 : index
    %c0_20 = arith.constant 0 : index
    %c0_21 = arith.constant 0 : index
    %28 = vector.load %arg8[%c0_19, %c0_20, %c0_21] : memref<2x64x64xf32, #tpu.memory_space<vmem>>, vector<1x64x64xf32>
    %29 = vector.shape_cast %28 : vector<1x64x64xf32> to vector<64x64xf32>
    %30 = vector.shape_cast %29 : vector<64x64xf32> to vector<1x64x64xf32>
    %31 = vector.broadcast %30 : vector<1x64x64xf32> to vector<2x64x64xf32>
    %32 = arith.addf %31, %23 : vector<2x64x64xf32>
    %33 = vector.shape_cast %27 : vector<2x64x64xf32> to vector<1x2x64x64xf32>
    %34 = vector.shape_cast %32 : vector<2x64x64xf32> to vector<1x2x64x64xf32>
    %35 = arith.addf %33, %34 : vector<1x2x64x64xf32>
    %36 = vector.shape_cast %35 : vector<1x2x64x64xf32> to vector<2x64x64xf32>
    %cst_22 = arith.constant dense<0xFF800000> : vector<2x64xf32>
    %37 = vector.multi_reduction <maximumf>, %36, %cst_22 [2] : vector<2x64x64xf32> to vector<2x64xf32>
    %38 = vector.shape_cast %37 : vector<2x64xf32> to vector<2x64x1xf32>
    %39 = vector.broadcast %38 : vector<2x64x1xf32> to vector<2x64x64xf32>
    %40 = arith.subf %36, %39 : vector<2x64x64xf32>
    %41 = math.exp %40 : vector<2x64x64xf32>
    %cst_23 = arith.constant dense<0.000000e+00> : vector<2x64xf32>
    %42 = vector.multi_reduction <add>, %41, %cst_23 [2] : vector<2x64x64xf32> to vector<2x64xf32>
    %43 = vector.shape_cast %42 : vector<2x64xf32> to vector<2x64x1xf32>
    %44 = tpu.reciprocal %43 {approx = true} : vector<2x64x1xf32> -> vector<2x64x1xf32>
    %45 = vector.broadcast %44 : vector<2x64x1xf32> to vector<2x64x64xf32>
    %46 = arith.mulf %41, %45 : vector<2x64x64xf32>
    %47 = arith.truncf %46 : vector<2x64x64xf32> to vector<2x64x64xbf16>
    "tpu.trace_start"() <{level = 10 : i32, message = "bnm,bmd->bnd"}> : () -> ()
    %cst_24 = arith.constant dense<0.000000e+00> : vector<2x64x32xf32>
    %48 = tpu.matmul %47, %26, %cst_24 {dimension_numbers = #tpu.dot_dimension_numbers<[2], [1], [1], [2], [0, 0, 0, 1, 1, 2], [0], [0]>} : vector<2x64x64xbf16>, vector<2x64x32xbf16>, vector<2x64x32xf32> -> vector<2x64x32xf32>
    "tpu.trace_stop"() : () -> ()
    %49 = arith.truncf %48 : vector<2x64x32xf32> to vector<2x64x32xbf16>
    %50 = vector.shape_cast %49 : vector<2x64x32xbf16> to vector<128x32xbf16>
    %c0_25 = arith.constant 0 : index
    %c0_26 = arith.constant 0 : index
    %51 = vector.load %arg13[%c0_25, %c0_26] : memref<128x64xbf16, #tpu.memory_space<vmem>>, vector<128x32xbf16>
    tpu.vector_store %arg13[%c0_25, %c0_26], %50 {strides = array<i32>} : memref<128x64xbf16, #tpu.memory_space<vmem>>, vector<128x32xbf16>,
    %52 = vector.extract_strided_slice %8 {offsets = [0, 0, 32], sizes = [2, 64, 32], strides = [1, 1, 1]} : vector<2x64x64xbf16> to vector<2x64x32xbf16>
    %53 = vector.extract_strided_slice %15 {offsets = [0, 0, 32], sizes = [2, 64, 32], strides = [1, 1, 1]} : vector<2x64x64xbf16> to vector<2x64x32xbf16>
    %54 = vector.extract_strided_slice %22 {offsets = [0, 0, 32], sizes = [2, 64, 32], strides = [1, 1, 1]} : vector<2x64x64xbf16> to vector<2x64x32xbf16>
    "tpu.trace_start"() <{level = 10 : i32, message = "bnd,bmd->bnm"}> : () -> ()
    %cst_27 = arith.constant dense<0.000000e+00> : vector<2x64x64xf32>
    %55 = tpu.matmul %52, %53, %cst_27 {dimension_numbers = #tpu.dot_dimension_numbers<[2], [2], [1], [1], [0, 0, 0, 1, 1, 1], [0], [0]>} : vector<2x64x32xbf16>, vector<2x64x32xbf16>, vector<2x64x64xf32> -> vector<2x64x64xf32>
    "tpu.trace_stop"() : () -> ()
    %c1 = arith.constant 1 : index
    %c0_28 = arith.constant 0 : index
    %c0_29 = arith.constant 0 : index
    %56 = vector.load %arg8[%c1, %c0_28, %c0_29] : memref<2x64x64xf32, #tpu.memory_space<vmem>>, vector<1x64x64xf32>
    %57 = vector.shape_cast %56 : vector<1x64x64xf32> to vector<64x64xf32>
    %58 = vector.shape_cast %57 : vector<64x64xf32> to vector<1x64x64xf32>
    %59 = vector.broadcast %58 : vector<1x64x64xf32> to vector<2x64x64xf32>
    %60 = arith.addf %59, %23 : vector<2x64x64xf32>
    %61 = vector.shape_cast %55 : vector<2x64x64xf32> to vector<1x2x64x64xf32>
    %62 = vector.shape_cast %60 : vector<2x64x64xf32> to vector<1x2x64x64xf32>
    %63 = arith.addf %61, %62 : vector<1x2x64x64xf32>
    %64 = vector.shape_cast %63 : vector<1x2x64x64xf32> to vector<2x64x64xf32>
    %cst_30 = arith.constant dense<0xFF800000> : vector<2x64xf32>
    %65 = vector.multi_reduction <maximumf>, %64, %cst_30 [2] : vector<2x64x64xf32> to vector<2x64xf32>
    %66 = vector.shape_cast %65 : vector<2x64xf32> to vector<2x64x1xf32>
    %67 = vector.broadcast %66 : vector<2x64x1xf32> to vector<2x64x64xf32>
    %68 = arith.subf %64, %67 : vector<2x64x64xf32>
    %69 = math.exp %68 : vector<2x64x64xf32>
    %cst_31 = arith.constant dense<0.000000e+00> : vector<2x64xf32>
    %70 = vector.multi_reduction <add>, %69, %cst_31 [2] : vector<2x64x64xf32> to vector<2x64xf32>
    %71 = vector.shape_cast %70 : vector<2x64xf32> to vector<2x64x1xf32>
    %72 = tpu.reciprocal %71 {approx = true} : vector<2x64x1xf32> -> vector<2x64x1xf32>
    %73 = vector.broadcast %72 : vector<2x64x1xf32> to vector<2x64x64xf32>
    %74 = arith.mulf %69, %73 : vector<2x64x64xf32>
    %75 = arith.truncf %74 : vector<2x64x64xf32> to vector<2x64x64xbf16>
    "tpu.trace_start"() <{level = 10 : i32, message = "bnm,bmd->bnd"}> : () -> ()
    %cst_32 = arith.constant dense<0.000000e+00> : vector<2x64x32xf32>
    %76 = tpu.matmul %75, %54, %cst_32 {dimension_numbers = #tpu.dot_dimension_numbers<[2], [1], [1], [2], [0, 0, 0, 1, 1, 2], [0], [0]>} : vector<2x64x64xbf16>, vector<2x64x32xbf16>, vector<2x64x32xf32> -> vector<2x64x32xf32>
    "tpu.trace_stop"() : () -> ()
    %77 = arith.truncf %76 : vector<2x64x32xf32> to vector<2x64x32xbf16>
    %78 = vector.shape_cast %77 : vector<2x64x32xbf16> to vector<128x32xbf16>
    %c0_33 = arith.constant 0 : index
    %c32 = arith.constant 32 : index
    %79 = vector.load %arg13[%c0_33, %c32] : memref<128x64xbf16, #tpu.memory_space<vmem>>, vector<128x32xbf16>
    tpu.vector_store %arg13[%c0_33, %c32], %78 {strides = array<i32>} : memref<128x64xbf16, #tpu.memory_space<vmem>>, vector<128x32xbf16>,
    %c0_34 = arith.constant 0 : index
    %c0_35 = arith.constant 0 : index
    %80 = vector.load %arg13[%c0_34, %c0_35] : memref<128x64xbf16, #tpu.memory_space<vmem>>, vector<128x64xbf16>
    %c0_36 = arith.constant 0 : index
    %c0_37 = arith.constant 0 : index
    %81 = vector.load %arg10[%c0_36, %c0_37] : memref<64x64xbf16, #tpu.memory_space<vmem>>, vector<64x64xbf16>
    %cst_38 = arith.constant dense<0.000000e+00> : vector<128x64xf32>
    %82 = tpu.matmul %80, %81, %cst_38 {dimension_numbers = #tpu.dot_dimension_numbers<[1], [0], [0], [1], [0, 0, 1, 1], [], []>} : vector<128x64xbf16>, vector<64x64xbf16>, vector<128x64xf32> -> vector<128x64xf32>
    %c0_39 = arith.constant 0 : index
    %c0_40 = arith.constant 0 : index
    %83 = vector.load %arg11[%c0_39, %c0_40] : memref<1x64xf32, #tpu.memory_space<vmem>>, vector<1x64xf32>
    %84 = vector.broadcast %83 : vector<1x64xf32> to vector<128x64xf32>
    %85 = arith.addf %82, %84 : vector<128x64xf32>
    %c0_41 = arith.constant 0 : index
    %c0_42 = arith.constant 0 : index
    %86 = vector.load %arg12[%c0_41, %c0_42] : memref<128x64xf32, #tpu.memory_space<vmem>>, vector<128x64xf32>
    tpu.vector_store %arg12[%c0_41, %c0_42], %85 {strides = array<i32>} : memref<128x64xf32, #tpu.memory_space<vmem>>, vector<128x64xf32>,
    return
  }
  func.func @transform_0(%arg0: i32) -> (i32, i32) {
    %c0_i32 = arith.constant 0 : i32
    %c0_i32_0 = arith.constant 0 : i32
    return %arg0, %c0_i32 : i32, i32
  }
  func.func @transform_1(%arg0: i32) -> (i32, i32) {
    %c0_i32 = arith.constant 0 : i32
    %c0_i32_0 = arith.constant 0 : i32
    %c0_i32_1 = arith.constant 0 : i32
    return %c0_i32, %c0_i32_0 : i32, i32
  }
  func.func @transform_2(%arg0: i32) -> (i32, i32) {
    %c0_i32 = arith.constant 0 : i32
    %c0_i32_0 = arith.constant 0 : i32
    %c0_i32_1 = arith.constant 0 : i32
    return %c0_i32, %c0_i32_0 : i32, i32
  }
  func.func @transform_3(%arg0: i32) -> (i32, i32) {
    %c0_i32 = arith.constant 0 : i32
    %c0_i32_0 = arith.constant 0 : i32
    %c0_i32_1 = arith.constant 0 : i32
    return %c0_i32, %c0_i32_0 : i32, i32
  }
  func.func @transform_4(%arg0: i32) -> (i32, i32) {
    %c0_i32 = arith.constant 0 : i32
    %c0_i32_0 = arith.constant 0 : i32
    %c0_i32_1 = arith.constant 0 : i32
    return %c0_i32, %c0_i32_0 : i32, i32
  }
  func.func @transform_5(%arg0: i32) -> (i32, i32) {
    %c0_i32 = arith.constant 0 : i32
    %c0_i32_0 = arith.constant 0 : i32
    %c0_i32_1 = arith.constant 0 : i32
    return %c0_i32, %c0_i32_0 : i32, i32
  }
  func.func @transform_6(%arg0: i32) -> (i32, i32) {
    %c0_i32 = arith.constant 0 : i32
    %c0_i32_0 = arith.constant 0 : i32
    %c0_i32_1 = arith.constant 0 : i32
    return %c0_i32, %c0_i32_0 : i32, i32
  }
  func.func @transform_7(%arg0: i32) -> (i32, i32, i32) {
    %c0_i32 = arith.constant 0 : i32
    %c0_i32_0 = arith.constant 0 : i32
    %c0_i32_1 = arith.constant 0 : i32
    %c0_i32_2 = arith.constant 0 : i32
    return %c0_i32, %c0_i32_0, %c0_i32_1 : i32, i32, i32
  }
  func.func @transform_8(%arg0: i32) -> (i32, i32, i32) {
    %c0_i32 = arith.constant 0 : i32
    %c0_i32_0 = arith.constant 0 : i32
    %c0_i32_1 = arith.constant 0 : i32
    %c0_i32_2 = arith.constant 0 : i32
    return %c0_i32, %c0_i32_0, %c0_i32_1 : i32, i32, i32
  }
  func.func @transform_9(%arg0: i32) -> (i32, i32) {
    %c0_i32 = arith.constant 0 : i32
    %c0_i32_0 = arith.constant 0 : i32
    %c0_i32_1 = arith.constant 0 : i32
    return %c0_i32, %c0_i32_0 : i32, i32
  }
  func.func @transform_10(%arg0: i32) -> (i32, i32) {
    %c0_i32 = arith.constant 0 : i32
    %c0_i32_0 = arith.constant 0 : i32
    %c0_i32_1 = arith.constant 0 : i32
    return %c0_i32, %c0_i32_0 : i32, i32
  }
  func.func @transform_11(%arg0: i32) -> (i32, i32) {
    %c0_i32 = arith.constant 0 : i32
    %c0_i32_0 = arith.constant 0 : i32
    return %arg0, %c0_i32 : i32, i32
  }
}

</mosaic_0001>

<llo_original>
// kernel: tpu_custom_call.1
$region0: #{tpu_custom_call.1}
  #allocation0 [shape = 'u32[]', space=smem, size = 0x4, offset = 0x4, fixed_abs, tag = 'smem constant byte address 0x4 - core index']
  #allocation1 [shape = 'u32[72,128]{1,0:T(1,128)}', space=vmem, size = 0x9000, scoped, tag = 'internal scratch']
  #allocation2 [shape = 'bf16[128,64]{1,0:T(8,128)(2,1)}', space=vmem, size = 0x8000, scoped, tag = 'scratch operand']
  %s0 = inlined_call_operand.vmem [shape: f32[256,64], index: 0, kind: input, shape index: {}]
  %s1 = inlined_call_operand.vmem [shape: bf16[64,64], index: 1, kind: input, shape index: {}]
  %s2 = inlined_call_operand.vmem [shape: bf16[64,64], index: 2, kind: input, shape index: {}]
  %s3 = inlined_call_operand.vmem [shape: bf16[64,64], index: 3, kind: input, shape index: {}]
  %s4 = inlined_call_operand.hbm [shape: f32[1,64], index: 4, kind: input, shape index: {}]
  %s5 = inlined_call_operand.vmem [shape: f32[1,64], index: 5, kind: input, shape index: {}]
  %s6 = inlined_call_operand.vmem [shape: f32[1,64], index: 6, kind: input, shape index: {}]
  %s7 = inlined_call_operand.vmem [shape: f32[2,64,64], index: 7, kind: input, shape index: {}]
  %s8 = inlined_call_operand.vmem [shape: f32[2,64,64], index: 8, kind: input, shape index: {}]
  %s9 = inlined_call_operand.vmem [shape: bf16[64,64], index: 9, kind: input, shape index: {}]
  %s10 = inlined_call_operand.vmem [shape: f32[1,64], index: 10, kind: input, shape index: {}]
  %s11 = inlined_call_operand.vmem [shape: f32[256,64], index: 11, kind: output, shape index: {}]
  %s12 = sld [smem:[#allocation0]]
  $region81: #{tpu_custom_call.1} parent=0
    _
  %s14 = ssub.s32 1, %s12
  %s15 = scalar_select 0, %s14, %s12
  $region1: #{tpu_custom_call.1} parent=0
    #allocation3 [shape = 'u8[512]{0}', space=vmem, size = 0x400, scoped, tag = 'input window, operand 4, single buffered']
    #allocation4 [shape = 's32[2]{0}', space=sflag, size = 0x8, scoped, tag = 'scoped memory for tpu_custom_call.1']
    %16 = vsyncpa [#allocation4], 0
    loop: start=0, step=1, limit=4
    $region2: #{tpu_custom_call.1} parent=1 // loop_pre_header
      _
    $region3: #{tpu_custom_call.1} parent=1 // loop_header
      %s18 = sphi 0, %s22
      %p19 = scmp.ge.s32.totalorder %s18, 4
      %s28 = sphi 0, %s30
      %s31 = sphi 0, %s28
      %s32 = sphi 0, %s31
      %s48 = sphi 0, %s32
      %s52 = sphi 0, %s52
      %s54 = sphi 0, %s52
      %s55 = sphi 0, %s54
      %s69 = sphi 0, %s55
      %s73 = sphi 0, %s73
      %s75 = sphi 0, %s73
      %s76 = sphi 0, %s75
      %s90 = sphi 0, %s76
      %s94 = sphi 0, %s94
      %s96 = sphi 0, %s94
      %s97 = sphi 0, %s96
      %s111 = sphi 0, %s97
      %s115 = sphi 0, %s115
      %s117 = sphi 0, %s115
      %s118 = sphi 0, %s117
      %s132 = sphi 0, %s118
      %s136 = sphi 0, %s136
      %s138 = sphi 0, %s136
      %s139 = sphi 0, %s138
      %s153 = sphi 0, %s139
      %s157 = sphi 0, %s157
      %s159 = sphi 0, %s157
      %s160 = sphi 0, %s159
      %s174 = sphi 0, %s160
      %s178 = sphi 0, %s178
      %s180 = sphi 0, %s178
      %s181 = sphi 0, %s180
      %s195 = sphi 0, %s181
      %s199 = sphi 0, %s199
      %s201 = sphi 0, %s199
      %s202 = sphi 0, %s201
      %s216 = sphi 0, %s202
      %s220 = sphi 0, %s220
      %s222 = sphi 0, %s220
      %s223 = sphi 0, %s222
      %s237 = sphi 0, %s223
      %s241 = sphi 0, %s241
      %s243 = sphi 0, %s241
      %s244 = sphi 0, %s243
      %s258 = sphi 0, %s244
      %s264 = sphi 0, %s266
      %s267 = sphi 0, %s264
      %s268 = sphi 0, %s267
      %s284 = sphi 0, %s268
    $region4: #{tpu_custom_call.1} parent=1 // loop_header_branch
      %21 = sbr.rel (%p19) target = $region8
    $region5: #{tpu_custom_call.1} parent=1 // loop_body
      %s23 = ssub.s32 %s18, 1
      %s24 = ssub.s32 %s18, 2
      %s25 = sadd.s32 %s18, 1
      %s26 = ssub.s32 %s18, %s25
      %p27 = scmp.eq.s32.totalorder %s26, 0
      %s29 = sadd.s32 %s28, 1
      %s30 = scalar_select %p27, %s28, %s29
      %p33 = pneg %p27
      %p34 = scmp.eq.s32.totalorder %s18, 1
      %p35 = por %p33, %p34
      %p36 = scmp.ne.s32.totalorder %s28, %s31
      %p37 = scmp.eq.s32.totalorder %s18, 0
      %p38 = por %p36, %p37
      %p39 = scmp.ne.s32.totalorder %s28, %s31
      %p40 = scmp.eq.s32.totalorder %s23, 1
      %p41 = por %p39, %p40
      %p42 = scmp.ne.s32.totalorder %s31, %s32
      %p43 = scmp.eq.s32.totalorder %s23, 0
      %p44 = por %p42, %p43
      %p45 = scmp.ne.s32.totalorder %s31, %s32
      %p46 = scmp.eq.s32.totalorder %s24, 1
      %p47 = por %p45, %p46
      %p49 = scmp.ne.s32.totalorder %s32, %s48
      %p50 = scmp.eq.s32.totalorder %s24, 0
      %p51 = por %p49, %p50
      %s53 = sadd.s32 %s52, 1
      %p56 = scmp.eq.s32.totalorder %s18, 1
      %p57 = scmp.ne.s32.totalorder %s52, %s54
      %p58 = scmp.eq.s32.totalorder %s18, 0
      %p59 = por %p57, %p58
      %p60 = scmp.ne.s32.totalorder %s52, %s54
      %p61 = scmp.eq.s32.totalorder %s23, 1
      %p62 = por %p60, %p61
      %p63 = scmp.ne.s32.totalorder %s54, %s55
      %p64 = scmp.eq.s32.totalorder %s23, 0
      %p65 = por %p63, %p64
      %p66 = scmp.ne.s32.totalorder %s54, %s55
      %p67 = scmp.eq.s32.totalorder %s24, 1
      %p68 = por %p66, %p67
      %p70 = scmp.ne.s32.totalorder %s55, %s69
      %p71 = scmp.eq.s32.totalorder %s24, 0
      %p72 = por %p70, %p71
      %s74 = sadd.s32 %s73, 1
      %p77 = scmp.eq.s32.totalorder %s18, 1
      %p78 = scmp.ne.s32.totalorder %s73, %s75
      %p79 = scmp.eq.s32.totalorder %s18, 0
      %p80 = por %p78, %p79
      %p81 = scmp.ne.s32.totalorder %s73, %s75
      %p82 = scmp.eq.s32.totalorder %s23, 1
      %p83 = por %p81, %p82
      %p84 = scmp.ne.s32.totalorder %s75, %s76
      %p85 = scmp.eq.s32.totalorder %s23, 0
      %p86 = por %p84, %p85
      %p87 = scmp.ne.s32.totalorder %s75, %s76
      %p88 = scmp.eq.s32.totalorder %s24, 1
      %p89 = por %p87, %p88
      %p91 = scmp.ne.s32.totalorder %s76, %s90
      %p92 = scmp.eq.s32.totalorder %s24, 0
      %p93 = por %p91, %p92
      %s95 = sadd.s32 %s94, 1
      %p98 = scmp.eq.s32.totalorder %s18, 1
      %p99 = scmp.ne.s32.totalorder %s94, %s96
      %p100 = scmp.eq.s32.totalorder %s18, 0
      %p101 = por %p99, %p100
      %p102 = scmp.ne.s32.totalorder %s94, %s96
      %p103 = scmp.eq.s32.totalorder %s23, 1
      %p104 = por %p102, %p103
      %p105 = scmp.ne.s32.totalorder %s96, %s97
      %p106 = scmp.eq.s32.totalorder %s23, 0
      %p107 = por %p105, %p106
      %p108 = scmp.ne.s32.totalorder %s96, %s97
      %p109 = scmp.eq.s32.totalorder %s24, 1
      %p110 = por %p108, %p109
      %p112 = scmp.ne.s32.totalorder %s97, %s111
      %p113 = scmp.eq.s32.totalorder %s24, 0
      %p114 = por %p112, %p113
      %s116 = sadd.s32 %s115, 1
      %p119 = scmp.eq.s32.totalorder %s18, 1
      %p120 = scmp.ne.s32.totalorder %s115, %s117
      %p121 = scmp.eq.s32.totalorder %s18, 0
      %p122 = por %p120, %p121
      %p123 = scmp.ne.s32.totalorder %s115, %s117
      %p124 = scmp.eq.s32.totalorder %s23, 1
      %p125 = por %p123, %p124
      %p126 = scmp.ne.s32.totalorder %s117, %s118
      %p127 = scmp.eq.s32.totalorder %s23, 0
      %p128 = por %p126, %p127
      %p129 = scmp.ne.s32.totalorder %s117, %s118
      %p130 = scmp.eq.s32.totalorder %s24, 1
      %p131 = por %p129, %p130
      %p133 = scmp.ne.s32.totalorder %s118, %s132
      %p134 = scmp.eq.s32.totalorder %s24, 0
      %p135 = por %p133, %p134
      %s137 = sadd.s32 %s136, 1
      %p140 = scmp.eq.s32.totalorder %s18, 1
      %p141 = scmp.ne.s32.totalorder %s136, %s138
      %p142 = scmp.eq.s32.totalorder %s18, 0
      %p143 = por %p141, %p142
      %p144 = scmp.ne.s32.totalorder %s136, %s138
      %p145 = scmp.eq.s32.totalorder %s23, 1
      %p146 = por %p144, %p145
      %p147 = scmp.ne.s32.totalorder %s138, %s139
      %p148 = scmp.eq.s32.totalorder %s23, 0
      %p149 = por %p147, %p148
      %p150 = scmp.ne.s32.totalorder %s138, %s139
      %p151 = scmp.eq.s32.totalorder %s24, 1
      %p152 = por %p150, %p151
      %p154 = scmp.ne.s32.totalorder %s139, %s153
      %p155 = scmp.eq.s32.totalorder %s24, 0
      %p156 = por %p154, %p155
      %s158 = sadd.s32 %s157, 1
      %p161 = scmp.eq.s32.totalorder %s18, 1
      %p162 = scmp.ne.s32.totalorder %s157, %s159
      %p163 = scmp.eq.s32.totalorder %s18, 0
      %p164 = por %p162, %p163
      %p165 = scmp.ne.s32.totalorder %s157, %s159
      %p166 = scmp.eq.s32.totalorder %s23, 1
      %p167 = por %p165, %p166
      %p168 = scmp.ne.s32.totalorder %s159, %s160
      %p169 = scmp.eq.s32.totalorder %s23, 0
      %p170 = por %p168, %p169
      %p171 = scmp.ne.s32.totalorder %s159, %s160
      %p172 = scmp.eq.s32.totalorder %s24, 1
      %p173 = por %p171, %p172
      %p175 = scmp.ne.s32.totalorder %s160, %s174
      %p176 = scmp.eq.s32.totalorder %s24, 0
      %p177 = por %p175, %p176
      %s179 = sadd.s32 %s178, 1
      %p182 = scmp.eq.s32.totalorder %s18, 1
      %p183 = scmp.ne.s32.totalorder %s178, %s180
      %p184 = scmp.eq.s32.totalorder %s18, 0
      %p185 = por %p183, %p184
      %p186 = scmp.ne.s32.totalorder %s178, %s180
      %p187 = scmp.eq.s32.totalorder %s23, 1
      %p188 = por %p186, %p187
      %p189 = scmp.ne.s32.totalorder %s180, %s181
      %p190 = scmp.eq.s32.totalorder %s23, 0
      %p191 = por %p189, %p190
      %p192 = scmp.ne.s32.totalorder %s180, %s181
      %p193 = scmp.eq.s32.totalorder %s24, 1
      %p194 = por %p192, %p193
      %p196 = scmp.ne.s32.totalorder %s181, %s195
      %p197 = scmp.eq.s32.totalorder %s24, 0
      %p198 = por %p196, %p197
      %s200 = sadd.s32 %s199, 1
      %p203 = scmp.eq.s32.totalorder %s18, 1
      %p204 = scmp.ne.s32.totalorder %s199, %s201
      %p205 = scmp.eq.s32.totalorder %s18, 0
      %p206 = por %p204, %p205
      %p207 = scmp.ne.s32.totalorder %s199, %s201
      %p208 = scmp.eq.s32.totalorder %s23, 1
      %p209 = por %p207, %p208
      %p210 = scmp.ne.s32.totalorder %s201, %s202
      %p211 = scmp.eq.s32.totalorder %s23, 0
      %p212 = por %p210, %p211
      %p213 = scmp.ne.s32.totalorder %s201, %s202
      %p214 = scmp.eq.s32.totalorder %s24, 1
      %p215 = por %p213, %p214
      %p217 = scmp.ne.s32.totalorder %s202, %s216
      %p218 = scmp.eq.s32.totalorder %s24, 0
      %p219 = por %p217, %p218
      %s221 = sadd.s32 %s220, 1
      %p224 = scmp.eq.s32.totalorder %s18, 1
      %p225 = scmp.ne.s32.totalorder %s220, %s222
      %p226 = scmp.eq.s32.totalorder %s18, 0
      %p227 = por %p225, %p226
      %p228 = scmp.ne.s32.totalorder %s220, %s222
      %p229 = scmp.eq.s32.totalorder %s23, 1
      %p230 = por %p228, %p229
      %p231 = scmp.ne.s32.totalorder %s222, %s223
      %p232 = scmp.eq.s32.totalorder %s23, 0
      %p233 = por %p231, %p232
      %p234 = scmp.ne.s32.totalorder %s222, %s223
      %p235 = scmp.eq.s32.totalorder %s24, 1
      %p236 = por %p234, %p235
      %p238 = scmp.ne.s32.totalorder %s223, %s237
      %p239 = scmp.eq.s32.totalorder %s24, 0
      %p240 = por %p238, %p239
      %s242 = sadd.s32 %s241, 1
      %p245 = scmp.eq.s32.totalorder %s18, 1
      %p246 = scmp.ne.s32.totalorder %s241, %s243
      %p247 = scmp.eq.s32.totalorder %s18, 0
      %p248 = por %p246, %p247
      %p249 = scmp.ne.s32.totalorder %s241, %s243
      %p250 = scmp.eq.s32.totalorder %s23, 1
      %p251 = por %p249, %p250
      %p252 = scmp.ne.s32.totalorder %s243, %s244
      %p253 = scmp.eq.s32.totalorder %s23, 0
      %p254 = por %p252, %p253
      %p255 = scmp.ne.s32.totalorder %s243, %s244
      %p256 = scmp.eq.s32.totalorder %s24, 1
      %p257 = por %p255, %p256
      %p259 = scmp.ne.s32.totalorder %s244, %s258
      %p260 = scmp.eq.s32.totalorder %s24, 0
      %p261 = por %p259, %p260
      %s262 = ssub.s32 %s18, %s25
      %p263 = scmp.eq.s32.totalorder %s262, 0
      %s265 = sadd.s32 %s264, 1
      %s266 = scalar_select %p263, %s264, %s265
      %p269 = pneg %p263
      %p270 = scmp.eq.s32.totalorder %s18, 1
      %p271 = por %p269, %p270
      %p272 = scmp.ne.s32.totalorder %s264, %s267
      %p273 = scmp.eq.s32.totalorder %s18, 0
      %p274 = por %p272, %p273
      %p275 = scmp.ne.s32.totalorder %s264, %s267
      %p276 = scmp.eq.s32.totalorder %s23, 1
      %p277 = por %p275, %p276
      %p278 = scmp.ne.s32.totalorder %s267, %s268
      %p279 = scmp.eq.s32.totalorder %s23, 0
      %p280 = por %p278, %p279
      %p281 = scmp.ne.s32.totalorder %s267, %s268
      %p282 = scmp.eq.s32.totalorder %s24, 1
      %p283 = por %p281, %p282
      %p285 = scmp.ne.s32.totalorder %s268, %s284
      %p286 = scmp.eq.s32.totalorder %s24, 0
      %p287 = por %p285, %p286
      %p288 = scmp.le.s32.totalorder 1, %s18
      %p289 = scmp.lt.s32.totalorder %s18, 3
      %p290 = pnand %p288, %p289
      %p291 = pneg %p290
      // Predicated region
      $region9: #{tpu_custom_call.1} parent=5 // pred_check
        _
      $region10: #{tpu_custom_call.1} parent=5 // pred_check_branch
        %293 = sbr.rel (%p290) target = $region12
      $region11: #{tpu_custom_call.1} parent=5 // pred_region
        %s294 = ssub.s32 %s18, 1
        // Predicated region
        $region13: #{tpu_custom_call.1} parent=11 // pred_check
          %p295 = pneg %p65
        $region14: #{tpu_custom_call.1} parent=11 // pred_check_branch
          %297 = sbr.rel (%p295) target = $region16
        $region15: #{tpu_custom_call.1} parent=11 // pred_region
          _
        $region16: #{tpu_custom_call.1} parent=11 // pred_fallthru
          _
        // Predicated region
        $region17: #{tpu_custom_call.1} parent=11 // pred_check
          %p298 = pneg %p86
        $region18: #{tpu_custom_call.1} parent=11 // pred_check_branch
          %300 = sbr.rel (%p298) target = $region20
        $region19: #{tpu_custom_call.1} parent=11 // pred_region
          _
        $region20: #{tpu_custom_call.1} parent=11 // pred_fallthru
          _
        // Predicated region
        $region21: #{tpu_custom_call.1} parent=11 // pred_check
          %p301 = pneg %p107
        $region22: #{tpu_custom_call.1} parent=11 // pred_check_branch
          %303 = sbr.rel (%p301) target = $region24
        $region23: #{tpu_custom_call.1} parent=11 // pred_region
          _
        $region24: #{tpu_custom_call.1} parent=11 // pred_fallthru
          _
        // Predicated region
        $region25: #{tpu_custom_call.1} parent=11 // pred_check
          %p304 = pneg %p128
        $region26: #{tpu_custom_call.1} parent=11 // pred_check_branch
          %306 = sbr.rel (%p304) target = $region28
        $region27: #{tpu_custom_call.1} parent=11 // pred_region
          %308 = vsyncadd [#allocation4], 0
          %s310 = sshll.u32 %s4, 4
          %s311 = int_to_ptr.hbm [resolvable:$true] %s310
          %s312 = sshll.u32 [#allocation3], 4
          %s313 = int_to_ptr.vmem [resolvable:$true] %s312
          %315 = dma.hbm_to_vmem [thread:$0]  %s311, 16, %s313, [#allocation4]
        $region28: #{tpu_custom_call.1} parent=11 // pred_fallthru
          _
        // Predicated region
        $region29: #{tpu_custom_call.1} parent=11 // pred_check
          %p316 = pneg %p149
        $region30: #{tpu_custom_call.1} parent=11 // pred_check_branch
          %318 = sbr.rel (%p316) target = $region32
        $region31: #{tpu_custom_call.1} parent=11 // pred_region
          _
        $region32: #{tpu_custom_call.1} parent=11 // pred_fallthru
          _
        // Predicated region
        $region33: #{tpu_custom_call.1} parent=11 // pred_check
          %p319 = pneg %p170
        $region34: #{tpu_custom_call.1} parent=11 // pred_check_branch
          %321 = sbr.rel (%p319) target = $region36
        $region35: #{tpu_custom_call.1} parent=11 // pred_region
          _
        $region36: #{tpu_custom_call.1} parent=11 // pred_fallthru
          _
        // Predicated region
        $region37: #{tpu_custom_call.1} parent=11 // pred_check
          %p322 = pneg %p191
        $region38: #{tpu_custom_call.1} parent=11 // pred_check_branch
          %324 = sbr.rel (%p322) target = $region40
        $region39: #{tpu_custom_call.1} parent=11 // pred_region
          _
        $region40: #{tpu_custom_call.1} parent=11 // pred_fallthru
          _
        // Predicated region
        $region41: #{tpu_custom_call.1} parent=11 // pred_check
          %p325 = pneg %p212
        $region42: #{tpu_custom_call.1} parent=11 // pred_check_branch
          %327 = sbr.rel (%p325) target = $region44
        $region43: #{tpu_custom_call.1} parent=11 // pred_region
          _
        $region44: #{tpu_custom_call.1} parent=11 // pred_fallthru
          _
        // Predicated region
        $region45: #{tpu_custom_call.1} parent=11 // pred_check
          %p328 = pneg %p233
        $region46: #{tpu_custom_call.1} parent=11 // pred_check_branch
          %330 = sbr.rel (%p328) target = $region48
        $region47: #{tpu_custom_call.1} parent=11 // pred_region
          _
        $region48: #{tpu_custom_call.1} parent=11 // pred_fallthru
          _
        // Predicated region
        $region49: #{tpu_custom_call.1} parent=11 // pred_check
          %p331 = pneg %p254
        $region50: #{tpu_custom_call.1} parent=11 // pred_check_branch
          %333 = sbr.rel (%p331) target = $region52
        $region51: #{tpu_custom_call.1} parent=11 // pred_region
          _
        $region52: #{tpu_custom_call.1} parent=11 // pred_fallthru
          _
      $region12: #{tpu_custom_call.1} parent=5 // pred_fallthru
        _
      %p334 = scmp.lt.s32.totalorder %s18, 2
      // Predicated region
      $region53: #{tpu_custom_call.1} parent=5 // pred_check
        %p335 = pneg %p334
      $region54: #{tpu_custom_call.1} parent=5 // pred_check_branch
        %337 = sbr.rel (%p335) target = $region56
      $region55: #{tpu_custom_call.1} parent=5 // pred_region
        // Predicated region
        $region57: #{tpu_custom_call.1} parent=55 // pred_check
          %p338 = pneg %p38
        $region58: #{tpu_custom_call.1} parent=55 // pred_check_branch
          %340 = sbr.rel (%p338) target = $region60
        $region59: #{tpu_custom_call.1} parent=55 // pred_region
          %s341 = smul.u32 16, %s18
          %p342 = scmp.lt.s32.totalorder %s341, 31
          %s343 = scalar_select %p342, %s341, 31
          %s344 = smul.addr %s343, 8
          %s345 = scalar_lea.vmem %s0, %s344
          %s346 = smul.u32 16, %s18
        $region60: #{tpu_custom_call.1} parent=55 // pred_fallthru
          _
      $region56: #{tpu_custom_call.1} parent=5 // pred_fallthru
        _
      %p347 = scmp.le.s32.totalorder 1, %s18
      %p348 = scmp.lt.s32.totalorder %s18, 3
      %p349 = pnand %p347, %p348
      %p350 = pneg %p349
      // Predicated region
      $region61: #{tpu_custom_call.1} parent=5 // pred_check
        _
      $region62: #{tpu_custom_call.1} parent=5 // pred_check_branch
        %352 = sbr.rel (%p349) target = $region64
      $region63: #{tpu_custom_call.1} parent=5 // pred_region
        %s353 = ssub.s32 %s18, 1
        // Predicated region
        $region65: #{tpu_custom_call.1} parent=63 // pred_check
          %p354 = pneg %p128
        $region66: #{tpu_custom_call.1} parent=63 // pred_check_branch
          %356 = sbr.rel (%p354) target = $region68
        $region67: #{tpu_custom_call.1} parent=63 // pred_region
          %358 = dma.done [#allocation4], 16
        $region68: #{tpu_custom_call.1} parent=63 // pred_fallthru
          _
        %s359 = smul.u32 16, %s23
        %p360 = scmp.lt.s32.totalorder %s359, 31
        %s361 = scalar_select %p360, %s359, 31
        %s362 = smul.addr %s361, 8
        %s363 = scalar_lea.vmem %s0, %s362
        %p364 = pneg %p44
        %p365 = pneg %p41
        %p366 = pneg %p65
        %p367 = pneg %p62
        %p368 = pneg %p86
        %p369 = pneg %p83
        %p370 = pneg %p107
        %p371 = pneg %p104
        %p372 = pneg %p128
        %p373 = pneg %p125
        %p374 = pneg %p149
        %p375 = pneg %p146
        %p376 = pneg %p170
        %p377 = pneg %p167
        %p378 = pneg %p191
        %p379 = pneg %p188
        %p380 = pneg %p212
        %p381 = pneg %p209
        %p382 = pneg %p233
        %p383 = pneg %p230
        %p384 = pneg %p254
        %p385 = pneg %p251
        %p386 = pneg %p280
        %p387 = pneg %p277
        %s388 = smul.u32 16, %s23
        %p389 = scmp.lt.s32.totalorder %s388, 31
        %s390 = scalar_select %p389, %s388, 31
        %s391 = smul.addr %s390, 8
        %s392 = scalar_lea.vmem %s11, %s391
        %s393 = smul.u32 16, %s23
        %p394 = scmp.lt.s32.totalorder %s393, 31
        %s395 = scalar_select %p394, %s393, 31
        %s396 = smul.addr %s395, 8
        %s397 = scalar_lea.vmem %s0, %s396
        %s398 = smul.u32 16, %s23
        %s399 = smul.u32 16, %s23
        %p400 = scmp.lt.s32.totalorder %s399, 31
        %s401 = scalar_select %p400, %s399, 31
        %s402 = smul.addr %s401, 8
        %s403 = scalar_lea.vmem %s11, %s402
        %s404 = smul.u32 16, %s23
        %v406 = vld [vmem:[%s397] sm:$0xff]
        %v407 = vld [vmem:[%s397 + $0x8] sm:$0xff]
        %v408 = vld [vmem:[%s397 + $0x10] sm:$0xff]
        %v409 = vld [vmem:[%s397 + $0x18] sm:$0xff]
        %v410 = vld [vmem:[%s397 + $0x20] sm:$0xff]
        %v411 = vld [vmem:[%s397 + $0x28] sm:$0xff]
        %v412 = vld [vmem:[%s397 + $0x30] sm:$0xff]
        %v413 = vld [vmem:[%s397 + $0x38] sm:$0xff]
        %v414 = vld [vmem:[%s397 + $0x40] sm:$0xff]
        %v415 = vld [vmem:[%s397 + $0x48] sm:$0xff]
        %v416 = vld [vmem:[%s397 + $0x50] sm:$0xff]
        %v417 = vld [vmem:[%s397 + $0x58] sm:$0xff]
        %v418 = vld [vmem:[%s397 + $0x60] sm:$0xff]
        %v419 = vld [vmem:[%s397 + $0x68] sm:$0xff]
        %v420 = vld [vmem:[%s397 + $0x70] sm:$0xff]
        %v421 = vld [vmem:[%s397 + $0x78] sm:$0xff]
        %v422 = vpack.c.bf16 %v407, %v406
        %v423 = vpack.c.bf16 %v409, %v408
        %v424 = vpack.c.bf16 %v411, %v410
        %v425 = vpack.c.bf16 %v413, %v412
        %v426 = vpack.c.bf16 %v415, %v414
        %v427 = vpack.c.bf16 %v417, %v416
        %v428 = vpack.c.bf16 %v419, %v418
        %v429 = vpack.c.bf16 %v421, %v420
        %v430 = vld [vmem:[%s1] sm:$0xf]
        %v431 = vld [vmem:[%s1 + $0x4] sm:$0xf]
        %v432 = vld [vmem:[%s1 + $0x8] sm:$0xf]
        %v433 = vld [vmem:[%s1 + $0xc] sm:$0xf]
        %v434 = vld [vmem:[%s1 + $0x10] sm:$0xf]
        %v435 = vld [vmem:[%s1 + $0x14] sm:$0xf]
        %v436 = vld [vmem:[%s1 + $0x18] sm:$0xf]
        %v437 = vld [vmem:[%s1 + $0x1c] sm:$0xf]
        %v438 = vld [vmem:[#allocation3] sm:$0x1]
        %v440 = vperm.slane %v438, 0
        %v450 = vunpack.c.l.b16 %v430
        %v451 = vunpack.c.l.b16 %v431
        %v452 = vunpack.c.l.b16 %v432
        %v453 = vunpack.c.l.b16 %v433
        %v454 = vunpack.c.l.b16 %v434
        %v455 = vunpack.c.l.b16 %v435
        %v456 = vunpack.c.l.b16 %v436
        %v457 = vunpack.c.l.b16 %v437
        %v458 = vpack.c.b16 %v451, %v450
        %v459 = vpack.c.b16 %v453, %v452
        %v460 = vpack.c.b16 %v455, %v454
        %v461 = vpack.c.b16 %v457, %v456
        %vm466 = vcmask 523264
        %v468 = vsel %vm466, %v422, 0
        %v471 = vsel %vm466, %v423, 0
        %v474 = vsel %vm466, %v424, 0
        %v477 = vsel %vm466, %v425, 0
        %v480 = vsel %vm466, %v426, 0
        %v483 = vsel %vm466, %v427, 0
        %v486 = vsel %vm466, %v428, 0
        %v489 = vsel %vm466, %v429, 0
        %491 = vmatpush.bf16.msra.mxu0 0
        %492 = vmatpush.bf16.msra.mxu0 0
        %493 = vmatpush.bf16.msra.mxu0 0
        %494 = vmatpush.bf16.msra.mxu0 0
        %495 = vmatpush.bf16.msra.mxu0 %v461
        %496 = vmatpush.bf16.msra.mxu0 %v460
        %497 = vmatpush.bf16.msra.mxu0 %v459
        %498 = vmatpush.bf16.msra.mxu0 %v458
        %499 = vmatmul.bf16.gmra.mxu0 %v468
        %v500 = vpop.f32.mrf.mxu0
        %v501 = vadd.f32 %v440, %v500
        %v502 = vpop.f32.mrf.mxu0
        %v503 = vadd.f32 %v440, %v502
        %504 = vmatmul.bf16.gmra.mxu0 %v471
        %v505 = vpop.f32.mrf.mxu0
        %v506 = vadd.f32 %v440, %v505
        %v507 = vpop.f32.mrf.mxu0
        %v508 = vadd.f32 %v440, %v507
        %509 = vmatmul.bf16.gmra.mxu0 %v474
        %v510 = vpop.f32.mrf.mxu0
        %v511 = vadd.f32 %v440, %v510
        %v512 = vpop.f32.mrf.mxu0
        %v513 = vadd.f32 %v440, %v512
        %514 = vmatmul.bf16.gmra.mxu0 %v477
        %v515 = vpop.f32.mrf.mxu0
        %v516 = vadd.f32 %v440, %v515
        %v517 = vpop.f32.mrf.mxu0
        %v518 = vadd.f32 %v440, %v517
        %519 = vmatmul.bf16.gmra.mxu0 %v480
        %v520 = vpop.f32.mrf.mxu0
        %v521 = vadd.f32 %v440, %v520
        %v522 = vpop.f32.mrf.mxu0
        %v523 = vadd.f32 %v440, %v522
        %524 = vmatmul.bf16.gmra.mxu0 %v483
        %v525 = vpop.f32.mrf.mxu0
        %v526 = vadd.f32 %v440, %v525
        %v527 = vpop.f32.mrf.mxu0
        %v528 = vadd.f32 %v440, %v527
        %529 = vmatmul.bf16.gmra.mxu0 %v486
        %v530 = vpop.f32.mrf.mxu0
        %v531 = vadd.f32 %v440, %v530
        %v532 = vpop.f32.mrf.mxu0
        %v533 = vadd.f32 %v440, %v532
        %534 = vmatmul.bf16.gmra.mxu0 %v489
        %v535 = vpop.f32.mrf.mxu0
        %v536 = vadd.f32 %v440, %v535
        %v537 = vpop.f32.mrf.mxu0
        %v538 = vadd.f32 %v440, %v537
        %539 = vdwg.mxu0
        %v540 = vpack.c.bf16 %v501, %v501
        %v541 = vpack.c.bf16 %v503, %v503
        %v542 = vpack.c.bf16 %v506, %v506
        %v543 = vpack.c.bf16 %v508, %v508
        %v544 = vpack.c.bf16 %v511, %v511
        %v545 = vpack.c.bf16 %v513, %v513
        %v546 = vpack.c.bf16 %v516, %v516
        %v547 = vpack.c.bf16 %v518, %v518
        %v548 = vpack.c.bf16 %v521, %v521
        %v549 = vpack.c.bf16 %v523, %v523
        %v550 = vpack.c.bf16 %v526, %v526
        %v551 = vpack.c.bf16 %v528, %v528
        %v552 = vpack.c.bf16 %v531, %v531
        %v553 = vpack.c.bf16 %v533, %v533
        %v554 = vpack.c.bf16 %v536, %v536
        %v555 = vpack.c.bf16 %v538, %v538
        %v556 = vld [vmem:[%s2] sm:$0xf]
        %v557 = vld [vmem:[%s2 + $0x4] sm:$0xf]
        %v558 = vld [vmem:[%s2 + $0x8] sm:$0xf]
        %v559 = vld [vmem:[%s2 + $0xc] sm:$0xf]
        %v560 = vld [vmem:[%s2 + $0x10] sm:$0xf]
        %v561 = vld [vmem:[%s2 + $0x14] sm:$0xf]
        %v562 = vld [vmem:[%s2 + $0x18] sm:$0xf]
        %v563 = vld [vmem:[%s2 + $0x1c] sm:$0xf]
        %v564 = vld [vmem:[%s5] sm:$0x1]
        %v566 = vperm.slane %v564, 0
        %v576 = vunpack.c.l.b16 %v556
        %v577 = vunpack.c.l.b16 %v557
        %v578 = vunpack.c.l.b16 %v558
        %v579 = vunpack.c.l.b16 %v559
        %v580 = vunpack.c.l.b16 %v560
        %v581 = vunpack.c.l.b16 %v561
        %v582 = vunpack.c.l.b16 %v562
        %v583 = vunpack.c.l.b16 %v563
        %v584 = vpack.c.b16 %v577, %v576
        %v585 = vpack.c.b16 %v579, %v578
        %v586 = vpack.c.b16 %v581, %v580
        %v587 = vpack.c.b16 %v583, %v582
        %592 = vmatpush.bf16.msra.mxu0 0
        %593 = vmatpush.bf16.msra.mxu0 0
        %594 = vmatpush.bf16.msra.mxu0 0
        %595 = vmatpush.bf16.msra.mxu0 0
        %596 = vmatpush.bf16.msra.mxu0 %v587
        %597 = vmatpush.bf16.msra.mxu0 %v586
        %598 = vmatpush.bf16.msra.mxu0 %v585
        %599 = vmatpush.bf16.msra.mxu0 %v584
        %600 = vmatmul.bf16.gmra.mxu0 %v468
        %v601 = vpop.f32.mrf.mxu0
        %v602 = vadd.f32 %v566, %v601
        %v603 = vpop.f32.mrf.mxu0
        %v604 = vadd.f32 %v566, %v603
        %605 = vmatmul.bf16.gmra.mxu0 %v471
        %v606 = vpop.f32.mrf.mxu0
        %v607 = vadd.f32 %v566, %v606
        %v608 = vpop.f32.mrf.mxu0
        %v609 = vadd.f32 %v566, %v608
        %610 = vmatmul.bf16.gmra.mxu0 %v474
        %v611 = vpop.f32.mrf.mxu0
        %v612 = vadd.f32 %v566, %v611
        %v613 = vpop.f32.mrf.mxu0
        %v614 = vadd.f32 %v566, %v613
        %615 = vmatmul.bf16.gmra.mxu0 %v477
        %v616 = vpop.f32.mrf.mxu0
        %v617 = vadd.f32 %v566, %v616
        %v618 = vpop.f32.mrf.mxu0
        %v619 = vadd.f32 %v566, %v618
        %620 = vmatmul.bf16.gmra.mxu0 %v480
        %v621 = vpop.f32.mrf.mxu0
        %v622 = vadd.f32 %v566, %v621
        %v623 = vpop.f32.mrf.mxu0
        %v624 = vadd.f32 %v566, %v623
        %625 = vmatmul.bf16.gmra.mxu0 %v483
        %v626 = vpop.f32.mrf.mxu0
        %v627 = vadd.f32 %v566, %v626
        %v628 = vpop.f32.mrf.mxu0
        %v629 = vadd.f32 %v566, %v628
        %630 = vmatmul.bf16.gmra.mxu0 %v486
        %v631 = vpop.f32.mrf.mxu0
        %v632 = vadd.f32 %v566, %v631
        %v633 = vpop.f32.mrf.mxu0
        %v634 = vadd.f32 %v566, %v633
        %635 = vmatmul.bf16.gmra.mxu0 %v489
        %v636 = vpop.f32.mrf.mxu0
        %v637 = vadd.f32 %v566, %v636
        %v638 = vpop.f32.mrf.mxu0
        %v639 = vadd.f32 %v566, %v638
        %640 = vdwg.mxu0
        %v641 = vpack.c.bf16 %v602, %v602
        %v642 = vpack.c.bf16 %v604, %v604
        %v643 = vpack.c.bf16 %v607, %v607
        %v644 = vpack.c.bf16 %v609, %v609
        %v645 = vpack.c.bf16 %v612, %v612
        %v646 = vpack.c.bf16 %v614, %v614
        %v647 = vpack.c.bf16 %v617, %v617
        %v648 = vpack.c.bf16 %v619, %v619
        %v649 = vpack.c.bf16 %v622, %v622
        %v650 = vpack.c.bf16 %v624, %v624
        %v651 = vpack.c.bf16 %v627, %v627
        %v652 = vpack.c.bf16 %v629, %v629
        %v653 = vpack.c.bf16 %v632, %v632
        %v654 = vpack.c.bf16 %v634, %v634
        %v655 = vpack.c.bf16 %v637, %v637
        %v656 = vpack.c.bf16 %v639, %v639
        %v657 = vld [vmem:[%s3] sm:$0xf]
        %v658 = vld [vmem:[%s3 + $0x4] sm:$0xf]
        %v659 = vld [vmem:[%s3 + $0x8] sm:$0xf]
        %v660 = vld [vmem:[%s3 + $0xc] sm:$0xf]
        %v661 = vld [vmem:[%s3 + $0x10] sm:$0xf]
        %v662 = vld [vmem:[%s3 + $0x14] sm:$0xf]
        %v663 = vld [vmem:[%s3 + $0x18] sm:$0xf]
        %v664 = vld [vmem:[%s3 + $0x1c] sm:$0xf]
        %v665 = vld [vmem:[%s6] sm:$0x1]
        %v667 = vperm.slane %v665, 0
        %v677 = vunpack.c.l.b16 %v657
        %v678 = vunpack.c.l.b16 %v658
        %v679 = vunpack.c.l.b16 %v659
        %v680 = vunpack.c.l.b16 %v660
        %v681 = vunpack.c.l.b16 %v661
        %v682 = vunpack.c.l.b16 %v662
        %v683 = vunpack.c.l.b16 %v663
        %v684 = vunpack.c.l.b16 %v664
        %v685 = vpack.c.b16 %v678, %v677
        %v686 = vpack.c.b16 %v680, %v679
        %v687 = vpack.c.b16 %v682, %v681
        %v688 = vpack.c.b16 %v684, %v683
        %693 = vmatpush.bf16.msra.mxu0 0
        %694 = vmatpush.bf16.msra.mxu0 0
        %695 = vmatpush.bf16.msra.mxu0 0
        %696 = vmatpush.bf16.msra.mxu0 0
        %697 = vmatpush.bf16.msra.mxu0 %v688
        %698 = vmatpush.bf16.msra.mxu0 %v687
        %699 = vmatpush.bf16.msra.mxu0 %v686
        %700 = vmatpush.bf16.msra.mxu0 %v685
        %701 = vmatmul.bf16.gmra.mxu0 %v468
        %v702 = vpop.f32.mrf.mxu0
        %v703 = vadd.f32 %v667, %v702
        %v704 = vpop.f32.mrf.mxu0
        %v705 = vadd.f32 %v667, %v704
        %706 = vmatmul.bf16.gmra.mxu0 %v471
        %v707 = vpop.f32.mrf.mxu0
        %v708 = vadd.f32 %v667, %v707
        %v709 = vpop.f32.mrf.mxu0
        %v710 = vadd.f32 %v667, %v709
        %711 = vmatmul.bf16.gmra.mxu0 %v474
        %v712 = vpop.f32.mrf.mxu0
        %v713 = vadd.f32 %v667, %v712
        %v714 = vpop.f32.mrf.mxu0
        %v715 = vadd.f32 %v667, %v714
        %716 = vmatmul.bf16.gmra.mxu0 %v477
        %v717 = vpop.f32.mrf.mxu0
        %v718 = vadd.f32 %v667, %v717
        %v719 = vpop.f32.mrf.mxu0
        %v720 = vadd.f32 %v667, %v719
        %721 = vmatmul.bf16.gmra.mxu0 %v480
        %v722 = vpop.f32.mrf.mxu0
        %v723 = vadd.f32 %v667, %v722
        %v724 = vpop.f32.mrf.mxu0
        %v725 = vadd.f32 %v667, %v724
        %726 = vmatmul.bf16.gmra.mxu0 %v483
        %v727 = vpop.f32.mrf.mxu0
        %v728 = vadd.f32 %v667, %v727
        %v729 = vpop.f32.mrf.mxu0
        %v730 = vadd.f32 %v667, %v729
        %731 = vmatmul.bf16.gmra.mxu0 %v486
        %v732 = vpop.f32.mrf.mxu0
        %v733 = vadd.f32 %v667, %v732
        %v734 = vpop.f32.mrf.mxu0
        %v735 = vadd.f32 %v667, %v734
        %736 = vmatmul.bf16.gmra.mxu0 %v489
        %v737 = vpop.f32.mrf.mxu0
        %v738 = vadd.f32 %v667, %v737
        %v739 = vpop.f32.mrf.mxu0
        %v740 = vadd.f32 %v667, %v739
        %741 = vdwg.mxu0
        %v742 = vpack.c.bf16 %v703, %v703
        %v743 = vpack.c.bf16 %v705, %v705
        %v744 = vpack.c.bf16 %v708, %v708
        %v745 = vpack.c.bf16 %v710, %v710
        %v746 = vpack.c.bf16 %v713, %v713
        %v747 = vpack.c.bf16 %v715, %v715
        %v748 = vpack.c.bf16 %v718, %v718
        %v749 = vpack.c.bf16 %v720, %v720
        %v750 = vpack.c.bf16 %v723, %v723
        %v751 = vpack.c.bf16 %v725, %v725
        %v752 = vpack.c.bf16 %v728, %v728
        %v753 = vpack.c.bf16 %v730, %v730
        %v754 = vpack.c.bf16 %v733, %v733
        %v755 = vpack.c.bf16 %v735, %v735
        %v756 = vpack.c.bf16 %v738, %v738
        %v757 = vpack.c.bf16 %v740, %v740
        %v758 = vld [vmem:[%s8] sm:$0xff]
        %v759 = vld [vmem:[%s8 + $0x8] sm:$0xff]
        %v760 = vld [vmem:[%s8 + $0x10] sm:$0xff]
        %v761 = vld [vmem:[%s8 + $0x18] sm:$0xff]
        %v762 = vld [vmem:[%s8 + $0x20] sm:$0xff]
        %v763 = vld [vmem:[%s8 + $0x28] sm:$0xff]
        %v764 = vld [vmem:[%s8 + $0x30] sm:$0xff]
        %v765 = vld [vmem:[%s8 + $0x38] sm:$0xff]
        %v766 = vld [vmem:[%s8 + $0x40] sm:$0xff]
        %v767 = vld [vmem:[%s8 + $0x48] sm:$0xff]
        %v768 = vld [vmem:[%s8 + $0x50] sm:$0xff]
        %v769 = vld [vmem:[%s8 + $0x58] sm:$0xff]
        %v770 = vld [vmem:[%s8 + $0x60] sm:$0xff]
        %v771 = vld [vmem:[%s8 + $0x68] sm:$0xff]
        %v772 = vld [vmem:[%s8 + $0x70] sm:$0xff]
        %v773 = vld [vmem:[%s8 + $0x78] sm:$0xff]
        %v782 = vunpack.c.l.b16 %v540
        %v783 = vunpack.c.l.b16 %v541
        %v784 = vunpack.c.l.b16 %v542
        %v785 = vunpack.c.l.b16 %v543
        %v786 = vunpack.c.l.b16 %v544
        %v787 = vunpack.c.l.b16 %v545
        %v788 = vunpack.c.l.b16 %v546
        %v789 = vunpack.c.l.b16 %v547
        %v790 = vpack.c.b16 %v783, %v782
        %v791 = vpack.c.b16 %v785, %v784
        %v792 = vpack.c.b16 %v787, %v786
        %v793 = vpack.c.b16 %v789, %v788
        %v802 = vunpack.c.l.b16 %v641
        %v803 = vunpack.c.l.b16 %v642
        %v804 = vunpack.c.l.b16 %v643
        %v805 = vunpack.c.l.b16 %v644
        %v806 = vunpack.c.l.b16 %v645
        %v807 = vunpack.c.l.b16 %v646
        %v808 = vunpack.c.l.b16 %v647
        %v809 = vunpack.c.l.b16 %v648
        %v810 = vpack.c.b16 %v803, %v802
        %v811 = vpack.c.b16 %v805, %v804
        %v812 = vpack.c.b16 %v807, %v806
        %v813 = vpack.c.b16 %v809, %v808
        %vm814 = vcmask 261120
        %v816 = vsel %vm814, %v790, 0
        %v819 = vsel %vm814, %v791, 0
        %v822 = vsel %vm814, %v792, 0
        %v825 = vsel %vm814, %v793, 0
        %v828 = vsel %vm814, %v810, 0
        %v831 = vsel %vm814, %v811, 0
        %v834 = vsel %vm814, %v812, 0
        %v837 = vsel %vm814, %v813, 0
        %839 = vmatpush.bf16.xpose.msra.mxu0 0
        %840 = vmatpush.bf16.xpose.msra.mxu0 0
        %841 = vmatpush.bf16.xpose.msra.mxu0 0
        %842 = vmatpush.bf16.xpose.msra.mxu0 0
        %843 = vmatpush.bf16.xpose.msra.mxu0 %v837
        %844 = vmatpush.bf16.xpose.msra.mxu0 %v834
        %845 = vmatpush.bf16.xpose.msra.mxu0 %v831
        %846 = vmatpush.bf16.xpose.msra.mxu0 %v828
        %847 = vmatmul.bf16.gmra.mxu0 %v816
        %v848 = vpop.f32.mrf.mxu0
        %v849 = vadd.f32 0.0, %v848
        %v850 = vpop.f32.mrf.mxu0
        %v851 = vadd.f32 0.0, %v850
        %852 = vmatmul.bf16.gmra.mxu0 %v819
        %v853 = vpop.f32.mrf.mxu0
        %v854 = vadd.f32 0.0, %v853
        %v855 = vpop.f32.mrf.mxu0
        %v856 = vadd.f32 0.0, %v855
        %857 = vmatmul.bf16.gmra.mxu0 %v822
        %v858 = vpop.f32.mrf.mxu0
        %v859 = vadd.f32 0.0, %v858
        %v860 = vpop.f32.mrf.mxu0
        %v861 = vadd.f32 0.0, %v860
        %862 = vmatmul.bf16.gmra.mxu0 %v825
        %v863 = vpop.f32.mrf.mxu0
        %v864 = vadd.f32 0.0, %v863
        %v865 = vpop.f32.mrf.mxu0
        %v866 = vadd.f32 0.0, %v865
        %867 = vdwg.mxu0
        %v876 = vunpack.c.l.b16 %v548
        %v877 = vunpack.c.l.b16 %v549
        %v878 = vunpack.c.l.b16 %v550
        %v879 = vunpack.c.l.b16 %v551
        %v880 = vunpack.c.l.b16 %v552
        %v881 = vunpack.c.l.b16 %v553
        %v882 = vunpack.c.l.b16 %v554
        %v883 = vunpack.c.l.b16 %v555
        %v884 = vpack.c.b16 %v877, %v876
        %v885 = vpack.c.b16 %v879, %v878
        %v886 = vpack.c.b16 %v881, %v880
        %v887 = vpack.c.b16 %v883, %v882
        %v896 = vunpack.c.l.b16 %v649
        %v897 = vunpack.c.l.b16 %v650
        %v898 = vunpack.c.l.b16 %v651
        %v899 = vunpack.c.l.b16 %v652
        %v900 = vunpack.c.l.b16 %v653
        %v901 = vunpack.c.l.b16 %v654
        %v902 = vunpack.c.l.b16 %v655
        %v903 = vunpack.c.l.b16 %v656
        %v904 = vpack.c.b16 %v897, %v896
        %v905 = vpack.c.b16 %v899, %v898
        %v906 = vpack.c.b16 %v901, %v900
        %v907 = vpack.c.b16 %v903, %v902
        %v909 = vsel %vm814, %v884, 0
        %v912 = vsel %vm814, %v885, 0
        %v915 = vsel %vm814, %v886, 0
        %v918 = vsel %vm814, %v887, 0
        %v921 = vsel %vm814, %v904, 0
        %v924 = vsel %vm814, %v905, 0
        %v927 = vsel %vm814, %v906, 0
        %v930 = vsel %vm814, %v907, 0
        %932 = vmatpush.bf16.xpose.msra.mxu0 0
        %933 = vmatpush.bf16.xpose.msra.mxu0 0
        %934 = vmatpush.bf16.xpose.msra.mxu0 0
        %935 = vmatpush.bf16.xpose.msra.mxu0 0
        %936 = vmatpush.bf16.xpose.msra.mxu0 %v930
        %937 = vmatpush.bf16.xpose.msra.mxu0 %v927
        %938 = vmatpush.bf16.xpose.msra.mxu0 %v924
        %939 = vmatpush.bf16.xpose.msra.mxu0 %v921
        %940 = vmatmul.bf16.gmra.mxu0 %v909
        %v941 = vpop.f32.mrf.mxu0
        %v942 = vadd.f32 0.0, %v941
        %v943 = vpop.f32.mrf.mxu0
        %v944 = vadd.f32 0.0, %v943
        %945 = vmatmul.bf16.gmra.mxu0 %v912
        %v946 = vpop.f32.mrf.mxu0
        %v947 = vadd.f32 0.0, %v946
        %v948 = vpop.f32.mrf.mxu0
        %v949 = vadd.f32 0.0, %v948
        %950 = vmatmul.bf16.gmra.mxu0 %v915
        %v951 = vpop.f32.mrf.mxu0
        %v952 = vadd.f32 0.0, %v951
        %v953 = vpop.f32.mrf.mxu0
        %v954 = vadd.f32 0.0, %v953
        %955 = vmatmul.bf16.gmra.mxu0 %v918
        %v956 = vpop.f32.mrf.mxu0
        %v957 = vadd.f32 0.0, %v956
        %v958 = vpop.f32.mrf.mxu0
        %v959 = vadd.f32 0.0, %v958
        %960 = vdwg.mxu0
        %v961 = vld [vmem:[%s7] sm:$0xff]
        %v962 = vld [vmem:[%s7 + $0x8] sm:$0xff]
        %v963 = vld [vmem:[%s7 + $0x10] sm:$0xff]
        %v964 = vld [vmem:[%s7 + $0x18] sm:$0xff]
        %v965 = vld [vmem:[%s7 + $0x20] sm:$0xff]
        %v966 = vld [vmem:[%s7 + $0x28] sm:$0xff]
        %v967 = vld [vmem:[%s7 + $0x30] sm:$0xff]
        %v968 = vld [vmem:[%s7 + $0x38] sm:$0xff]
        %v969 = vadd.f32 %v961, %v758
        %v970 = vadd.f32 %v962, %v759
        %v971 = vadd.f32 %v963, %v760
        %v972 = vadd.f32 %v964, %v761
        %v973 = vadd.f32 %v965, %v762
        %v974 = vadd.f32 %v966, %v763
        %v975 = vadd.f32 %v967, %v764
        %v976 = vadd.f32 %v968, %v765
        %v977 = vadd.f32 %v961, %v766
        %v978 = vadd.f32 %v962, %v767
        %v979 = vadd.f32 %v963, %v768
        %v980 = vadd.f32 %v964, %v769
        %v981 = vadd.f32 %v965, %v770
        %v982 = vadd.f32 %v966, %v771
        %v983 = vadd.f32 %v967, %v772
        %v984 = vadd.f32 %v968, %v773
        %v985 = vadd.f32 %v849, %v969
        %v986 = vadd.f32 %v851, %v970
        %v987 = vadd.f32 %v854, %v971
        %v988 = vadd.f32 %v856, %v972
        %v989 = vadd.f32 %v859, %v973
        %v990 = vadd.f32 %v861, %v974
        %v991 = vadd.f32 %v864, %v975
        %v992 = vadd.f32 %v866, %v976
        %v993 = vadd.f32 %v942, %v977
        %v994 = vadd.f32 %v944, %v978
        %v995 = vadd.f32 %v947, %v979
        %v996 = vadd.f32 %v949, %v980
        %v997 = vadd.f32 %v952, %v981
        %v998 = vadd.f32 %v954, %v982
        %v999 = vadd.f32 %v957, %v983
        %v1000 = vadd.f32 %v959, %v984
        %v1001 = vsel %vm466, %v985, -inf
        %1002 = vmax.xlane.f32.xlu0 %v1001
        %v1003 = vpop.xlane.xlu0 %1002
        %v1004 = vsel %vm466, %v986, -inf
        %1005 = vmax.xlane.f32.xlu0 %v1004
        %v1006 = vpop.xlane.xlu0 %1005
        %v1007 = vsel %vm466, %v987, -inf
        %1008 = vmax.xlane.f32.xlu0 %v1007
        %v1009 = vpop.xlane.xlu0 %1008
        %v1010 = vsel %vm466, %v988, -inf
        %1011 = vmax.xlane.f32.xlu0 %v1010
        %v1012 = vpop.xlane.xlu0 %1011
        %v1013 = vsel %vm466, %v989, -inf
        %1014 = vmax.xlane.f32.xlu0 %v1013
        %v1015 = vpop.xlane.xlu0 %1014
        %v1016 = vsel %vm466, %v990, -inf
        %1017 = vmax.xlane.f32.xlu0 %v1016
        %v1018 = vpop.xlane.xlu0 %1017
        %v1019 = vsel %vm466, %v991, -inf
        %1020 = vmax.xlane.f32.xlu0 %v1019
        %v1021 = vpop.xlane.xlu0 %1020
        %v1022 = vsel %vm466, %v992, -inf
        %1023 = vmax.xlane.f32.xlu0 %v1022
        %v1024 = vpop.xlane.xlu0 %1023
        %v1025 = vsel %vm466, %v993, -inf
        %1026 = vmax.xlane.f32.xlu0 %v1025
        %v1027 = vpop.xlane.xlu0 %1026
        %v1028 = vsel %vm466, %v994, -inf
        %1029 = vmax.xlane.f32.xlu0 %v1028
        %v1030 = vpop.xlane.xlu0 %1029
        %v1031 = vsel %vm466, %v995, -inf
        %1032 = vmax.xlane.f32.xlu0 %v1031
        %v1033 = vpop.xlane.xlu0 %1032
        %v1034 = vsel %vm466, %v996, -inf
        %1035 = vmax.xlane.f32.xlu0 %v1034
        %v1036 = vpop.xlane.xlu0 %1035
        %v1037 = vsel %vm466, %v997, -inf
        %1038 = vmax.xlane.f32.xlu0 %v1037
        %v1039 = vpop.xlane.xlu0 %1038
        %v1040 = vsel %vm466, %v998, -inf
        %1041 = vmax.xlane.f32.xlu0 %v1040
        %v1042 = vpop.xlane.xlu0 %1041
        %v1043 = vsel %vm466, %v999, -inf
        %1044 = vmax.xlane.f32.xlu0 %v1043
        %v1045 = vpop.xlane.xlu0 %1044
        %v1046 = vsel %vm466, %v1000, -inf
        %1047 = vmax.xlane.f32.xlu0 %v1046
        %v1048 = vpop.xlane.xlu0 %1047
        %v1049 = vsub.f32 %v985, %v1003
        %v1050 = vsub.f32 %v986, %v1006
        %v1051 = vsub.f32 %v987, %v1009
        %v1052 = vsub.f32 %v988, %v1012
        %v1053 = vsub.f32 %v989, %v1015
        %v1054 = vsub.f32 %v990, %v1018
        %v1055 = vsub.f32 %v991, %v1021
        %v1056 = vsub.f32 %v992, %v1024
        %v1057 = vsub.f32 %v993, %v1027
        %v1058 = vsub.f32 %v994, %v1030
        %v1059 = vsub.f32 %v995, %v1033
        %v1060 = vsub.f32 %v996, %v1036
        %v1061 = vsub.f32 %v997, %v1039
        %v1062 = vsub.f32 %v998, %v1042
        %v1063 = vsub.f32 %v999, %v1045
        %v1064 = vsub.f32 %v1000, %v1048
        %v1065 = vmul.f32 %v1049, 1.442695
        %v1066 = vpow.pop %v1065
        %v1067 = vmul.f32 %v1050, 1.442695
        %v1068 = vpow.pop %v1067
        %v1069 = vmul.f32 %v1051, 1.442695
        %v1070 = vpow.pop %v1069
        %v1071 = vmul.f32 %v1052, 1.442695
        %v1072 = vpow.pop %v1071
        %v1073 = vmul.f32 %v1053, 1.442695
        %v1074 = vpow.pop %v1073
        %v1075 = vmul.f32 %v1054, 1.442695
        %v1076 = vpow.pop %v1075
        %v1077 = vmul.f32 %v1055, 1.442695
        %v1078 = vpow.pop %v1077
        %v1079 = vmul.f32 %v1056, 1.442695
        %v1080 = vpow.pop %v1079
        %v1081 = vmul.f32 %v1057, 1.442695
        %v1082 = vpow.pop %v1081
        %v1083 = vmul.f32 %v1058, 1.442695
        %v1084 = vpow.pop %v1083
        %v1085 = vmul.f32 %v1059, 1.442695
        %v1086 = vpow.pop %v1085
        %v1087 = vmul.f32 %v1060, 1.442695
        %v1088 = vpow.pop %v1087
        %v1089 = vmul.f32 %v1061, 1.442695
        %v1090 = vpow.pop %v1089
        %v1091 = vmul.f32 %v1062, 1.442695
        %v1092 = vpow.pop %v1091
        %v1093 = vmul.f32 %v1063, 1.442695
        %v1094 = vpow.pop %v1093
        %v1095 = vmul.f32 %v1064, 1.442695
        %v1096 = vpow.pop %v1095
        %v1097 = vsel %vm466, %v1066, 0.0
        %1098 = vadd.xlane.f32.xlu0 %v1097
        %v1099 = vpop.xlane.xlu0 %1098
        %v1100 = vsel %vm466, %v1068, 0.0
        %1101 = vadd.xlane.f32.xlu0 %v1100
        %v1102 = vpop.xlane.xlu0 %1101
        %v1103 = vsel %vm466, %v1070, 0.0
        %1104 = vadd.xlane.f32.xlu0 %v1103
        %v1105 = vpop.xlane.xlu0 %1104
        %v1106 = vsel %vm466, %v1072, 0.0
        %1107 = vadd.xlane.f32.xlu0 %v1106
        %v1108 = vpop.xlane.xlu0 %1107
        %v1109 = vsel %vm466, %v1074, 0.0
        %1110 = vadd.xlane.f32.xlu0 %v1109
        %v1111 = vpop.xlane.xlu0 %1110
        %v1112 = vsel %vm466, %v1076, 0.0
        %1113 = vadd.xlane.f32.xlu0 %v1112
        %v1114 = vpop.xlane.xlu0 %1113
        %v1115 = vsel %vm466, %v1078, 0.0
        %1116 = vadd.xlane.f32.xlu0 %v1115
        %v1117 = vpop.xlane.xlu0 %1116
        %v1118 = vsel %vm466, %v1080, 0.0
        %1119 = vadd.xlane.f32.xlu0 %v1118
        %v1120 = vpop.xlane.xlu0 %1119
        %v1121 = vsel %vm466, %v1082, 0.0
        %1122 = vadd.xlane.f32.xlu0 %v1121
        %v1123 = vpop.xlane.xlu0 %1122
        %v1124 = vsel %vm466, %v1084, 0.0
        %1125 = vadd.xlane.f32.xlu0 %v1124
        %v1126 = vpop.xlane.xlu0 %1125
        %v1127 = vsel %vm466, %v1086, 0.0
        %1128 = vadd.xlane.f32.xlu0 %v1127
        %v1129 = vpop.xlane.xlu0 %1128
        %v1130 = vsel %vm466, %v1088, 0.0
        %1131 = vadd.xlane.f32.xlu0 %v1130
        %v1132 = vpop.xlane.xlu0 %1131
        %v1133 = vsel %vm466, %v1090, 0.0
        %1134 = vadd.xlane.f32.xlu0 %v1133
        %v1135 = vpop.xlane.xlu0 %1134
        %v1136 = vsel %vm466, %v1092, 0.0
        %1137 = vadd.xlane.f32.xlu0 %v1136
        %v1138 = vpop.xlane.xlu0 %1137
        %v1139 = vsel %vm466, %v1094, 0.0
        %1140 = vadd.xlane.f32.xlu0 %v1139
        %v1141 = vpop.xlane.xlu0 %1140
        %v1142 = vsel %vm466, %v1096, 0.0
        %1143 = vadd.xlane.f32.xlu0 %v1142
        %v1144 = vpop.xlane.xlu0 %1143
        %v1145 = vrcp.pop %v1099
        %v1146 = vrcp.pop %v1102
        %v1147 = vrcp.pop %v1105
        %v1148 = vrcp.pop %v1108
        %v1149 = vrcp.pop %v1111
        %v1150 = vrcp.pop %v1114
        %v1151 = vrcp.pop %v1117
        %v1152 = vrcp.pop %v1120
        %v1153 = vrcp.pop %v1123
        %v1154 = vrcp.pop %v1126
        %v1155 = vrcp.pop %v1129
        %v1156 = vrcp.pop %v1132
        %v1157 = vrcp.pop %v1135
        %v1158 = vrcp.pop %v1138
        %v1159 = vrcp.pop %v1141
        %v1160 = vrcp.pop %v1144
        %v1161 = vmul.f32 %v1066, %v1145
        %v1162 = vmul.f32 %v1068, %v1146
        %v1163 = vmul.f32 %v1070, %v1147
        %v1164 = vmul.f32 %v1072, %v1148
        %v1165 = vmul.f32 %v1074, %v1149
        %v1166 = vmul.f32 %v1076, %v1150
        %v1167 = vmul.f32 %v1078, %v1151
        %v1168 = vmul.f32 %v1080, %v1152
        %v1169 = vmul.f32 %v1082, %v1153
        %v1170 = vmul.f32 %v1084, %v1154
        %v1171 = vmul.f32 %v1086, %v1155
        %v1172 = vmul.f32 %v1088, %v1156
        %v1173 = vmul.f32 %v1090, %v1157
        %v1174 = vmul.f32 %v1092, %v1158
        %v1175 = vmul.f32 %v1094, %v1159
        %v1176 = vmul.f32 %v1096, %v1160
        %v1177 = vpack.c.bf16 %v1161, %v1161
        %v1178 = vpack.c.bf16 %v1162, %v1162
        %v1179 = vpack.c.bf16 %v1163, %v1163
        %v1180 = vpack.c.bf16 %v1164, %v1164
        %v1181 = vpack.c.bf16 %v1165, %v1165
        %v1182 = vpack.c.bf16 %v1166, %v1166
        %v1183 = vpack.c.bf16 %v1167, %v1167
        %v1184 = vpack.c.bf16 %v1168, %v1168
        %v1185 = vpack.c.bf16 %v1169, %v1169
        %v1186 = vpack.c.bf16 %v1170, %v1170
        %v1187 = vpack.c.bf16 %v1171, %v1171
        %v1188 = vpack.c.bf16 %v1172, %v1172
        %v1189 = vpack.c.bf16 %v1173, %v1173
        %v1190 = vpack.c.bf16 %v1174, %v1174
        %v1191 = vpack.c.bf16 %v1175, %v1175
        %v1192 = vpack.c.bf16 %v1176, %v1176
        %v1201 = vunpack.c.l.b16 %v1177
        %v1202 = vunpack.c.l.b16 %v1178
        %v1203 = vunpack.c.l.b16 %v1179
        %v1204 = vunpack.c.l.b16 %v1180
        %v1205 = vunpack.c.l.b16 %v1181
        %v1206 = vunpack.c.l.b16 %v1182
        %v1207 = vunpack.c.l.b16 %v1183
        %v1208 = vunpack.c.l.b16 %v1184
        %v1209 = vpack.c.b16 %v1202, %v1201
        %v1210 = vpack.c.b16 %v1204, %v1203
        %v1211 = vpack.c.b16 %v1206, %v1205
        %v1212 = vpack.c.b16 %v1208, %v1207
        %v1221 = vunpack.c.l.b16 %v742
        %v1222 = vunpack.c.l.b16 %v743
        %v1223 = vunpack.c.l.b16 %v744
        %v1224 = vunpack.c.l.b16 %v745
        %v1225 = vunpack.c.l.b16 %v746
        %v1226 = vunpack.c.l.b16 %v747
        %v1227 = vunpack.c.l.b16 %v748
        %v1228 = vunpack.c.l.b16 %v749
        %v1229 = vpack.c.b16 %v1222, %v1221
        %v1230 = vpack.c.b16 %v1224, %v1223
        %v1231 = vpack.c.b16 %v1226, %v1225
        %v1232 = vpack.c.b16 %v1228, %v1227
        %v1238 = vsel %vm466, %v1209, 0
        %v1241 = vsel %vm466, %v1210, 0
        %v1244 = vsel %vm466, %v1211, 0
        %v1247 = vsel %vm466, %v1212, 0
        %1249 = vmatpush.bf16.msra.mxu0 0
        %1250 = vmatpush.bf16.msra.mxu0 0
        %1251 = vmatpush.bf16.msra.mxu0 0
        %1252 = vmatpush.bf16.msra.mxu0 0
        %1253 = vmatpush.bf16.msra.mxu0 %v1232
        %1254 = vmatpush.bf16.msra.mxu0 %v1231
        %1255 = vmatpush.bf16.msra.mxu0 %v1230
        %1256 = vmatpush.bf16.msra.mxu0 %v1229
        %1257 = vmatmul.bf16.gmra.mxu0 %v1238
        %v1258 = vpop.f32.mrf.mxu0
        %v1259 = vadd.f32 0.0, %v1258
        %v1260 = vpop.f32.mrf.mxu0
        %v1261 = vadd.f32 0.0, %v1260
        %1262 = vmatmul.bf16.gmra.mxu0 %v1241
        %v1263 = vpop.f32.mrf.mxu0
        %v1264 = vadd.f32 0.0, %v1263
        %v1265 = vpop.f32.mrf.mxu0
        %v1266 = vadd.f32 0.0, %v1265
        %1267 = vmatmul.bf16.gmra.mxu0 %v1244
        %v1268 = vpop.f32.mrf.mxu0
        %v1269 = vadd.f32 0.0, %v1268
        %v1270 = vpop.f32.mrf.mxu0
        %v1271 = vadd.f32 0.0, %v1270
        %1272 = vmatmul.bf16.gmra.mxu0 %v1247
        %v1273 = vpop.f32.mrf.mxu0
        %v1274 = vadd.f32 0.0, %v1273
        %v1275 = vpop.f32.mrf.mxu0
        %v1276 = vadd.f32 0.0, %v1275
        %1277 = vdwg.mxu0
        %v1286 = vunpack.c.l.b16 %v1185
        %v1287 = vunpack.c.l.b16 %v1186
        %v1288 = vunpack.c.l.b16 %v1187
        %v1289 = vunpack.c.l.b16 %v1188
        %v1290 = vunpack.c.l.b16 %v1189
        %v1291 = vunpack.c.l.b16 %v1190
        %v1292 = vunpack.c.l.b16 %v1191
        %v1293 = vunpack.c.l.b16 %v1192
        %v1294 = vpack.c.b16 %v1287, %v1286
        %v1295 = vpack.c.b16 %v1289, %v1288
        %v1296 = vpack.c.b16 %v1291, %v1290
        %v1297 = vpack.c.b16 %v1293, %v1292
        %v1306 = vunpack.c.l.b16 %v750
        %v1307 = vunpack.c.l.b16 %v751
        %v1308 = vunpack.c.l.b16 %v752
        %v1309 = vunpack.c.l.b16 %v753
        %v1310 = vunpack.c.l.b16 %v754
        %v1311 = vunpack.c.l.b16 %v755
        %v1312 = vunpack.c.l.b16 %v756
        %v1313 = vunpack.c.l.b16 %v757
        %v1314 = vpack.c.b16 %v1307, %v1306
        %v1315 = vpack.c.b16 %v1309, %v1308
        %v1316 = vpack.c.b16 %v1311, %v1310
        %v1317 = vpack.c.b16 %v1313, %v1312
        %v1323 = vsel %vm466, %v1294, 0
        %v1326 = vsel %vm466, %v1295, 0
        %v1329 = vsel %vm466, %v1296, 0
        %v1332 = vsel %vm466, %v1297, 0
        %1334 = vmatpush.bf16.msra.mxu0 0
        %1335 = vmatpush.bf16.msra.mxu0 0
        %1336 = vmatpush.bf16.msra.mxu0 0
        %1337 = vmatpush.bf16.msra.mxu0 0
        %1338 = vmatpush.bf16.msra.mxu0 %v1317
        %1339 = vmatpush.bf16.msra.mxu0 %v1316
        %1340 = vmatpush.bf16.msra.mxu0 %v1315
        %1341 = vmatpush.bf16.msra.mxu0 %v1314
        %1342 = vmatmul.bf16.gmra.mxu0 %v1323
        %v1343 = vpop.f32.mrf.mxu0
        %v1344 = vadd.f32 0.0, %v1343
        %v1345 = vpop.f32.mrf.mxu0
        %v1346 = vadd.f32 0.0, %v1345
        %1347 = vmatmul.bf16.gmra.mxu0 %v1326
        %v1348 = vpop.f32.mrf.mxu0
        %v1349 = vadd.f32 0.0, %v1348
        %v1350 = vpop.f32.mrf.mxu0
        %v1351 = vadd.f32 0.0, %v1350
        %1352 = vmatmul.bf16.gmra.mxu0 %v1329
        %v1353 = vpop.f32.mrf.mxu0
        %v1354 = vadd.f32 0.0, %v1353
        %v1355 = vpop.f32.mrf.mxu0
        %v1356 = vadd.f32 0.0, %v1355
        %1357 = vmatmul.bf16.gmra.mxu0 %v1332
        %v1358 = vpop.f32.mrf.mxu0
        %v1359 = vadd.f32 0.0, %v1358
        %v1360 = vpop.f32.mrf.mxu0
        %v1361 = vadd.f32 0.0, %v1360
        %1362 = vdwg.mxu0
        %v1363 = vpack.c.bf16 %v1259, %v1259
        %v1364 = vpack.c.bf16 %v1261, %v1261
        %v1365 = vpack.c.bf16 %v1264, %v1264
        %v1366 = vpack.c.bf16 %v1266, %v1266
        %v1367 = vpack.c.bf16 %v1269, %v1269
        %v1368 = vpack.c.bf16 %v1271, %v1271
        %v1369 = vpack.c.bf16 %v1274, %v1274
        %v1370 = vpack.c.bf16 %v1276, %v1276
        %v1371 = vpack.c.bf16 %v1344, %v1344
        %v1372 = vpack.c.bf16 %v1346, %v1346
        %v1373 = vpack.c.bf16 %v1349, %v1349
        %v1374 = vpack.c.bf16 %v1351, %v1351
        %v1375 = vpack.c.bf16 %v1354, %v1354
        %v1376 = vpack.c.bf16 %v1356, %v1356
        %v1377 = vpack.c.bf16 %v1359, %v1359
        %v1378 = vpack.c.bf16 %v1361, %v1361
        %vm1379 = vcmask 257024
        %1380 = vst.msk [vmem:[#allocation2] sm:$0xf] %vm1379, %v1363
        %1381 = vst.msk [vmem:[#allocation2 + $0x4] sm:$0xf] %vm1379, %v1364
        %1382 = vst.msk [vmem:[#allocation2 + $0x8] sm:$0xf] %vm1379, %v1365
        %1383 = vst.msk [vmem:[#allocation2 + $0xc] sm:$0xf] %vm1379, %v1366
        %1384 = vst.msk [vmem:[#allocation2 + $0x10] sm:$0xf] %vm1379, %v1367
        %1385 = vst.msk [vmem:[#allocation2 + $0x14] sm:$0xf] %vm1379, %v1368
        %1386 = vst.msk [vmem:[#allocation2 + $0x18] sm:$0xf] %vm1379, %v1369
        %1387 = vst.msk [vmem:[#allocation2 + $0x1c] sm:$0xf] %vm1379, %v1370
        %1388 = vst.msk [vmem:[#allocation2 + $0x20] sm:$0xf] %vm1379, %v1371
        %1389 = vst.msk [vmem:[#allocation2 + $0x24] sm:$0xf] %vm1379, %v1372
        %1390 = vst.msk [vmem:[#allocation2 + $0x28] sm:$0xf] %vm1379, %v1373
        %1391 = vst.msk [vmem:[#allocation2 + $0x2c] sm:$0xf] %vm1379, %v1374
        %1392 = vst.msk [vmem:[#allocation2 + $0x30] sm:$0xf] %vm1379, %v1375
        %1393 = vst.msk [vmem:[#allocation2 + $0x34] sm:$0xf] %vm1379, %v1376
        %1394 = vst.msk [vmem:[#allocation2 + $0x38] sm:$0xf] %vm1379, %v1377
        %1395 = vst.msk [vmem:[#allocation2 + $0x3c] sm:$0xf] %vm1379, %v1378
        %1396 = vrot.lane.b32.xlu0 %v790, 96
        %v1397 = vpop.permute.xlu0 %1396
        %1398 = vrot.lane.b32.xlu0 %v791, 96
        %v1399 = vpop.permute.xlu0 %1398
        %1400 = vrot.lane.b32.xlu0 %v792, 96
        %v1401 = vpop.permute.xlu0 %1400
        %1402 = vrot.lane.b32.xlu0 %v793, 96
        %v1403 = vpop.permute.xlu0 %1402
        %1404 = vrot.lane.b32.xlu0 %v810, 96
        %v1405 = vpop.permute.xlu0 %1404
        %1406 = vrot.lane.b32.xlu0 %v811, 96
        %v1407 = vpop.permute.xlu0 %1406
        %1408 = vrot.lane.b32.xlu0 %v812, 96
        %v1409 = vpop.permute.xlu0 %1408
        %1410 = vrot.lane.b32.xlu0 %v813, 96
        %v1411 = vpop.permute.xlu0 %1410
        %v1413 = vsel %vm814, %v1397, 0
        %v1416 = vsel %vm814, %v1399, 0
        %v1419 = vsel %vm814, %v1401, 0
        %v1422 = vsel %vm814, %v1403, 0
        %v1425 = vsel %vm814, %v1405, 0
        %v1428 = vsel %vm814, %v1407, 0
        %v1431 = vsel %vm814, %v1409, 0
        %v1434 = vsel %vm814, %v1411, 0
        %1436 = vmatpush.bf16.xpose.msra.mxu0 0
        %1437 = vmatpush.bf16.xpose.msra.mxu0 0
        %1438 = vmatpush.bf16.xpose.msra.mxu0 0
        %1439 = vmatpush.bf16.xpose.msra.mxu0 0
        %1440 = vmatpush.bf16.xpose.msra.mxu0 %v1434
        %1441 = vmatpush.bf16.xpose.msra.mxu0 %v1431
        %1442 = vmatpush.bf16.xpose.msra.mxu0 %v1428
        %1443 = vmatpush.bf16.xpose.msra.mxu0 %v1425
        %1444 = vmatmul.bf16.gmra.mxu0 %v1413
        %v1445 = vpop.f32.mrf.mxu0
        %v1446 = vadd.f32 0.0, %v1445
        %v1447 = vpop.f32.mrf.mxu0
        %v1448 = vadd.f32 0.0, %v1447
        %1449 = vmatmul.bf16.gmra.mxu0 %v1416
        %v1450 = vpop.f32.mrf.mxu0
        %v1451 = vadd.f32 0.0, %v1450
        %v1452 = vpop.f32.mrf.mxu0
        %v1453 = vadd.f32 0.0, %v1452
        %1454 = vmatmul.bf16.gmra.mxu0 %v1419
        %v1455 = vpop.f32.mrf.mxu0
        %v1456 = vadd.f32 0.0, %v1455
        %v1457 = vpop.f32.mrf.mxu0
        %v1458 = vadd.f32 0.0, %v1457
        %1459 = vmatmul.bf16.gmra.mxu0 %v1422
        %v1460 = vpop.f32.mrf.mxu0
        %v1461 = vadd.f32 0.0, %v1460
        %v1462 = vpop.f32.mrf.mxu0
        %v1463 = vadd.f32 0.0, %v1462
        %1464 = vdwg.mxu0
        %1465 = vrot.lane.b32.xlu0 %v884, 96
        %v1466 = vpop.permute.xlu0 %1465
        %1467 = vrot.lane.b32.xlu0 %v885, 96
        %v1468 = vpop.permute.xlu0 %1467
        %1469 = vrot.lane.b32.xlu0 %v886, 96
        %v1470 = vpop.permute.xlu0 %1469
        %1471 = vrot.lane.b32.xlu0 %v887, 96
        %v1472 = vpop.permute.xlu0 %1471
        %1473 = vrot.lane.b32.xlu0 %v904, 96
        %v1474 = vpop.permute.xlu0 %1473
        %1475 = vrot.lane.b32.xlu0 %v905, 96
        %v1476 = vpop.permute.xlu0 %1475
        %1477 = vrot.lane.b32.xlu0 %v906, 96
        %v1478 = vpop.permute.xlu0 %1477
        %1479 = vrot.lane.b32.xlu0 %v907, 96
        %v1480 = vpop.permute.xlu0 %1479
        %v1482 = vsel %vm814, %v1466, 0
        %v1485 = vsel %vm814, %v1468, 0
        %v1488 = vsel %vm814, %v1470, 0
        %v1491 = vsel %vm814, %v1472, 0
        %v1494 = vsel %vm814, %v1474, 0
        %v1497 = vsel %vm814, %v1476, 0
        %v1500 = vsel %vm814, %v1478, 0
        %v1503 = vsel %vm814, %v1480, 0
        %1505 = vmatpush.bf16.xpose.msra.mxu0 0
        %1506 = vmatpush.bf16.xpose.msra.mxu0 0
        %1507 = vmatpush.bf16.xpose.msra.mxu0 0
        %1508 = vmatpush.bf16.xpose.msra.mxu0 0
        %1509 = vmatpush.bf16.xpose.msra.mxu0 %v1503
        %1510 = vmatpush.bf16.xpose.msra.mxu0 %v1500
        %1511 = vmatpush.bf16.xpose.msra.mxu0 %v1497
        %1512 = vmatpush.bf16.xpose.msra.mxu0 %v1494
        %1513 = vmatmul.bf16.gmra.mxu0 %v1482
        %v1514 = vpop.f32.mrf.mxu0
        %v1515 = vadd.f32 0.0, %v1514
        %v1516 = vpop.f32.mrf.mxu0
        %v1517 = vadd.f32 0.0, %v1516
        %1518 = vmatmul.bf16.gmra.mxu0 %v1485
        %v1519 = vpop.f32.mrf.mxu0
        %v1520 = vadd.f32 0.0, %v1519
        %v1521 = vpop.f32.mrf.mxu0
        %v1522 = vadd.f32 0.0, %v1521
        %1523 = vmatmul.bf16.gmra.mxu0 %v1488
        %v1524 = vpop.f32.mrf.mxu0
        %v1525 = vadd.f32 0.0, %v1524
        %v1526 = vpop.f32.mrf.mxu0
        %v1527 = vadd.f32 0.0, %v1526
        %1528 = vmatmul.bf16.gmra.mxu0 %v1491
        %v1529 = vpop.f32.mrf.mxu0
        %v1530 = vadd.f32 0.0, %v1529
        %v1531 = vpop.f32.mrf.mxu0
        %v1532 = vadd.f32 0.0, %v1531
        %1533 = vdwg.mxu0
        %s1534 = scalar_lea.vmem %s7, 64
        %v1535 = vld [vmem:[%s1534] sm:$0xff]
        %v1536 = vld [vmem:[%s1534 + $0x8] sm:$0xff]
        %v1537 = vld [vmem:[%s1534 + $0x10] sm:$0xff]
        %v1538 = vld [vmem:[%s1534 + $0x18] sm:$0xff]
        %v1539 = vld [vmem:[%s1534 + $0x20] sm:$0xff]
        %v1540 = vld [vmem:[%s1534 + $0x28] sm:$0xff]
        %v1541 = vld [vmem:[%s1534 + $0x30] sm:$0xff]
        %v1542 = vld [vmem:[%s1534 + $0x38] sm:$0xff]
        %v1543 = vadd.f32 %v1535, %v758
        %v1544 = vadd.f32 %v1536, %v759
        %v1545 = vadd.f32 %v1537, %v760
        %v1546 = vadd.f32 %v1538, %v761
        %v1547 = vadd.f32 %v1539, %v762
        %v1548 = vadd.f32 %v1540, %v763
        %v1549 = vadd.f32 %v1541, %v764
        %v1550 = vadd.f32 %v1542, %v765
        %v1551 = vadd.f32 %v1535, %v766
        %v1552 = vadd.f32 %v1536, %v767
        %v1553 = vadd.f32 %v1537, %v768
        %v1554 = vadd.f32 %v1538, %v769
        %v1555 = vadd.f32 %v1539, %v770
        %v1556 = vadd.f32 %v1540, %v771
        %v1557 = vadd.f32 %v1541, %v772
        %v1558 = vadd.f32 %v1542, %v773
        %v1559 = vadd.f32 %v1446, %v1543
        %v1560 = vadd.f32 %v1448, %v1544
        %v1561 = vadd.f32 %v1451, %v1545
        %v1562 = vadd.f32 %v1453, %v1546
        %v1563 = vadd.f32 %v1456, %v1547
        %v1564 = vadd.f32 %v1458, %v1548
        %v1565 = vadd.f32 %v1461, %v1549
        %v1566 = vadd.f32 %v1463, %v1550
        %v1567 = vadd.f32 %v1515, %v1551
        %v1568 = vadd.f32 %v1517, %v1552
        %v1569 = vadd.f32 %v1520, %v1553
        %v1570 = vadd.f32 %v1522, %v1554
        %v1571 = vadd.f32 %v1525, %v1555
        %v1572 = vadd.f32 %v1527, %v1556
        %v1573 = vadd.f32 %v1530, %v1557
        %v1574 = vadd.f32 %v1532, %v1558
        %v1575 = vsel %vm466, %v1559, -inf
        %1576 = vmax.xlane.f32.xlu0 %v1575
        %v1577 = vpop.xlane.xlu0 %1576
        %v1578 = vsel %vm466, %v1560, -inf
        %1579 = vmax.xlane.f32.xlu0 %v1578
        %v1580 = vpop.xlane.xlu0 %1579
        %v1581 = vsel %vm466, %v1561, -inf
        %1582 = vmax.xlane.f32.xlu0 %v1581
        %v1583 = vpop.xlane.xlu0 %1582
        %v1584 = vsel %vm466, %v1562, -inf
        %1585 = vmax.xlane.f32.xlu0 %v1584
        %v1586 = vpop.xlane.xlu0 %1585
        %v1587 = vsel %vm466, %v1563, -inf
        %1588 = vmax.xlane.f32.xlu0 %v1587
        %v1589 = vpop.xlane.xlu0 %1588
        %v1590 = vsel %vm466, %v1564, -inf
        %1591 = vmax.xlane.f32.xlu0 %v1590
        %v1592 = vpop.xlane.xlu0 %1591
        %v1593 = vsel %vm466, %v1565, -inf
        %1594 = vmax.xlane.f32.xlu0 %v1593
        %v1595 = vpop.xlane.xlu0 %1594
        %v1596 = vsel %vm466, %v1566, -inf
        %1597 = vmax.xlane.f32.xlu0 %v1596
        %v1598 = vpop.xlane.xlu0 %1597
        %v1599 = vsel %vm466, %v1567, -inf
        %1600 = vmax.xlane.f32.xlu0 %v1599
        %v1601 = vpop.xlane.xlu0 %1600
        %v1602 = vsel %vm466, %v1568, -inf
        %1603 = vmax.xlane.f32.xlu0 %v1602
        %v1604 = vpop.xlane.xlu0 %1603
        %v1605 = vsel %vm466, %v1569, -inf
        %1606 = vmax.xlane.f32.xlu0 %v1605
        %v1607 = vpop.xlane.xlu0 %1606
        %v1608 = vsel %vm466, %v1570, -inf
        %1609 = vmax.xlane.f32.xlu0 %v1608
        %v1610 = vpop.xlane.xlu0 %1609
        %v1611 = vsel %vm466, %v1571, -inf
        %1612 = vmax.xlane.f32.xlu0 %v1611
        %v1613 = vpop.xlane.xlu0 %1612
        %v1614 = vsel %vm466, %v1572, -inf
        %1615 = vmax.xlane.f32.xlu0 %v1614
        %v1616 = vpop.xlane.xlu0 %1615
        %v1617 = vsel %vm466, %v1573, -inf
        %1618 = vmax.xlane.f32.xlu0 %v1617
        %v1619 = vpop.xlane.xlu0 %1618
        %v1620 = vsel %vm466, %v1574, -inf
        %1621 = vmax.xlane.f32.xlu0 %v1620
        %v1622 = vpop.xlane.xlu0 %1621
        %v1623 = vsub.f32 %v1559, %v1577
        %v1624 = vsub.f32 %v1560, %v1580
        %v1625 = vsub.f32 %v1561, %v1583
        %v1626 = vsub.f32 %v1562, %v1586
        %v1627 = vsub.f32 %v1563, %v1589
        %v1628 = vsub.f32 %v1564, %v1592
        %v1629 = vsub.f32 %v1565, %v1595
        %v1630 = vsub.f32 %v1566, %v1598
        %v1631 = vsub.f32 %v1567, %v1601
        %v1632 = vsub.f32 %v1568, %v1604
        %v1633 = vsub.f32 %v1569, %v1607
        %v1634 = vsub.f32 %v1570, %v1610
        %v1635 = vsub.f32 %v1571, %v1613
        %v1636 = vsub.f32 %v1572, %v1616
        %v1637 = vsub.f32 %v1573, %v1619
        %v1638 = vsub.f32 %v1574, %v1622
        %v1639 = vmul.f32 %v1623, 1.442695
        %v1640 = vpow.pop %v1639
        %v1641 = vmul.f32 %v1624, 1.442695
        %v1642 = vpow.pop %v1641
        %v1643 = vmul.f32 %v1625, 1.442695
        %v1644 = vpow.pop %v1643
        %v1645 = vmul.f32 %v1626, 1.442695
        %v1646 = vpow.pop %v1645
        %v1647 = vmul.f32 %v1627, 1.442695
        %v1648 = vpow.pop %v1647
        %v1649 = vmul.f32 %v1628, 1.442695
        %v1650 = vpow.pop %v1649
        %v1651 = vmul.f32 %v1629, 1.442695
        %v1652 = vpow.pop %v1651
        %v1653 = vmul.f32 %v1630, 1.442695
        %v1654 = vpow.pop %v1653
        %v1655 = vmul.f32 %v1631, 1.442695
        %v1656 = vpow.pop %v1655
        %v1657 = vmul.f32 %v1632, 1.442695
        %v1658 = vpow.pop %v1657
        %v1659 = vmul.f32 %v1633, 1.442695
        %v1660 = vpow.pop %v1659
        %v1661 = vmul.f32 %v1634, 1.442695
        %v1662 = vpow.pop %v1661
        %v1663 = vmul.f32 %v1635, 1.442695
        %v1664 = vpow.pop %v1663
        %v1665 = vmul.f32 %v1636, 1.442695
        %v1666 = vpow.pop %v1665
        %v1667 = vmul.f32 %v1637, 1.442695
        %v1668 = vpow.pop %v1667
        %v1669 = vmul.f32 %v1638, 1.442695
        %v1670 = vpow.pop %v1669
        %v1671 = vsel %vm466, %v1640, 0.0
        %1672 = vadd.xlane.f32.xlu0 %v1671
        %v1673 = vpop.xlane.xlu0 %1672
        %v1674 = vsel %vm466, %v1642, 0.0
        %1675 = vadd.xlane.f32.xlu0 %v1674
        %v1676 = vpop.xlane.xlu0 %1675
        %v1677 = vsel %vm466, %v1644, 0.0
        %1678 = vadd.xlane.f32.xlu0 %v1677
        %v1679 = vpop.xlane.xlu0 %1678
        %v1680 = vsel %vm466, %v1646, 0.0
        %1681 = vadd.xlane.f32.xlu0 %v1680
        %v1682 = vpop.xlane.xlu0 %1681
        %v1683 = vsel %vm466, %v1648, 0.0
        %1684 = vadd.xlane.f32.xlu0 %v1683
        %v1685 = vpop.xlane.xlu0 %1684
        %v1686 = vsel %vm466, %v1650, 0.0
        %1687 = vadd.xlane.f32.xlu0 %v1686
        %v1688 = vpop.xlane.xlu0 %1687
        %v1689 = vsel %vm466, %v1652, 0.0
        %1690 = vadd.xlane.f32.xlu0 %v1689
        %v1691 = vpop.xlane.xlu0 %1690
        %v1692 = vsel %vm466, %v1654, 0.0
        %1693 = vadd.xlane.f32.xlu0 %v1692
        %v1694 = vpop.xlane.xlu0 %1693
        %v1695 = vsel %vm466, %v1656, 0.0
        %1696 = vadd.xlane.f32.xlu0 %v1695
        %v1697 = vpop.xlane.xlu0 %1696
        %v1698 = vsel %vm466, %v1658, 0.0
        %1699 = vadd.xlane.f32.xlu0 %v1698
        %v1700 = vpop.xlane.xlu0 %1699
        %v1701 = vsel %vm466, %v1660, 0.0
        %1702 = vadd.xlane.f32.xlu0 %v1701
        %v1703 = vpop.xlane.xlu0 %1702
        %v1704 = vsel %vm466, %v1662, 0.0
        %1705 = vadd.xlane.f32.xlu0 %v1704
        %v1706 = vpop.xlane.xlu0 %1705
        %v1707 = vsel %vm466, %v1664, 0.0
        %1708 = vadd.xlane.f32.xlu0 %v1707
        %v1709 = vpop.xlane.xlu0 %1708
        %v1710 = vsel %vm466, %v1666, 0.0
        %1711 = vadd.xlane.f32.xlu0 %v1710
        %v1712 = vpop.xlane.xlu0 %1711
        %v1713 = vsel %vm466, %v1668, 0.0
        %1714 = vadd.xlane.f32.xlu0 %v1713
        %v1715 = vpop.xlane.xlu0 %1714
        %v1716 = vsel %vm466, %v1670, 0.0
        %1717 = vadd.xlane.f32.xlu0 %v1716
        %v1718 = vpop.xlane.xlu0 %1717
        %v1719 = vrcp.pop %v1673
        %v1720 = vrcp.pop %v1676
        %v1721 = vrcp.pop %v1679
        %v1722 = vrcp.pop %v1682
        %v1723 = vrcp.pop %v1685
        %v1724 = vrcp.pop %v1688
        %v1725 = vrcp.pop %v1691
        %v1726 = vrcp.pop %v1694
        %v1727 = vrcp.pop %v1697
        %v1728 = vrcp.pop %v1700
        %v1729 = vrcp.pop %v1703
        %v1730 = vrcp.pop %v1706
        %v1731 = vrcp.pop %v1709
        %v1732 = vrcp.pop %v1712
        %v1733 = vrcp.pop %v1715
        %v1734 = vrcp.pop %v1718
        %v1735 = vmul.f32 %v1640, %v1719
        %v1736 = vmul.f32 %v1642, %v1720
        %v1737 = vmul.f32 %v1644, %v1721
        %v1738 = vmul.f32 %v1646, %v1722
        %v1739 = vmul.f32 %v1648, %v1723
        %v1740 = vmul.f32 %v1650, %v1724
        %v1741 = vmul.f32 %v1652, %v1725
        %v1742 = vmul.f32 %v1654, %v1726
        %v1743 = vmul.f32 %v1656, %v1727
        %v1744 = vmul.f32 %v1658, %v1728
        %v1745 = vmul.f32 %v1660, %v1729
        %v1746 = vmul.f32 %v1662, %v1730
        %v1747 = vmul.f32 %v1664, %v1731
        %v1748 = vmul.f32 %v1666, %v1732
        %v1749 = vmul.f32 %v1668, %v1733
        %v1750 = vmul.f32 %v1670, %v1734
        %v1751 = vpack.c.bf16 %v1735, %v1735
        %v1752 = vpack.c.bf16 %v1736, %v1736
        %v1753 = vpack.c.bf16 %v1737, %v1737
        %v1754 = vpack.c.bf16 %v1738, %v1738
        %v1755 = vpack.c.bf16 %v1739, %v1739
        %v1756 = vpack.c.bf16 %v1740, %v1740
        %v1757 = vpack.c.bf16 %v1741, %v1741
        %v1758 = vpack.c.bf16 %v1742, %v1742
        %v1759 = vpack.c.bf16 %v1743, %v1743
        %v1760 = vpack.c.bf16 %v1744, %v1744
        %v1761 = vpack.c.bf16 %v1745, %v1745
        %v1762 = vpack.c.bf16 %v1746, %v1746
        %v1763 = vpack.c.bf16 %v1747, %v1747
        %v1764 = vpack.c.bf16 %v1748, %v1748
        %v1765 = vpack.c.bf16 %v1749, %v1749
        %v1766 = vpack.c.bf16 %v1750, %v1750
        %v1775 = vunpack.c.l.b16 %v1751
        %v1776 = vunpack.c.l.b16 %v1752
        %v1777 = vunpack.c.l.b16 %v1753
        %v1778 = vunpack.c.l.b16 %v1754
        %v1779 = vunpack.c.l.b16 %v1755
        %v1780 = vunpack.c.l.b16 %v1756
        %v1781 = vunpack.c.l.b16 %v1757
        %v1782 = vunpack.c.l.b16 %v1758
        %v1783 = vpack.c.b16 %v1776, %v1775
        %v1784 = vpack.c.b16 %v1778, %v1777
        %v1785 = vpack.c.b16 %v1780, %v1779
        %v1786 = vpack.c.b16 %v1782, %v1781
        %1787 = vrot.lane.b32.xlu0 %v1229, 96
        %v1788 = vpop.permute.xlu0 %1787
        %1789 = vrot.lane.b32.xlu0 %v1230, 96
        %v1790 = vpop.permute.xlu0 %1789
        %1791 = vrot.lane.b32.xlu0 %v1231, 96
        %v1792 = vpop.permute.xlu0 %1791
        %1793 = vrot.lane.b32.xlu0 %v1232, 96
        %v1794 = vpop.permute.xlu0 %1793
        %v1800 = vsel %vm466, %v1783, 0
        %v1803 = vsel %vm466, %v1784, 0
        %v1806 = vsel %vm466, %v1785, 0
        %v1809 = vsel %vm466, %v1786, 0
        %1811 = vmatpush.bf16.msra.mxu0 0
        %1812 = vmatpush.bf16.msra.mxu0 0
        %1813 = vmatpush.bf16.msra.mxu0 0
        %1814 = vmatpush.bf16.msra.mxu0 0
        %1815 = vmatpush.bf16.msra.mxu0 %v1794
        %1816 = vmatpush.bf16.msra.mxu0 %v1792
        %1817 = vmatpush.bf16.msra.mxu0 %v1790
        %1818 = vmatpush.bf16.msra.mxu0 %v1788
        %1819 = vmatmul.bf16.gmra.mxu0 %v1800
        %v1820 = vpop.f32.mrf.mxu0
        %v1821 = vadd.f32 0.0, %v1820
        %v1822 = vpop.f32.mrf.mxu0
        %v1823 = vadd.f32 0.0, %v1822
        %1824 = vmatmul.bf16.gmra.mxu0 %v1803
        %v1825 = vpop.f32.mrf.mxu0
        %v1826 = vadd.f32 0.0, %v1825
        %v1827 = vpop.f32.mrf.mxu0
        %v1828 = vadd.f32 0.0, %v1827
        %1829 = vmatmul.bf16.gmra.mxu0 %v1806
        %v1830 = vpop.f32.mrf.mxu0
        %v1831 = vadd.f32 0.0, %v1830
        %v1832 = vpop.f32.mrf.mxu0
        %v1833 = vadd.f32 0.0, %v1832
        %1834 = vmatmul.bf16.gmra.mxu0 %v1809
        %v1835 = vpop.f32.mrf.mxu0
        %v1836 = vadd.f32 0.0, %v1835
        %v1837 = vpop.f32.mrf.mxu0
        %v1838 = vadd.f32 0.0, %v1837
        %1839 = vdwg.mxu0
        %v1848 = vunpack.c.l.b16 %v1759
        %v1849 = vunpack.c.l.b16 %v1760
        %v1850 = vunpack.c.l.b16 %v1761
        %v1851 = vunpack.c.l.b16 %v1762
        %v1852 = vunpack.c.l.b16 %v1763
        %v1853 = vunpack.c.l.b16 %v1764
        %v1854 = vunpack.c.l.b16 %v1765
        %v1855 = vunpack.c.l.b16 %v1766
        %v1856 = vpack.c.b16 %v1849, %v1848
        %v1857 = vpack.c.b16 %v1851, %v1850
        %v1858 = vpack.c.b16 %v1853, %v1852
        %v1859 = vpack.c.b16 %v1855, %v1854
        %1860 = vrot.lane.b32.xlu0 %v1314, 96
        %v1861 = vpop.permute.xlu0 %1860
        %1862 = vrot.lane.b32.xlu0 %v1315, 96
        %v1863 = vpop.permute.xlu0 %1862
        %1864 = vrot.lane.b32.xlu0 %v1316, 96
        %v1865 = vpop.permute.xlu0 %1864
        %1866 = vrot.lane.b32.xlu0 %v1317, 96
        %v1867 = vpop.permute.xlu0 %1866
        %v1873 = vsel %vm466, %v1856, 0
        %v1876 = vsel %vm466, %v1857, 0
        %v1879 = vsel %vm466, %v1858, 0
        %v1882 = vsel %vm466, %v1859, 0
        %1884 = vmatpush.bf16.msra.mxu0 0
        %1885 = vmatpush.bf16.msra.mxu0 0
        %1886 = vmatpush.bf16.msra.mxu0 0
        %1887 = vmatpush.bf16.msra.mxu0 0
        %1888 = vmatpush.bf16.msra.mxu0 %v1867
        %1889 = vmatpush.bf16.msra.mxu0 %v1865
        %1890 = vmatpush.bf16.msra.mxu0 %v1863
        %1891 = vmatpush.bf16.msra.mxu0 %v1861
        %1892 = vmatmul.bf16.gmra.mxu0 %v1873
        %v1893 = vpop.f32.mrf.mxu0
        %v1894 = vadd.f32 0.0, %v1893
        %v1895 = vpop.f32.mrf.mxu0
        %v1896 = vadd.f32 0.0, %v1895
        %1897 = vmatmul.bf16.gmra.mxu0 %v1876
        %v1898 = vpop.f32.mrf.mxu0
        %v1899 = vadd.f32 0.0, %v1898
        %v1900 = vpop.f32.mrf.mxu0
        %v1901 = vadd.f32 0.0, %v1900
        %1902 = vmatmul.bf16.gmra.mxu0 %v1879
        %v1903 = vpop.f32.mrf.mxu0
        %v1904 = vadd.f32 0.0, %v1903
        %v1905 = vpop.f32.mrf.mxu0
        %v1906 = vadd.f32 0.0, %v1905
        %1907 = vmatmul.bf16.gmra.mxu0 %v1882
        %v1908 = vpop.f32.mrf.mxu0
        %v1909 = vadd.f32 0.0, %v1908
        %v1910 = vpop.f32.mrf.mxu0
        %v1911 = vadd.f32 0.0, %v1910
        %1912 = vdwg.mxu0
        %v1913 = vpack.c.bf16 %v1821, %v1821
        %v1914 = vpack.c.bf16 %v1823, %v1823
        %v1915 = vpack.c.bf16 %v1826, %v1826
        %v1916 = vpack.c.bf16 %v1828, %v1828
        %v1917 = vpack.c.bf16 %v1831, %v1831
        %v1918 = vpack.c.bf16 %v1833, %v1833
        %v1919 = vpack.c.bf16 %v1836, %v1836
        %v1920 = vpack.c.bf16 %v1838, %v1838
        %v1921 = vpack.c.bf16 %v1894, %v1894
        %v1922 = vpack.c.bf16 %v1896, %v1896
        %v1923 = vpack.c.bf16 %v1899, %v1899
        %v1924 = vpack.c.bf16 %v1901, %v1901
        %v1925 = vpack.c.bf16 %v1904, %v1904
        %v1926 = vpack.c.bf16 %v1906, %v1906
        %v1927 = vpack.c.bf16 %v1909, %v1909
        %v1928 = vpack.c.bf16 %v1911, %v1911
        %1945 = vrot.lane.b32.xlu0 %v1913, 32
        %v1946 = vpop.permute.xlu0 %1945
        %1947 = vrot.lane.b32.xlu0 %v1914, 32
        %v1948 = vpop.permute.xlu0 %1947
        %1949 = vrot.lane.b32.xlu0 %v1915, 32
        %v1950 = vpop.permute.xlu0 %1949
        %1951 = vrot.lane.b32.xlu0 %v1916, 32
        %v1952 = vpop.permute.xlu0 %1951
        %1953 = vrot.lane.b32.xlu0 %v1917, 32
        %v1954 = vpop.permute.xlu0 %1953
        %1955 = vrot.lane.b32.xlu0 %v1918, 32
        %v1956 = vpop.permute.xlu0 %1955
        %1957 = vrot.lane.b32.xlu0 %v1919, 32
        %v1958 = vpop.permute.xlu0 %1957
        %1959 = vrot.lane.b32.xlu0 %v1920, 32
        %v1960 = vpop.permute.xlu0 %1959
        %1961 = vrot.lane.b32.xlu0 %v1921, 32
        %v1962 = vpop.permute.xlu0 %1961
        %1963 = vrot.lane.b32.xlu0 %v1922, 32
        %v1964 = vpop.permute.xlu0 %1963
        %1965 = vrot.lane.b32.xlu0 %v1923, 32
        %v1966 = vpop.permute.xlu0 %1965
        %1967 = vrot.lane.b32.xlu0 %v1924, 32
        %v1968 = vpop.permute.xlu0 %1967
        %1969 = vrot.lane.b32.xlu0 %v1925, 32
        %v1970 = vpop.permute.xlu0 %1969
        %1971 = vrot.lane.b32.xlu0 %v1926, 32
        %v1972 = vpop.permute.xlu0 %1971
        %1973 = vrot.lane.b32.xlu0 %v1927, 32
        %v1974 = vpop.permute.xlu0 %1973
        %1975 = vrot.lane.b32.xlu0 %v1928, 32
        %v1976 = vpop.permute.xlu0 %1975
        %vm1993 = vcmask 519424
        %1994 = vst.msk [vmem:[#allocation2] sm:$0xf] %vm1993, %v1946
        %1995 = vst.msk [vmem:[#allocation2 + $0x4] sm:$0xf] %vm1993, %v1948
        %1996 = vst.msk [vmem:[#allocation2 + $0x8] sm:$0xf] %vm1993, %v1950
        %1997 = vst.msk [vmem:[#allocation2 + $0xc] sm:$0xf] %vm1993, %v1952
        %1998 = vst.msk [vmem:[#allocation2 + $0x10] sm:$0xf] %vm1993, %v1954
        %1999 = vst.msk [vmem:[#allocation2 + $0x14] sm:$0xf] %vm1993, %v1956
        %2000 = vst.msk [vmem:[#allocation2 + $0x18] sm:$0xf] %vm1993, %v1958
        %2001 = vst.msk [vmem:[#allocation2 + $0x1c] sm:$0xf] %vm1993, %v1960
        %2002 = vst.msk [vmem:[#allocation2 + $0x20] sm:$0xf] %vm1993, %v1962
        %2003 = vst.msk [vmem:[#allocation2 + $0x24] sm:$0xf] %vm1993, %v1964
        %2004 = vst.msk [vmem:[#allocation2 + $0x28] sm:$0xf] %vm1993, %v1966
        %2005 = vst.msk [vmem:[#allocation2 + $0x2c] sm:$0xf] %vm1993, %v1968
        %2006 = vst.msk [vmem:[#allocation2 + $0x30] sm:$0xf] %vm1993, %v1970
        %2007 = vst.msk [vmem:[#allocation2 + $0x34] sm:$0xf] %vm1993, %v1972
        %2008 = vst.msk [vmem:[#allocation2 + $0x38] sm:$0xf] %vm1993, %v1974
        %2009 = vst.msk [vmem:[#allocation2 + $0x3c] sm:$0xf] %vm1993, %v1976
        %v2010 = vld [vmem:[#allocation2] sm:$0xf]
        %v2011 = vld [vmem:[#allocation2 + $0x4] sm:$0xf]
        %v2012 = vld [vmem:[#allocation2 + $0x8] sm:$0xf]
        %v2013 = vld [vmem:[#allocation2 + $0xc] sm:$0xf]
        %v2014 = vld [vmem:[#allocation2 + $0x10] sm:$0xf]
        %v2015 = vld [vmem:[#allocation2 + $0x14] sm:$0xf]
        %v2016 = vld [vmem:[#allocation2 + $0x18] sm:$0xf]
        %v2017 = vld [vmem:[#allocation2 + $0x1c] sm:$0xf]
        %v2018 = vld [vmem:[#allocation2 + $0x20] sm:$0xf]
        %v2019 = vld [vmem:[#allocation2 + $0x24] sm:$0xf]
        %v2020 = vld [vmem:[#allocation2 + $0x28] sm:$0xf]
        %v2021 = vld [vmem:[#allocation2 + $0x2c] sm:$0xf]
        %v2022 = vld [vmem:[#allocation2 + $0x30] sm:$0xf]
        %v2023 = vld [vmem:[#allocation2 + $0x34] sm:$0xf]
        %v2024 = vld [vmem:[#allocation2 + $0x38] sm:$0xf]
        %v2025 = vld [vmem:[#allocation2 + $0x3c] sm:$0xf]
        %v2026 = vld [vmem:[%s9] sm:$0xf]
        %v2027 = vld [vmem:[%s9 + $0x4] sm:$0xf]
        %v2028 = vld [vmem:[%s9 + $0x8] sm:$0xf]
        %v2029 = vld [vmem:[%s9 + $0xc] sm:$0xf]
        %v2030 = vld [vmem:[%s9 + $0x10] sm:$0xf]
        %v2031 = vld [vmem:[%s9 + $0x14] sm:$0xf]
        %v2032 = vld [vmem:[%s9 + $0x18] sm:$0xf]
        %v2033 = vld [vmem:[%s9 + $0x1c] sm:$0xf]
        %v2034 = vld [vmem:[%s10] sm:$0x1]
        %v2036 = vperm.slane %v2034, 0
        %v2054 = vunpack.c.l.b16 %v2010
        %v2055 = vunpack.c.l.b16 %v2011
        %v2056 = vunpack.c.l.b16 %v2012
        %v2057 = vunpack.c.l.b16 %v2013
        %v2058 = vunpack.c.l.b16 %v2014
        %v2059 = vunpack.c.l.b16 %v2015
        %v2060 = vunpack.c.l.b16 %v2016
        %v2061 = vunpack.c.l.b16 %v2017
        %v2062 = vunpack.c.l.b16 %v2018
        %v2063 = vunpack.c.l.b16 %v2019
        %v2064 = vunpack.c.l.b16 %v2020
        %v2065 = vunpack.c.l.b16 %v2021
        %v2066 = vunpack.c.l.b16 %v2022
        %v2067 = vunpack.c.l.b16 %v2023
        %v2068 = vunpack.c.l.b16 %v2024
        %v2069 = vunpack.c.l.b16 %v2025
        %v2070 = vpack.c.b16 %v2055, %v2054
        %v2071 = vpack.c.b16 %v2057, %v2056
        %v2072 = vpack.c.b16 %v2059, %v2058
        %v2073 = vpack.c.b16 %v2061, %v2060
        %v2074 = vpack.c.b16 %v2063, %v2062
        %v2075 = vpack.c.b16 %v2065, %v2064
        %v2076 = vpack.c.b16 %v2067, %v2066
        %v2077 = vpack.c.b16 %v2069, %v2068
        %v2086 = vunpack.c.l.b16 %v2026
        %v2087 = vunpack.c.l.b16 %v2027
        %v2088 = vunpack.c.l.b16 %v2028
        %v2089 = vunpack.c.l.b16 %v2029
        %v2090 = vunpack.c.l.b16 %v2030
        %v2091 = vunpack.c.l.b16 %v2031
        %v2092 = vunpack.c.l.b16 %v2032
        %v2093 = vunpack.c.l.b16 %v2033
        %v2094 = vpack.c.b16 %v2087, %v2086
        %v2095 = vpack.c.b16 %v2089, %v2088
        %v2096 = vpack.c.b16 %v2091, %v2090
        %v2097 = vpack.c.b16 %v2093, %v2092
        %v2103 = vsel %vm466, %v2070, 0
        %v2106 = vsel %vm466, %v2071, 0
        %v2109 = vsel %vm466, %v2072, 0
        %v2112 = vsel %vm466, %v2073, 0
        %v2115 = vsel %vm466, %v2074, 0
        %v2118 = vsel %vm466, %v2075, 0
        %v2121 = vsel %vm466, %v2076, 0
        %v2124 = vsel %vm466, %v2077, 0
        %2126 = vmatpush.bf16.msra.mxu0 0
        %2127 = vmatpush.bf16.msra.mxu0 0
        %2128 = vmatpush.bf16.msra.mxu0 0
        %2129 = vmatpush.bf16.msra.mxu0 0
        %2130 = vmatpush.bf16.msra.mxu0 %v2097
        %2131 = vmatpush.bf16.msra.mxu0 %v2096
        %2132 = vmatpush.bf16.msra.mxu0 %v2095
        %2133 = vmatpush.bf16.msra.mxu0 %v2094
        %2134 = vmatmul.bf16.gmra.mxu0 %v2103
        %v2135 = vpop.f32.mrf.mxu0
        %v2136 = vadd.f32 %v2036, %v2135
        %v2137 = vpop.f32.mrf.mxu0
        %v2138 = vadd.f32 %v2036, %v2137
        %2139 = vmatmul.bf16.gmra.mxu0 %v2106
        %v2140 = vpop.f32.mrf.mxu0
        %v2141 = vadd.f32 %v2036, %v2140
        %v2142 = vpop.f32.mrf.mxu0
        %v2143 = vadd.f32 %v2036, %v2142
        %2144 = vmatmul.bf16.gmra.mxu0 %v2109
        %v2145 = vpop.f32.mrf.mxu0
        %v2146 = vadd.f32 %v2036, %v2145
        %v2147 = vpop.f32.mrf.mxu0
        %v2148 = vadd.f32 %v2036, %v2147
        %2149 = vmatmul.bf16.gmra.mxu0 %v2112
        %v2150 = vpop.f32.mrf.mxu0
        %v2151 = vadd.f32 %v2036, %v2150
        %v2152 = vpop.f32.mrf.mxu0
        %v2153 = vadd.f32 %v2036, %v2152
        %2154 = vmatmul.bf16.gmra.mxu0 %v2115
        %v2155 = vpop.f32.mrf.mxu0
        %v2156 = vadd.f32 %v2036, %v2155
        %v2157 = vpop.f32.mrf.mxu0
        %v2158 = vadd.f32 %v2036, %v2157
        %2159 = vmatmul.bf16.gmra.mxu0 %v2118
        %v2160 = vpop.f32.mrf.mxu0
        %v2161 = vadd.f32 %v2036, %v2160
        %v2162 = vpop.f32.mrf.mxu0
        %v2163 = vadd.f32 %v2036, %v2162
        %2164 = vmatmul.bf16.gmra.mxu0 %v2121
        %v2165 = vpop.f32.mrf.mxu0
        %v2166 = vadd.f32 %v2036, %v2165
        %v2167 = vpop.f32.mrf.mxu0
        %v2168 = vadd.f32 %v2036, %v2167
        %2169 = vmatmul.bf16.gmra.mxu0 %v2124
        %v2170 = vpop.f32.mrf.mxu0
        %v2171 = vadd.f32 %v2036, %v2170
        %v2172 = vpop.f32.mrf.mxu0
        %v2173 = vadd.f32 %v2036, %v2172
        %2174 = vdwg.mxu0
        %2175 = vst.msk [vmem:[%s403] sm:$0xff] %vm466, %v2136
        %2176 = vst.msk [vmem:[%s403 + $0x8] sm:$0xff] %vm466, %v2138
        %2177 = vst.msk [vmem:[%s403 + $0x10] sm:$0xff] %vm466, %v2141
        %2178 = vst.msk [vmem:[%s403 + $0x18] sm:$0xff] %vm466, %v2143
        %2179 = vst.msk [vmem:[%s403 + $0x20] sm:$0xff] %vm466, %v2146
        %2180 = vst.msk [vmem:[%s403 + $0x28] sm:$0xff] %vm466, %v2148
        %2181 = vst.msk [vmem:[%s403 + $0x30] sm:$0xff] %vm466, %v2151
        %2182 = vst.msk [vmem:[%s403 + $0x38] sm:$0xff] %vm466, %v2153
        %2183 = vst.msk [vmem:[%s403 + $0x40] sm:$0xff] %vm466, %v2156
        %2184 = vst.msk [vmem:[%s403 + $0x48] sm:$0xff] %vm466, %v2158
        %2185 = vst.msk [vmem:[%s403 + $0x50] sm:$0xff] %vm466, %v2161
        %2186 = vst.msk [vmem:[%s403 + $0x58] sm:$0xff] %vm466, %v2163
        %2187 = vst.msk [vmem:[%s403 + $0x60] sm:$0xff] %vm466, %v2166
        %2188 = vst.msk [vmem:[%s403 + $0x68] sm:$0xff] %vm466, %v2168
        %2189 = vst.msk [vmem:[%s403 + $0x70] sm:$0xff] %vm466, %v2171
        %2190 = vst.msk [vmem:[%s403 + $0x78] sm:$0xff] %vm466, %v2173
        %s2191 = smul.u32 16, %s23
        %p2192 = scmp.lt.s32.totalorder %s2191, 31
        %s2193 = scalar_select %p2192, %s2191, 31
        %s2194 = smul.addr %s2193, 8
        %s2195 = scalar_lea.vmem %s11, %s2194
        // Predicated region
        $region69: #{tpu_custom_call.1} parent=63 // pred_check
          %p2196 = pneg %p277
        $region70: #{tpu_custom_call.1} parent=63 // pred_check_branch
          %2198 = sbr.rel (%p2196) target = $region72
        $region71: #{tpu_custom_call.1} parent=63 // pred_region
          %s2199 = smul.u32 16, %s23
        $region72: #{tpu_custom_call.1} parent=63 // pred_fallthru
          _
      $region64: #{tpu_custom_call.1} parent=5 // pred_fallthru
        _
      %p2200 = scmp.le.s32.totalorder 2, %s18
      // Predicated region
      $region73: #{tpu_custom_call.1} parent=5 // pred_check
        %p2201 = pneg %p2200
      $region74: #{tpu_custom_call.1} parent=5 // pred_check_branch
        %2203 = sbr.rel (%p2201) target = $region76
      $region75: #{tpu_custom_call.1} parent=5 // pred_region
        %s2204 = ssub.s32 %s18, 2
        // Predicated region
        $region77: #{tpu_custom_call.1} parent=75 // pred_check
          %p2205 = pneg %p283
        $region78: #{tpu_custom_call.1} parent=75 // pred_check_branch
          %2207 = sbr.rel (%p2205) target = $region80
        $region79: #{tpu_custom_call.1} parent=75 // pred_region
          %s2208 = smul.u32 16, %s24
          %p2209 = scmp.lt.s32.totalorder %s2208, 31
          %s2210 = scalar_select %p2209, %s2208, 31
          %s2211 = smul.addr %s2210, 8
          %s2212 = scalar_lea.vmem %s11, %s2211
        $region80: #{tpu_custom_call.1} parent=75 // pred_fallthru
          _
      $region76: #{tpu_custom_call.1} parent=5 // pred_fallthru
        _
    $region6: #{tpu_custom_call.1} parent=1 // loop_footer
      %s22 = sadd.s32 1, %s18
    $region7: #{tpu_custom_call.1} parent=1 // loop_footer_branch
      %17 = sbr.rel target = $region3
    $region8: #{tpu_custom_call.1} parent=1 // loop_exit
      _
    %2213 = vsyncpa [#allocation4], 1
    %s2214 = scalar_lea.sflag [#allocation4], 1
    %2215 = vsyncpa %s2214, 1

// kernel: tpu_custom_call.1
$region0: #{tpu_custom_call.1}
  #allocation0 [shape = 'u32[]', space=smem, size = 0x4, offset = 0x4, fixed_abs, tag = 'smem constant byte address 0x4 - core index']
  #allocation1 [shape = 'u32[72,128]{1,0:T(1,128)}', space=vmem, size = 0x9000, scoped, tag = 'internal scratch']
  #allocation2 [shape = 'bf16[128,64]{1,0:T(8,128)(2,1)}', space=vmem, size = 0x8000, scoped, tag = 'scratch operand']
  %s0 = inlined_call_operand.vmem [shape: f32[256,64], index: 0, kind: input, shape index: {}]
  %s1 = inlined_call_operand.vmem [shape: bf16[64,64], index: 1, kind: input, shape index: {}]
  %s2 = inlined_call_operand.vmem [shape: bf16[64,64], index: 2, kind: input, shape index: {}]
  %s3 = inlined_call_operand.vmem [shape: bf16[64,64], index: 3, kind: input, shape index: {}]
  %s4 = inlined_call_operand.hbm [shape: f32[1,64], index: 4, kind: input, shape index: {}]
  %s5 = inlined_call_operand.vmem [shape: f32[1,64], index: 5, kind: input, shape index: {}]
  %s6 = inlined_call_operand.vmem [shape: f32[1,64], index: 6, kind: input, shape index: {}]
  %s7 = inlined_call_operand.vmem [shape: f32[2,64,64], index: 7, kind: input, shape index: {}]
  %s8 = inlined_call_operand.vmem [shape: f32[2,64,64], index: 8, kind: input, shape index: {}]
  %s9 = inlined_call_operand.vmem [shape: bf16[64,64], index: 9, kind: input, shape index: {}]
  %s10 = inlined_call_operand.vmem [shape: f32[1,64], index: 10, kind: input, shape index: {}]
  %s11 = inlined_call_operand.vmem [shape: f32[256,64], index: 11, kind: output, shape index: {}]
  %s12 = sld [smem:[#allocation0]]
  $region81: #{tpu_custom_call.1} parent=0
    _
  %s14 = ssub.s32 1, %s12
  %s15 = scalar_select 0, %s14, %s12
  $region1: #{tpu_custom_call.1} parent=0
    #allocation3 [shape = 'u8[512]{0}', space=vmem, size = 0x400, scoped, tag = 'input window, operand 4, single buffered']
    #allocation4 [shape = 's32[2]{0}', space=sflag, size = 0x8, scoped, tag = 'scoped memory for tpu_custom_call.1']
    %16 = vsyncpa [#allocation4], 0
    loop: start=0, step=1, limit=4
    $region2: #{tpu_custom_call.1} parent=1 // loop_pre_header
      _
    $region3: #{tpu_custom_call.1} parent=1 // loop_header
      %s18 = sphi 0, %s22
      %p19 = scmp.ge.s32.totalorder %s18, 4
      %s28 = sphi 0, %s30
      %s31 = sphi 0, %s28
      %s32 = sphi 0, %s31
      %s48 = sphi 0, %s32
      %s52 = sphi 0, %s52
      %s54 = sphi 0, %s52
      %s55 = sphi 0, %s54
      %s69 = sphi 0, %s55
      %s73 = sphi 0, %s73
      %s75 = sphi 0, %s73
      %s76 = sphi 0, %s75
      %s90 = sphi 0, %s76
      %s94 = sphi 0, %s94
      %s96 = sphi 0, %s94
      %s97 = sphi 0, %s96
      %s111 = sphi 0, %s97
      %s115 = sphi 0, %s115
      %s117 = sphi 0, %s115
      %s118 = sphi 0, %s117
      %s132 = sphi 0, %s118
      %s136 = sphi 0, %s136
      %s138 = sphi 0, %s136
      %s139 = sphi 0, %s138
      %s153 = sphi 0, %s139
      %s157 = sphi 0, %s157
      %s159 = sphi 0, %s157
      %s160 = sphi 0, %s159
      %s174 = sphi 0, %s160
      %s178 = sphi 0, %s178
      %s180 = sphi 0, %s178
      %s181 = sphi 0, %s180
      %s195 = sphi 0, %s181
      %s199 = sphi 0, %s199
      %s201 = sphi 0, %s199
      %s202 = sphi 0, %s201
      %s216 = sphi 0, %s202
      %s220 = sphi 0, %s220
      %s222 = sphi 0, %s220
      %s223 = sphi 0, %s222
      %s237 = sphi 0, %s223
      %s241 = sphi 0, %s241
      %s243 = sphi 0, %s241
      %s244 = sphi 0, %s243
      %s258 = sphi 0, %s244
      %s264 = sphi 0, %s266
      %s267 = sphi 0, %s264
      %s268 = sphi 0, %s267
      %s284 = sphi 0, %s268
    $region4: #{tpu_custom_call.1} parent=1 // loop_header_branch
      %21 = sbr.rel (%p19) target = $region8
    $region5: #{tpu_custom_call.1} parent=1 // loop_body
      %s23 = ssub.s32 %s18, 1
      %s24 = ssub.s32 %s18, 2
      %s25 = sadd.s32 %s18, 1
      %s26 = ssub.s32 %s18, %s25
      %p27 = scmp.eq.s32.totalorder %s26, 0
      %s29 = sadd.s32 %s28, 1
      %s30 = scalar_select %p27, %s28, %s29
      %p33 = pneg %p27
      %p34 = scmp.eq.s32.totalorder %s18, 1
      %p35 = por %p33, %p34
      %p36 = scmp.ne.s32.totalorder %s28, %s31
      %p37 = scmp.eq.s32.totalorder %s18, 0
      %p38 = por %p36, %p37
      %p39 = scmp.ne.s32.totalorder %s28, %s31
      %p40 = scmp.eq.s32.totalorder %s23, 1
      %p41 = por %p39, %p40
      %p42 = scmp.ne.s32.totalorder %s31, %s32
      %p43 = scmp.eq.s32.totalorder %s23, 0
      %p44 = por %p42, %p43
      %p45 = scmp.ne.s32.totalorder %s31, %s32
      %p46 = scmp.eq.s32.totalorder %s24, 1
      %p47 = por %p45, %p46
      %p49 = scmp.ne.s32.totalorder %s32, %s48
      %p50 = scmp.eq.s32.totalorder %s24, 0
      %p51 = por %p49, %p50
      %s53 = sadd.s32 %s52, 1
      %p56 = scmp.eq.s32.totalorder %s18, 1
      %p57 = scmp.ne.s32.totalorder %s52, %s54
      %p58 = scmp.eq.s32.totalorder %s18, 0
      %p59 = por %p57, %p58
      %p60 = scmp.ne.s32.totalorder %s52, %s54
      %p61 = scmp.eq.s32.totalorder %s23, 1
      %p62 = por %p60, %p61
      %p63 = scmp.ne.s32.totalorder %s54, %s55
      %p64 = scmp.eq.s32.totalorder %s23, 0
      %p65 = por %p63, %p64
      %p66 = scmp.ne.s32.totalorder %s54, %s55
      %p67 = scmp.eq.s32.totalorder %s24, 1
      %p68 = por %p66, %p67
      %p70 = scmp.ne.s32.totalorder %s55, %s69
      %p71 = scmp.eq.s32.totalorder %s24, 0
      %p72 = por %p70, %p71
      %s74 = sadd.s32 %s73, 1
      %p77 = scmp.eq.s32.totalorder %s18, 1
      %p78 = scmp.ne.s32.totalorder %s73, %s75
      %p79 = scmp.eq.s32.totalorder %s18, 0
      %p80 = por %p78, %p79
      %p81 = scmp.ne.s32.totalorder %s73, %s75
      %p82 = scmp.eq.s32.totalorder %s23, 1
      %p83 = por %p81, %p82
      %p84 = scmp.ne.s32.totalorder %s75, %s76
      %p85 = scmp.eq.s32.totalorder %s23, 0
      %p86 = por %p84, %p85
      %p87 = scmp.ne.s32.totalorder %s75, %s76
      %p88 = scmp.eq.s32.totalorder %s24, 1
      %p89 = por %p87, %p88
      %p91 = scmp.ne.s32.totalorder %s76, %s90
      %p92 = scmp.eq.s32.totalorder %s24, 0
      %p93 = por %p91, %p92
      %s95 = sadd.s32 %s94, 1
      %p98 = scmp.eq.s32.totalorder %s18, 1
      %p99 = scmp.ne.s32.totalorder %s94, %s96
      %p100 = scmp.eq.s32.totalorder %s18, 0
      %p101 = por %p99, %p100
      %p102 = scmp.ne.s32.totalorder %s94, %s96
      %p103 = scmp.eq.s32.totalorder %s23, 1
      %p104 = por %p102, %p103
      %p105 = scmp.ne.s32.totalorder %s96, %s97
      %p106 = scmp.eq.s32.totalorder %s23, 0
      %p107 = por %p105, %p106
      %p108 = scmp.ne.s32.totalorder %s96, %s97
      %p109 = scmp.eq.s32.totalorder %s24, 1
      %p110 = por %p108, %p109
      %p112 = scmp.ne.s32.totalorder %s97, %s111
      %p113 = scmp.eq.s32.totalorder %s24, 0
      %p114 = por %p112, %p113
      %s116 = sadd.s32 %s115, 1
      %p119 = scmp.eq.s32.totalorder %s18, 1
      %p120 = scmp.ne.s32.totalorder %s115, %s117
      %p121 = scmp.eq.s32.totalorder %s18, 0
      %p122 = por %p120, %p121
      %p123 = scmp.ne.s32.totalorder %s115, %s117
      %p124 = scmp.eq.s32.totalorder %s23, 1
      %p125 = por %p123, %p124
      %p126 = scmp.ne.s32.totalorder %s117, %s118
      %p127 = scmp.eq.s32.totalorder %s23, 0
      %p128 = por %p126, %p127
      %p129 = scmp.ne.s32.totalorder %s117, %s118
      %p130 = scmp.eq.s32.totalorder %s24, 1
      %p131 = por %p129, %p130
      %p133 = scmp.ne.s32.totalorder %s118, %s132
      %p134 = scmp.eq.s32.totalorder %s24, 0
      %p135 = por %p133, %p134
      %s137 = sadd.s32 %s136, 1
      %p140 = scmp.eq.s32.totalorder %s18, 1
      %p141 = scmp.ne.s32.totalorder %s136, %s138
      %p142 = scmp.eq.s32.totalorder %s18, 0
      %p143 = por %p141, %p142
      %p144 = scmp.ne.s32.totalorder %s136, %s138
      %p145 = scmp.eq.s32.totalorder %s23, 1
      %p146 = por %p144, %p145
      %p147 = scmp.ne.s32.totalorder %s138, %s139
      %p148 = scmp.eq.s32.totalorder %s23, 0
      %p149 = por %p147, %p148
      %p150 = scmp.ne.s32.totalorder %s138, %s139
      %p151 = scmp.eq.s32.totalorder %s24, 1
      %p152 = por %p150, %p151
      %p154 = scmp.ne.s32.totalorder %s139, %s153
      %p155 = scmp.eq.s32.totalorder %s24, 0
      %p156 = por %p154, %p155
      %s158 = sadd.s32 %s157, 1
      %p161 = scmp.eq.s32.totalorder %s18, 1
      %p162 = scmp.ne.s32.totalorder %s157, %s159
      %p163 = scmp.eq.s32.totalorder %s18, 0
      %p164 = por %p162, %p163
      %p165 = scmp.ne.s32.totalorder %s157, %s159
      %p166 = scmp.eq.s32.totalorder %s23, 1
      %p167 = por %p165, %p166
      %p168 = scmp.ne.s32.totalorder %s159, %s160
      %p169 = scmp.eq.s32.totalorder %s23, 0
      %p170 = por %p168, %p169
      %p171 = scmp.ne.s32.totalorder %s159, %s160
      %p172 = scmp.eq.s32.totalorder %s24, 1
      %p173 = por %p171, %p172
      %p175 = scmp.ne.s32.totalorder %s160, %s174
      %p176 = scmp.eq.s32.totalorder %s24, 0
      %p177 = por %p175, %p176
      %s179 = sadd.s32 %s178, 1
      %p182 = scmp.eq.s32.totalorder %s18, 1
      %p183 = scmp.ne.s32.totalorder %s178, %s180
      %p184 = scmp.eq.s32.totalorder %s18, 0
      %p185 = por %p183, %p184
      %p186 = scmp.ne.s32.totalorder %s178, %s180
      %p187 = scmp.eq.s32.totalorder %s23, 1
      %p188 = por %p186, %p187
      %p189 = scmp.ne.s32.totalorder %s180, %s181
      %p190 = scmp.eq.s32.totalorder %s23, 0
      %p191 = por %p189, %p190
      %p192 = scmp.ne.s32.totalorder %s180, %s181
      %p193 = scmp.eq.s32.totalorder %s24, 1
      %p194 = por %p192, %p193
      %p196 = scmp.ne.s32.totalorder %s181, %s195
      %p197 = scmp.eq.s32.totalorder %s24, 0
      %p198 = por %p196, %p197
      %s200 = sadd.s32 %s199, 1
      %p203 = scmp.eq.s32.totalorder %s18, 1
      %p204 = scmp.ne.s32.totalorder %s199, %s201
      %p205 = scmp.eq.s32.totalorder %s18, 0
      %p206 = por %p204, %p205
      %p207 = scmp.ne.s32.totalorder %s199, %s201
      %p208 = scmp.eq.s32.totalorder %s23, 1
      %p209 = por %p207, %p208
      %p210 = scmp.ne.s32.totalorder %s201, %s202
      %p211 = scmp.eq.s32.totalorder %s23, 0
      %p212 = por %p210, %p211
      %p213 = scmp.ne.s32.totalorder %s201, %s202
      %p214 = scmp.eq.s32.totalorder %s24, 1
      %p215 = por %p213, %p214
      %p217 = scmp.ne.s32.totalorder %s202, %s216
      %p218 = scmp.eq.s32.totalorder %s24, 0
      %p219 = por %p217, %p218
      %s221 = sadd.s32 %s220, 1
      %p224 = scmp.eq.s32.totalorder %s18, 1
      %p225 = scmp.ne.s32.totalorder %s220, %s222
      %p226 = scmp.eq.s32.totalorder %s18, 0
      %p227 = por %p225, %p226
      %p228 = scmp.ne.s32.totalorder %s220, %s222
      %p229 = scmp.eq.s32.totalorder %s23, 1
      %p230 = por %p228, %p229
      %p231 = scmp.ne.s32.totalorder %s222, %s223
      %p232 = scmp.eq.s32.totalorder %s23, 0
      %p233 = por %p231, %p232
      %p234 = scmp.ne.s32.totalorder %s222, %s223
      %p235 = scmp.eq.s32.totalorder %s24, 1
      %p236 = por %p234, %p235
      %p238 = scmp.ne.s32.totalorder %s223, %s237
      %p239 = scmp.eq.s32.totalorder %s24, 0
      %p240 = por %p238, %p239
      %s242 = sadd.s32 %s241, 1
      %p245 = scmp.eq.s32.totalorder %s18, 1
      %p246 = scmp.ne.s32.totalorder %s241, %s243
      %p247 = scmp.eq.s32.totalorder %s18, 0
      %p248 = por %p246, %p247
      %p249 = scmp.ne.s32.totalorder %s241, %s243
      %p250 = scmp.eq.s32.totalorder %s23, 1
      %p251 = por %p249, %p250
      %p252 = scmp.ne.s32.totalorder %s243, %s244
      %p253 = scmp.eq.s32.totalorder %s23, 0
      %p254 = por %p252, %p253
      %p255 = scmp.ne.s32.totalorder %s243, %s244
      %p256 = scmp.eq.s32.totalorder %s24, 1
      %p257 = por %p255, %p256
      %p259 = scmp.ne.s32.totalorder %s244, %s258
      %p260 = scmp.eq.s32.totalorder %s24, 0
      %p261 = por %p259, %p260
      %s262 = ssub.s32 %s18, %s25
      %p263 = scmp.eq.s32.totalorder %s262, 0
      %s265 = sadd.s32 %s264, 1
      %s266 = scalar_select %p263, %s264, %s265
      %p269 = pneg %p263
      %p270 = scmp.eq.s32.totalorder %s18, 1
      %p271 = por %p269, %p270
      %p272 = scmp.ne.s32.totalorder %s264, %s267
      %p273 = scmp.eq.s32.totalorder %s18, 0
      %p274 = por %p272, %p273
      %p275 = scmp.ne.s32.totalorder %s264, %s267
      %p276 = scmp.eq.s32.totalorder %s23, 1
      %p277 = por %p275, %p276
      %p278 = scmp.ne.s32.totalorder %s267, %s268
      %p279 = scmp.eq.s32.totalorder %s23, 0
      %p280 = por %p278, %p279
      %p281 = scmp.ne.s32.totalorder %s267, %s268
      %p282 = scmp.eq.s32.totalorder %s24, 1
      %p283 = por %p281, %p282
      %p285 = scmp.ne.s32.totalorder %s268, %s284
      %p286 = scmp.eq.s32.totalorder %s24, 0
      %p287 = por %p285, %p286
      %p288 = scmp.le.s32.totalorder 1, %s18
      %p289 = scmp.lt.s32.totalorder %s18, 3
      %p290 = pnand %p288, %p289
      %p291 = pneg %p290
      // Predicated region
      $region9: #{tpu_custom_call.1} parent=5 // pred_check
        _
      $region10: #{tpu_custom_call.1} parent=5 // pred_check_branch
        %293 = sbr.rel (%p290) target = $region12
      $region11: #{tpu_custom_call.1} parent=5 // pred_region
        %s294 = ssub.s32 %s18, 1
        // Predicated region
        $region13: #{tpu_custom_call.1} parent=11 // pred_check
          %p295 = pneg %p65
        $region14: #{tpu_custom_call.1} parent=11 // pred_check_branch
          %297 = sbr.rel (%p295) target = $region16
        $region15: #{tpu_custom_call.1} parent=11 // pred_region
          _
        $region16: #{tpu_custom_call.1} parent=11 // pred_fallthru
          _
        // Predicated region
        $region17: #{tpu_custom_call.1} parent=11 // pred_check
          %p298 = pneg %p86
        $region18: #{tpu_custom_call.1} parent=11 // pred_check_branch
          %300 = sbr.rel (%p298) target = $region20
        $region19: #{tpu_custom_call.1} parent=11 // pred_region
          _
        $region20: #{tpu_custom_call.1} parent=11 // pred_fallthru
          _
        // Predicated region
        $region21: #{tpu_custom_call.1} parent=11 // pred_check
          %p301 = pneg %p107
        $region22: #{tpu_custom_call.1} parent=11 // pred_check_branch
          %303 = sbr.rel (%p301) target = $region24
        $region23: #{tpu_custom_call.1} parent=11 // pred_region
          _
        $region24: #{tpu_custom_call.1} parent=11 // pred_fallthru
          _
        // Predicated region
        $region25: #{tpu_custom_call.1} parent=11 // pred_check
          %p304 = pneg %p128
        $region26: #{tpu_custom_call.1} parent=11 // pred_check_branch
          %306 = sbr.rel (%p304) target = $region28
        $region27: #{tpu_custom_call.1} parent=11 // pred_region
          %308 = vsyncadd [#allocation4], 0
          %s310 = sshll.u32 %s4, 4
          %s311 = int_to_ptr.hbm [resolvable:$true] %s310
          %s312 = sshll.u32 [#allocation3], 4
          %s313 = int_to_ptr.vmem [resolvable:$true] %s312
          %315 = dma.hbm_to_vmem [thread:$0]  %s311, 16, %s313, [#allocation4]
        $region28: #{tpu_custom_call.1} parent=11 // pred_fallthru
          _
        // Predicated region
        $region29: #{tpu_custom_call.1} parent=11 // pred_check
          %p316 = pneg %p149
        $region30: #{tpu_custom_call.1} parent=11 // pred_check_branch
          %318 = sbr.rel (%p316) target = $region32
        $region31: #{tpu_custom_call.1} parent=11 // pred_region
          _
        $region32: #{tpu_custom_call.1} parent=11 // pred_fallthru
          _
        // Predicated region
        $region33: #{tpu_custom_call.1} parent=11 // pred_check
          %p319 = pneg %p170
        $region34: #{tpu_custom_call.1} parent=11 // pred_check_branch
          %321 = sbr.rel (%p319) target = $region36
        $region35: #{tpu_custom_call.1} parent=11 // pred_region
          _
        $region36: #{tpu_custom_call.1} parent=11 // pred_fallthru
          _
        // Predicated region
        $region37: #{tpu_custom_call.1} parent=11 // pred_check
          %p322 = pneg %p191
        $region38: #{tpu_custom_call.1} parent=11 // pred_check_branch
          %324 = sbr.rel (%p322) target = $region40
        $region39: #{tpu_custom_call.1} parent=11 // pred_region
          _
        $region40: #{tpu_custom_call.1} parent=11 // pred_fallthru
          _
        // Predicated region
        $region41: #{tpu_custom_call.1} parent=11 // pred_check
          %p325 = pneg %p212
        $region42: #{tpu_custom_call.1} parent=11 // pred_check_branch
          %327 = sbr.rel (%p325) target = $region44
        $region43: #{tpu_custom_call.1} parent=11 // pred_region
          _
        $region44: #{tpu_custom_call.1} parent=11 // pred_fallthru
          _
        // Predicated region
        $region45: #{tpu_custom_call.1} parent=11 // pred_check
          %p328 = pneg %p233
        $region46: #{tpu_custom_call.1} parent=11 // pred_check_branch
          %330 = sbr.rel (%p328) target = $region48
        $region47: #{tpu_custom_call.1} parent=11 // pred_region
          _
        $region48: #{tpu_custom_call.1} parent=11 // pred_fallthru
          _
        // Predicated region
        $region49: #{tpu_custom_call.1} parent=11 // pred_check
          %p331 = pneg %p254
        $region50: #{tpu_custom_call.1} parent=11 // pred_check_branch
          %333 = sbr.rel (%p331) target = $region52
        $region51: #{tpu_custom_call.1} parent=11 // pred_region
          _
        $region52: #{tpu_custom_call.1} parent=11 // pred_fallthru
          _
      $region12: #{tpu_custom_call.1} parent=5 // pred_fallthru
        _
      %p334 = scmp.lt.s32.totalorder %s18, 2
      // Predicated region
      $region53: #{tpu_custom_call.1} parent=5 // pred_check
        %p335 = pneg %p334
      $region54: #{tpu_custom_call.1} parent=5 // pred_check_branch
        %337 = sbr.rel (%p335) target = $region56
      $region55: #{tpu_custom_call.1} parent=5 // pred_region
        // Predicated region
        $region57: #{tpu_custom_call.1} parent=55 // pred_check
          %p338 = pneg %p38
        $region58: #{tpu_custom_call.1} parent=55 // pred_check_branch
          %340 = sbr.rel (%p338) target = $region60
        $region59: #{tpu_custom_call.1} parent=55 // pred_region
          %s341 = smul.u32 16, %s18
          %p342 = scmp.lt.s32.totalorder %s341, 31
          %s343 = scalar_select %p342, %s341, 31
          %s344 = smul.addr %s343, 8
          %s345 = scalar_lea.vmem %s0, %s344
          %s346 = smul.u32 16, %s18
        $region60: #{tpu_custom_call.1} parent=55 // pred_fallthru
          _
      $region56: #{tpu_custom_call.1} parent=5 // pred_fallthru
        _
      %p347 = scmp.le.s32.totalorder 1, %s18
      %p348 = scmp.lt.s32.totalorder %s18, 3
      %p349 = pnand %p347, %p348
      %p350 = pneg %p349
      // Predicated region
      $region61: #{tpu_custom_call.1} parent=5 // pred_check
        _
      $region62: #{tpu_custom_call.1} parent=5 // pred_check_branch
        %352 = sbr.rel (%p349) target = $region64
      $region63: #{tpu_custom_call.1} parent=5 // pred_region
        %s353 = ssub.s32 %s18, 1
        // Predicated region
        $region65: #{tpu_custom_call.1} parent=63 // pred_check
          %p354 = pneg %p128
        $region66: #{tpu_custom_call.1} parent=63 // pred_check_branch
          %356 = sbr.rel (%p354) target = $region68
        $region67: #{tpu_custom_call.1} parent=63 // pred_region
          %358 = dma.done [#allocation4], 16
        $region68: #{tpu_custom_call.1} parent=63 // pred_fallthru
          _
        %s359 = smul.u32 16, %s23
        %p360 = scmp.lt.s32.totalorder %s359, 31
        %s361 = scalar_select %p360, %s359, 31
        %s362 = smul.addr %s361, 8
        %s363 = scalar_lea.vmem %s0, %s362
        %p364 = pneg %p44
        %p365 = pneg %p41
        %p366 = pneg %p65
        %p367 = pneg %p62
        %p368 = pneg %p86
        %p369 = pneg %p83
        %p370 = pneg %p107
        %p371 = pneg %p104
        %p372 = pneg %p128
        %p373 = pneg %p125
        %p374 = pneg %p149
        %p375 = pneg %p146
        %p376 = pneg %p170
        %p377 = pneg %p167
        %p378 = pneg %p191
        %p379 = pneg %p188
        %p380 = pneg %p212
        %p381 = pneg %p209
        %p382 = pneg %p233
        %p383 = pneg %p230
        %p384 = pneg %p254
        %p385 = pneg %p251
        %p386 = pneg %p280
        %p387 = pneg %p277
        %s388 = smul.u32 16, %s23
        %p389 = scmp.lt.s32.totalorder %s388, 31
        %s390 = scalar_select %p389, %s388, 31
        %s391 = smul.addr %s390, 8
        %s392 = scalar_lea.vmem %s11, %s391
        %s393 = smul.u32 16, %s23
        %p394 = scmp.lt.s32.totalorder %s393, 31
        %s395 = scalar_select %p394, %s393, 31
        %s396 = smul.addr %s395, 8
        %s397 = scalar_lea.vmem %s0, %s396
        %s398 = smul.u32 16, %s23
        %s399 = smul.u32 16, %s23
        %p400 = scmp.lt.s32.totalorder %s399, 31
        %s401 = scalar_select %p400, %s399, 31
        %s402 = smul.addr %s401, 8
        %s403 = scalar_lea.vmem %s11, %s402
        %s404 = smul.u32 16, %s23
        %v406 = vld [vmem:[%s397] sm:$0xff]
        %v407 = vld [vmem:[%s397 + $0x8] sm:$0xff]
        %v408 = vld [vmem:[%s397 + $0x10] sm:$0xff]
        %v409 = vld [vmem:[%s397 + $0x18] sm:$0xff]
        %v410 = vld [vmem:[%s397 + $0x20] sm:$0xff]
        %v411 = vld [vmem:[%s397 + $0x28] sm:$0xff]
        %v412 = vld [vmem:[%s397 + $0x30] sm:$0xff]
        %v413 = vld [vmem:[%s397 + $0x38] sm:$0xff]
        %v414 = vld [vmem:[%s397 + $0x40] sm:$0xff]
        %v415 = vld [vmem:[%s397 + $0x48] sm:$0xff]
        %v416 = vld [vmem:[%s397 + $0x50] sm:$0xff]
        %v417 = vld [vmem:[%s397 + $0x58] sm:$0xff]
        %v418 = vld [vmem:[%s397 + $0x60] sm:$0xff]
        %v419 = vld [vmem:[%s397 + $0x68] sm:$0xff]
        %v420 = vld [vmem:[%s397 + $0x70] sm:$0xff]
        %v421 = vld [vmem:[%s397 + $0x78] sm:$0xff]
        %v422 = vpack.c.bf16 %v407, %v406
        %v423 = vpack.c.bf16 %v409, %v408
        %v424 = vpack.c.bf16 %v411, %v410
        %v425 = vpack.c.bf16 %v413, %v412
        %v426 = vpack.c.bf16 %v415, %v414
        %v427 = vpack.c.bf16 %v417, %v416
        %v428 = vpack.c.bf16 %v419, %v418
        %v429 = vpack.c.bf16 %v421, %v420
        %v430 = vld [vmem:[%s1] sm:$0xf]
        %v431 = vld [vmem:[%s1 + $0x4] sm:$0xf]
        %v432 = vld [vmem:[%s1 + $0x8] sm:$0xf]
        %v433 = vld [vmem:[%s1 + $0xc] sm:$0xf]
        %v434 = vld [vmem:[%s1 + $0x10] sm:$0xf]
        %v435 = vld [vmem:[%s1 + $0x14] sm:$0xf]
        %v436 = vld [vmem:[%s1 + $0x18] sm:$0xf]
        %v437 = vld [vmem:[%s1 + $0x1c] sm:$0xf]
        %v438 = vld [vmem:[#allocation3] sm:$0x1]
        %v440 = vperm.slane %v438, 0
        %v450 = vunpack.c.l.b16 %v430
        %v451 = vunpack.c.l.b16 %v431
        %v452 = vunpack.c.l.b16 %v432
        %v453 = vunpack.c.l.b16 %v433
        %v454 = vunpack.c.l.b16 %v434
        %v455 = vunpack.c.l.b16 %v435
        %v456 = vunpack.c.l.b16 %v436
        %v457 = vunpack.c.l.b16 %v437
        %v458 = vpack.c.b16 %v451, %v450
        %v459 = vpack.c.b16 %v453, %v452
        %v460 = vpack.c.b16 %v455, %v454
        %v461 = vpack.c.b16 %v457, %v456
        %vm466 = vcmask 523264
        %v468 = vsel %vm466, %v422, 0
        %v471 = vsel %vm466, %v423, 0
        %v474 = vsel %vm466, %v424, 0
        %v477 = vsel %vm466, %v425, 0
        %v480 = vsel %vm466, %v426, 0
        %v483 = vsel %vm466, %v427, 0
        %v486 = vsel %vm466, %v428, 0
        %v489 = vsel %vm466, %v429, 0
        %491 = vmatpush.bf16.msra.mxu0 0
        %492 = vmatpush.bf16.msra.mxu0 0
        %493 = vmatpush.bf16.msra.mxu0 0
        %494 = vmatpush.bf16.msra.mxu0 0
        %495 = vmatpush.bf16.msra.mxu0 %v461
        %496 = vmatpush.bf16.msra.mxu0 %v460
        %497 = vmatpush.bf16.msra.mxu0 %v459
        %498 = vmatpush.bf16.msra.mxu0 %v458
        %499 = vmatmul.bf16.gmra.mxu0 %v468
        %v500 = vpop.f32.mrf.mxu0
        %v501 = vadd.f32 %v440, %v500
        %v502 = vpop.f32.mrf.mxu0
        %v503 = vadd.f32 %v440, %v502
        %504 = vmatmul.bf16.gmra.mxu0 %v471
        %v505 = vpop.f32.mrf.mxu0
        %v506 = vadd.f32 %v440, %v505
        %v507 = vpop.f32.mrf.mxu0
        %v508 = vadd.f32 %v440, %v507
        %509 = vmatmul.bf16.gmra.mxu0 %v474
        %v510 = vpop.f32.mrf.mxu0
        %v511 = vadd.f32 %v440, %v510
        %v512 = vpop.f32.mrf.mxu0
        %v513 = vadd.f32 %v440, %v512
        %514 = vmatmul.bf16.gmra.mxu0 %v477
        %v515 = vpop.f32.mrf.mxu0
        %v516 = vadd.f32 %v440, %v515
        %v517 = vpop.f32.mrf.mxu0
        %v518 = vadd.f32 %v440, %v517
        %519 = vmatmul.bf16.gmra.mxu0 %v480
        %v520 = vpop.f32.mrf.mxu0
        %v521 = vadd.f32 %v440, %v520
        %v522 = vpop.f32.mrf.mxu0
        %v523 = vadd.f32 %v440, %v522
        %524 = vmatmul.bf16.gmra.mxu0 %v483
        %v525 = vpop.f32.mrf.mxu0
        %v526 = vadd.f32 %v440, %v525
        %v527 = vpop.f32.mrf.mxu0
        %v528 = vadd.f32 %v440, %v527
        %529 = vmatmul.bf16.gmra.mxu0 %v486
        %v530 = vpop.f32.mrf.mxu0
        %v531 = vadd.f32 %v440, %v530
        %v532 = vpop.f32.mrf.mxu0
        %v533 = vadd.f32 %v440, %v532
        %534 = vmatmul.bf16.gmra.mxu0 %v489
        %v535 = vpop.f32.mrf.mxu0
        %v536 = vadd.f32 %v440, %v535
        %v537 = vpop.f32.mrf.mxu0
        %v538 = vadd.f32 %v440, %v537
        %539 = vdwg.mxu0
        %v540 = vpack.c.bf16 %v501, %v501
        %v541 = vpack.c.bf16 %v503, %v503
        %v542 = vpack.c.bf16 %v506, %v506
        %v543 = vpack.c.bf16 %v508, %v508
        %v544 = vpack.c.bf16 %v511, %v511
        %v545 = vpack.c.bf16 %v513, %v513
        %v546 = vpack.c.bf16 %v516, %v516
        %v547 = vpack.c.bf16 %v518, %v518
        %v548 = vpack.c.bf16 %v521, %v521
        %v549 = vpack.c.bf16 %v523, %v523
        %v550 = vpack.c.bf16 %v526, %v526
        %v551 = vpack.c.bf16 %v528, %v528
        %v552 = vpack.c.bf16 %v531, %v531
        %v553 = vpack.c.bf16 %v533, %v533
        %v554 = vpack.c.bf16 %v536, %v536
        %v555 = vpack.c.bf16 %v538, %v538
        %v556 = vld [vmem:[%s2] sm:$0xf]
        %v557 = vld [vmem:[%s2 + $0x4] sm:$0xf]
        %v558 = vld [vmem:[%s2 + $0x8] sm:$0xf]
        %v559 = vld [vmem:[%s2 + $0xc] sm:$0xf]
        %v560 = vld [vmem:[%s2 + $0x10] sm:$0xf]
        %v561 = vld [vmem:[%s2 + $0x14] sm:$0xf]
        %v562 = vld [vmem:[%s2 + $0x18] sm:$0xf]
        %v563 = vld [vmem:[%s2 + $0x1c] sm:$0xf]
        %v564 = vld [vmem:[%s5] sm:$0x1]
        %v566 = vperm.slane %v564, 0
        %v576 = vunpack.c.l.b16 %v556
        %v577 = vunpack.c.l.b16 %v557
        %v578 = vunpack.c.l.b16 %v558
        %v579 = vunpack.c.l.b16 %v559
        %v580 = vunpack.c.l.b16 %v560
        %v581 = vunpack.c.l.b16 %v561
        %v582 = vunpack.c.l.b16 %v562
        %v583 = vunpack.c.l.b16 %v563
        %v584 = vpack.c.b16 %v577, %v576
        %v585 = vpack.c.b16 %v579, %v578
        %v586 = vpack.c.b16 %v581, %v580
        %v587 = vpack.c.b16 %v583, %v582
        %592 = vmatpush.bf16.msra.mxu0 0
        %593 = vmatpush.bf16.msra.mxu0 0
        %594 = vmatpush.bf16.msra.mxu0 0
        %595 = vmatpush.bf16.msra.mxu0 0
        %596 = vmatpush.bf16.msra.mxu0 %v587
        %597 = vmatpush.bf16.msra.mxu0 %v586
        %598 = vmatpush.bf16.msra.mxu0 %v585
        %599 = vmatpush.bf16.msra.mxu0 %v584
        %600 = vmatmul.bf16.gmra.mxu0 %v468
        %v601 = vpop.f32.mrf.mxu0
        %v602 = vadd.f32 %v566, %v601
        %v603 = vpop.f32.mrf.mxu0
        %v604 = vadd.f32 %v566, %v603
        %605 = vmatmul.bf16.gmra.mxu0 %v471
        %v606 = vpop.f32.mrf.mxu0
        %v607 = vadd.f32 %v566, %v606
        %v608 = vpop.f32.mrf.mxu0
        %v609 = vadd.f32 %v566, %v608
        %610 = vmatmul.bf16.gmra.mxu0 %v474
        %v611 = vpop.f32.mrf.mxu0
        %v612 = vadd.f32 %v566, %v611
        %v613 = vpop.f32.mrf.mxu0
        %v614 = vadd.f32 %v566, %v613
        %615 = vmatmul.bf16.gmra.mxu0 %v477
        %v616 = vpop.f32.mrf.mxu0
        %v617 = vadd.f32 %v566, %v616
        %v618 = vpop.f32.mrf.mxu0
        %v619 = vadd.f32 %v566, %v618
        %620 = vmatmul.bf16.gmra.mxu0 %v480
        %v621 = vpop.f32.mrf.mxu0
        %v622 = vadd.f32 %v566, %v621
        %v623 = vpop.f32.mrf.mxu0
        %v624 = vadd.f32 %v566, %v623
        %625 = vmatmul.bf16.gmra.mxu0 %v483
        %v626 = vpop.f32.mrf.mxu0
        %v627 = vadd.f32 %v566, %v626
        %v628 = vpop.f32.mrf.mxu0
        %v629 = vadd.f32 %v566, %v628
        %630 = vmatmul.bf16.gmra.mxu0 %v486
        %v631 = vpop.f32.mrf.mxu0
        %v632 = vadd.f32 %v566, %v631
        %v633 = vpop.f32.mrf.mxu0
        %v634 = vadd.f32 %v566, %v633
        %635 = vmatmul.bf16.gmra.mxu0 %v489
        %v636 = vpop.f32.mrf.mxu0
        %v637 = vadd.f32 %v566, %v636
        %v638 = vpop.f32.mrf.mxu0
        %v639 = vadd.f32 %v566, %v638
        %640 = vdwg.mxu0
        %v641 = vpack.c.bf16 %v602, %v602
        %v642 = vpack.c.bf16 %v604, %v604
        %v643 = vpack.c.bf16 %v607, %v607
        %v644 = vpack.c.bf16 %v609, %v609
        %v645 = vpack.c.bf16 %v612, %v612
        %v646 = vpack.c.bf16 %v614, %v614
        %v647 = vpack.c.bf16 %v617, %v617
        %v648 = vpack.c.bf16 %v619, %v619
        %v649 = vpack.c.bf16 %v622, %v622
        %v650 = vpack.c.bf16 %v624, %v624
        %v651 = vpack.c.bf16 %v627, %v627
        %v652 = vpack.c.bf16 %v629, %v629
        %v653 = vpack.c.bf16 %v632, %v632
        %v654 = vpack.c.bf16 %v634, %v634
        %v655 = vpack.c.bf16 %v637, %v637
        %v656 = vpack.c.bf16 %v639, %v639
        %v657 = vld [vmem:[%s3] sm:$0xf]
        %v658 = vld [vmem:[%s3 + $0x4] sm:$0xf]
        %v659 = vld [vmem:[%s3 + $0x8] sm:$0xf]
        %v660 = vld [vmem:[%s3 + $0xc] sm:$0xf]
        %v661 = vld [vmem:[%s3 + $0x10] sm:$0xf]
        %v662 = vld [vmem:[%s3 + $0x14] sm:$0xf]
        %v663 = vld [vmem:[%s3 + $0x18] sm:$0xf]
        %v664 = vld [vmem:[%s3 + $0x1c] sm:$0xf]
        %v665 = vld [vmem:[%s6] sm:$0x1]
        %v667 = vperm.slane %v665, 0
        %v677 = vunpack.c.l.b16 %v657
        %v678 = vunpack.c.l.b16 %v658
        %v679 = vunpack.c.l.b16 %v659
        %v680 = vunpack.c.l.b16 %v660
        %v681 = vunpack.c.l.b16 %v661
        %v682 = vunpack.c.l.b16 %v662
        %v683 = vunpack.c.l.b16 %v663
        %v684 = vunpack.c.l.b16 %v664
        %v685 = vpack.c.b16 %v678, %v677
        %v686 = vpack.c.b16 %v680, %v679
        %v687 = vpack.c.b16 %v682, %v681
        %v688 = vpack.c.b16 %v684, %v683
        %693 = vmatpush.bf16.msra.mxu0 0
        %694 = vmatpush.bf16.msra.mxu0 0
        %695 = vmatpush.bf16.msra.mxu0 0
        %696 = vmatpush.bf16.msra.mxu0 0
        %697 = vmatpush.bf16.msra.mxu0 %v688
        %698 = vmatpush.bf16.msra.mxu0 %v687
        %699 = vmatpush.bf16.msra.mxu0 %v686
        %700 = vmatpush.bf16.msra.mxu0 %v685
        %701 = vmatmul.bf16.gmra.mxu0 %v468
        %v702 = vpop.f32.mrf.mxu0
        %v703 = vadd.f32 %v667, %v702
        %v704 = vpop.f32.mrf.mxu0
        %v705 = vadd.f32 %v667, %v704
        %706 = vmatmul.bf16.gmra.mxu0 %v471
        %v707 = vpop.f32.mrf.mxu0
        %v708 = vadd.f32 %v667, %v707
        %v709 = vpop.f32.mrf.mxu0
        %v710 = vadd.f32 %v667, %v709
        %711 = vmatmul.bf16.gmra.mxu0 %v474
        %v712 = vpop.f32.mrf.mxu0
        %v713 = vadd.f32 %v667, %v712
        %v714 = vpop.f32.mrf.mxu0
        %v715 = vadd.f32 %v667, %v714
        %716 = vmatmul.bf16.gmra.mxu0 %v477
        %v717 = vpop.f32.mrf.mxu0
        %v718 = vadd.f32 %v667, %v717
        %v719 = vpop.f32.mrf.mxu0
        %v720 = vadd.f32 %v667, %v719
        %721 = vmatmul.bf16.gmra.mxu0 %v480
        %v722 = vpop.f32.mrf.mxu0
        %v723 = vadd.f32 %v667, %v722
        %v724 = vpop.f32.mrf.mxu0
        %v725 = vadd.f32 %v667, %v724
        %726 = vmatmul.bf16.gmra.mxu0 %v483
        %v727 = vpop.f32.mrf.mxu0
        %v728 = vadd.f32 %v667, %v727
        %v729 = vpop.f32.mrf.mxu0
        %v730 = vadd.f32 %v667, %v729
        %731 = vmatmul.bf16.gmra.mxu0 %v486
        %v732 = vpop.f32.mrf.mxu0
        %v733 = vadd.f32 %v667, %v732
        %v734 = vpop.f32.mrf.mxu0
        %v735 = vadd.f32 %v667, %v734
        %736 = vmatmul.bf16.gmra.mxu0 %v489
        %v737 = vpop.f32.mrf.mxu0
        %v738 = vadd.f32 %v667, %v737
        %v739 = vpop.f32.mrf.mxu0
        %v740 = vadd.f32 %v667, %v739
        %741 = vdwg.mxu0
        %v742 = vpack.c.bf16 %v703, %v703
        %v743 = vpack.c.bf16 %v705, %v705
        %v744 = vpack.c.bf16 %v708, %v708
        %v745 = vpack.c.bf16 %v710, %v710
        %v746 = vpack.c.bf16 %v713, %v713
        %v747 = vpack.c.bf16 %v715, %v715
        %v748 = vpack.c.bf16 %v718, %v718
        %v749 = vpack.c.bf16 %v720, %v720
        %v750 = vpack.c.bf16 %v723, %v723
        %v751 = vpack.c.bf16 %v725, %v725
        %v752 = vpack.c.bf16 %v728, %v728
        %v753 = vpack.c.bf16 %v730, %v730
        %v754 = vpack.c.bf16 %v733, %v733
        %v755 = vpack.c.bf16 %v735, %v735
        %v756 = vpack.c.bf16 %v738, %v738
        %v757 = vpack.c.bf16 %v740, %v740
        %v758 = vld [vmem:[%s8] sm:$0xff]
        %v759 = vld [vmem:[%s8 + $0x8] sm:$0xff]
        %v760 = vld [vmem:[%s8 + $0x10] sm:$0xff]
        %v761 = vld [vmem:[%s8 + $0x18] sm:$0xff]
        %v762 = vld [vmem:[%s8 + $0x20] sm:$0xff]
        %v763 = vld [vmem:[%s8 + $0x28] sm:$0xff]
        %v764 = vld [vmem:[%s8 + $0x30] sm:$0xff]
        %v765 = vld [vmem:[%s8 + $0x38] sm:$0xff]
        %v766 = vld [vmem:[%s8 + $0x40] sm:$0xff]
        %v767 = vld [vmem:[%s8 + $0x48] sm:$0xff]
        %v768 = vld [vmem:[%s8 + $0x50] sm:$0xff]
        %v769 = vld [vmem:[%s8 + $0x58] sm:$0xff]
        %v770 = vld [vmem:[%s8 + $0x60] sm:$0xff]
        %v771 = vld [vmem:[%s8 + $0x68] sm:$0xff]
        %v772 = vld [vmem:[%s8 + $0x70] sm:$0xff]
        %v773 = vld [vmem:[%s8 + $0x78] sm:$0xff]
        %v782 = vunpack.c.l.b16 %v540
        %v783 = vunpack.c.l.b16 %v541
        %v784 = vunpack.c.l.b16 %v542
        %v785 = vunpack.c.l.b16 %v543
        %v786 = vunpack.c.l.b16 %v544
        %v787 = vunpack.c.l.b16 %v545
        %v788 = vunpack.c.l.b16 %v546
        %v789 = vunpack.c.l.b16 %v547
        %v790 = vpack.c.b16 %v783, %v782
        %v791 = vpack.c.b16 %v785, %v784
        %v792 = vpack.c.b16 %v787, %v786
        %v793 = vpack.c.b16 %v789, %v788
        %v802 = vunpack.c.l.b16 %v641
        %v803 = vunpack.c.l.b16 %v642
        %v804 = vunpack.c.l.b16 %v643
        %v805 = vunpack.c.l.b16 %v644
        %v806 = vunpack.c.l.b16 %v645
        %v807 = vunpack.c.l.b16 %v646
        %v808 = vunpack.c.l.b16 %v647
        %v809 = vunpack.c.l.b16 %v648
        %v810 = vpack.c.b16 %v803, %v802
        %v811 = vpack.c.b16 %v805, %v804
        %v812 = vpack.c.b16 %v807, %v806
        %v813 = vpack.c.b16 %v809, %v808
        %vm814 = vcmask 261120
        %v816 = vsel %vm814, %v790, 0
        %v819 = vsel %vm814, %v791, 0
        %v822 = vsel %vm814, %v792, 0
        %v825 = vsel %vm814, %v793, 0
        %v828 = vsel %vm814, %v810, 0
        %v831 = vsel %vm814, %v811, 0
        %v834 = vsel %vm814, %v812, 0
        %v837 = vsel %vm814, %v813, 0
        %839 = vmatpush.bf16.xpose.msra.mxu0 0
        %840 = vmatpush.bf16.xpose.msra.mxu0 0
        %841 = vmatpush.bf16.xpose.msra.mxu0 0
        %842 = vmatpush.bf16.xpose.msra.mxu0 0
        %843 = vmatpush.bf16.xpose.msra.mxu0 %v837
        %844 = vmatpush.bf16.xpose.msra.mxu0 %v834
        %845 = vmatpush.bf16.xpose.msra.mxu0 %v831
        %846 = vmatpush.bf16.xpose.msra.mxu0 %v828
        %847 = vmatmul.bf16.gmra.mxu0 %v816
        %v848 = vpop.f32.mrf.mxu0
        %v849 = vadd.f32 0.0, %v848
        %v850 = vpop.f32.mrf.mxu0
        %v851 = vadd.f32 0.0, %v850
        %852 = vmatmul.bf16.gmra.mxu0 %v819
        %v853 = vpop.f32.mrf.mxu0
        %v854 = vadd.f32 0.0, %v853
        %v855 = vpop.f32.mrf.mxu0
        %v856 = vadd.f32 0.0, %v855
        %857 = vmatmul.bf16.gmra.mxu0 %v822
        %v858 = vpop.f32.mrf.mxu0
        %v859 = vadd.f32 0.0, %v858
        %v860 = vpop.f32.mrf.mxu0
        %v861 = vadd.f32 0.0, %v860
        %862 = vmatmul.bf16.gmra.mxu0 %v825
        %v863 = vpop.f32.mrf.mxu0
        %v864 = vadd.f32 0.0, %v863
        %v865 = vpop.f32.mrf.mxu0
        %v866 = vadd.f32 0.0, %v865
        %867 = vdwg.mxu0
        %v876 = vunpack.c.l.b16 %v548
        %v877 = vunpack.c.l.b16 %v549
        %v878 = vunpack.c.l.b16 %v550
        %v879 = vunpack.c.l.b16 %v551
        %v880 = vunpack.c.l.b16 %v552
        %v881 = vunpack.c.l.b16 %v553
        %v882 = vunpack.c.l.b16 %v554
        %v883 = vunpack.c.l.b16 %v555
        %v884 = vpack.c.b16 %v877, %v876
        %v885 = vpack.c.b16 %v879, %v878
        %v886 = vpack.c.b16 %v881, %v880
        %v887 = vpack.c.b16 %v883, %v882
        %v896 = vunpack.c.l.b16 %v649
        %v897 = vunpack.c.l.b16 %v650
        %v898 = vunpack.c.l.b16 %v651
        %v899 = vunpack.c.l.b16 %v652
        %v900 = vunpack.c.l.b16 %v653
        %v901 = vunpack.c.l.b16 %v654
        %v902 = vunpack.c.l.b16 %v655
        %v903 = vunpack.c.l.b16 %v656
        %v904 = vpack.c.b16 %v897, %v896
        %v905 = vpack.c.b16 %v899, %v898
        %v906 = vpack.c.b16 %v901, %v900
        %v907 = vpack.c.b16 %v903, %v902
        %v909 = vsel %vm814, %v884, 0
        %v912 = vsel %vm814, %v885, 0
        %v915 = vsel %vm814, %v886, 0
        %v918 = vsel %vm814, %v887, 0
        %v921 = vsel %vm814, %v904, 0
        %v924 = vsel %vm814, %v905, 0
        %v927 = vsel %vm814, %v906, 0
        %v930 = vsel %vm814, %v907, 0
        %932 = vmatpush.bf16.xpose.msra.mxu0 0
        %933 = vmatpush.bf16.xpose.msra.mxu0 0
        %934 = vmatpush.bf16.xpose.msra.mxu0 0
        %935 = vmatpush.bf16.xpose.msra.mxu0 0
        %936 = vmatpush.bf16.xpose.msra.mxu0 %v930
        %937 = vmatpush.bf16.xpose.msra.mxu0 %v927
        %938 = vmatpush.bf16.xpose.msra.mxu0 %v924
        %939 = vmatpush.bf16.xpose.msra.mxu0 %v921
        %940 = vmatmul.bf16.gmra.mxu0 %v909
        %v941 = vpop.f32.mrf.mxu0
        %v942 = vadd.f32 0.0, %v941
        %v943 = vpop.f32.mrf.mxu0
        %v944 = vadd.f32 0.0, %v943
        %945 = vmatmul.bf16.gmra.mxu0 %v912
        %v946 = vpop.f32.mrf.mxu0
        %v947 = vadd.f32 0.0, %v946
        %v948 = vpop.f32.mrf.mxu0
        %v949 = vadd.f32 0.0, %v948
        %950 = vmatmul.bf16.gmra.mxu0 %v915
        %v951 = vpop.f32.mrf.mxu0
        %v952 = vadd.f32 0.0, %v951
        %v953 = vpop.f32.mrf.mxu0
        %v954 = vadd.f32 0.0, %v953
        %955 = vmatmul.bf16.gmra.mxu0 %v918
        %v956 = vpop.f32.mrf.mxu0
        %v957 = vadd.f32 0.0, %v956
        %v958 = vpop.f32.mrf.mxu0
        %v959 = vadd.f32 0.0, %v958
        %960 = vdwg.mxu0
        %v961 = vld [vmem:[%s7] sm:$0xff]
        %v962 = vld [vmem:[%s7 + $0x8] sm:$0xff]
        %v963 = vld [vmem:[%s7 + $0x10] sm:$0xff]
        %v964 = vld [vmem:[%s7 + $0x18] sm:$0xff]
        %v965 = vld [vmem:[%s7 + $0x20] sm:$0xff]
        %v966 = vld [vmem:[%s7 + $0x28] sm:$0xff]
        %v967 = vld [vmem:[%s7 + $0x30] sm:$0xff]
        %v968 = vld [vmem:[%s7 + $0x38] sm:$0xff]
        %v969 = vadd.f32 %v961, %v758
        %v970 = vadd.f32 %v962, %v759
        %v971 = vadd.f32 %v963, %v760
        %v972 = vadd.f32 %v964, %v761
        %v973 = vadd.f32 %v965, %v762
        %v974 = vadd.f32 %v966, %v763
        %v975 = vadd.f32 %v967, %v764
        %v976 = vadd.f32 %v968, %v765
        %v977 = vadd.f32 %v961, %v766
        %v978 = vadd.f32 %v962, %v767
        %v979 = vadd.f32 %v963, %v768
        %v980 = vadd.f32 %v964, %v769
        %v981 = vadd.f32 %v965, %v770
        %v982 = vadd.f32 %v966, %v771
        %v983 = vadd.f32 %v967, %v772
        %v984 = vadd.f32 %v968, %v773
        %v985 = vadd.f32 %v849, %v969
        %v986 = vadd.f32 %v851, %v970
        %v987 = vadd.f32 %v854, %v971
        %v988 = vadd.f32 %v856, %v972
        %v989 = vadd.f32 %v859, %v973
        %v990 = vadd.f32 %v861, %v974
        %v991 = vadd.f32 %v864, %v975
        %v992 = vadd.f32 %v866, %v976
        %v993 = vadd.f32 %v942, %v977
        %v994 = vadd.f32 %v944, %v978
        %v995 = vadd.f32 %v947, %v979
        %v996 = vadd.f32 %v949, %v980
        %v997 = vadd.f32 %v952, %v981
        %v998 = vadd.f32 %v954, %v982
        %v999 = vadd.f32 %v957, %v983
        %v1000 = vadd.f32 %v959, %v984
        %v1001 = vsel %vm466, %v985, -inf
        %1002 = vmax.xlane.f32.xlu0 %v1001
        %v1003 = vpop.xlane.xlu0 %1002
        %v1004 = vsel %vm466, %v986, -inf
        %1005 = vmax.xlane.f32.xlu0 %v1004
        %v1006 = vpop.xlane.xlu0 %1005
        %v1007 = vsel %vm466, %v987, -inf
        %1008 = vmax.xlane.f32.xlu0 %v1007
        %v1009 = vpop.xlane.xlu0 %1008
        %v1010 = vsel %vm466, %v988, -inf
        %1011 = vmax.xlane.f32.xlu0 %v1010
        %v1012 = vpop.xlane.xlu0 %1011
        %v1013 = vsel %vm466, %v989, -inf
        %1014 = vmax.xlane.f32.xlu0 %v1013
        %v1015 = vpop.xlane.xlu0 %1014
        %v1016 = vsel %vm466, %v990, -inf
        %1017 = vmax.xlane.f32.xlu0 %v1016
        %v1018 = vpop.xlane.xlu0 %1017
        %v1019 = vsel %vm466, %v991, -inf
        %1020 = vmax.xlane.f32.xlu0 %v1019
        %v1021 = vpop.xlane.xlu0 %1020
        %v1022 = vsel %vm466, %v992, -inf
        %1023 = vmax.xlane.f32.xlu0 %v1022
        %v1024 = vpop.xlane.xlu0 %1023
        %v1025 = vsel %vm466, %v993, -inf
        %1026 = vmax.xlane.f32.xlu0 %v1025
        %v1027 = vpop.xlane.xlu0 %1026
        %v1028 = vsel %vm466, %v994, -inf
        %1029 = vmax.xlane.f32.xlu0 %v1028
        %v1030 = vpop.xlane.xlu0 %1029
        %v1031 = vsel %vm466, %v995, -inf
        %1032 = vmax.xlane.f32.xlu0 %v1031
        %v1033 = vpop.xlane.xlu0 %1032
        %v1034 = vsel %vm466, %v996, -inf
        %1035 = vmax.xlane.f32.xlu0 %v1034
        %v1036 = vpop.xlane.xlu0 %1035
        %v1037 = vsel %vm466, %v997, -inf
        %1038 = vmax.xlane.f32.xlu0 %v1037
        %v1039 = vpop.xlane.xlu0 %1038
        %v1040 = vsel %vm466, %v998, -inf
        %1041 = vmax.xlane.f32.xlu0 %v1040
        %v1042 = vpop.xlane.xlu0 %1041
        %v1043 = vsel %vm466, %v999, -inf
        %1044 = vmax.xlane.f32.xlu0 %v1043
        %v1045 = vpop.xlane.xlu0 %1044
        %v1046 = vsel %vm466, %v1000, -inf
        %1047 = vmax.xlane.f32.xlu0 %v1046
        %v1048 = vpop.xlane.xlu0 %1047
        %v1049 = vsub.f32 %v985, %v1003
        %v1050 = vsub.f32 %v986, %v1006
        %v1051 = vsub.f32 %v987, %v1009
        %v1052 = vsub.f32 %v988, %v1012
        %v1053 = vsub.f32 %v989, %v1015
        %v1054 = vsub.f32 %v990, %v1018
        %v1055 = vsub.f32 %v991, %v1021
        %v1056 = vsub.f32 %v992, %v1024
        %v1057 = vsub.f32 %v993, %v1027
        %v1058 = vsub.f32 %v994, %v1030
        %v1059 = vsub.f32 %v995, %v1033
        %v1060 = vsub.f32 %v996, %v1036
        %v1061 = vsub.f32 %v997, %v1039
        %v1062 = vsub.f32 %v998, %v1042
        %v1063 = vsub.f32 %v999, %v1045
        %v1064 = vsub.f32 %v1000, %v1048
        %v1065 = vmul.f32 %v1049, 1.442695
        %v1066 = vpow.pop %v1065
        %v1067 = vmul.f32 %v1050, 1.442695
        %v1068 = vpow.pop %v1067
        %v1069 = vmul.f32 %v1051, 1.442695
        %v1070 = vpow.pop %v1069
        %v1071 = vmul.f32 %v1052, 1.442695
        %v1072 = vpow.pop %v1071
        %v1073 = vmul.f32 %v1053, 1.442695
        %v1074 = vpow.pop %v1073
        %v1075 = vmul.f32 %v1054, 1.442695
        %v1076 = vpow.pop %v1075
        %v1077 = vmul.f32 %v1055, 1.442695
        %v1078 = vpow.pop %v1077
        %v1079 = vmul.f32 %v1056, 1.442695
        %v1080 = vpow.pop %v1079
        %v1081 = vmul.f32 %v1057, 1.442695
        %v1082 = vpow.pop %v1081
        %v1083 = vmul.f32 %v1058, 1.442695
        %v1084 = vpow.pop %v1083
        %v1085 = vmul.f32 %v1059, 1.442695
        %v1086 = vpow.pop %v1085
        %v1087 = vmul.f32 %v1060, 1.442695
        %v1088 = vpow.pop %v1087
        %v1089 = vmul.f32 %v1061, 1.442695
        %v1090 = vpow.pop %v1089
        %v1091 = vmul.f32 %v1062, 1.442695
        %v1092 = vpow.pop %v1091
        %v1093 = vmul.f32 %v1063, 1.442695
        %v1094 = vpow.pop %v1093
        %v1095 = vmul.f32 %v1064, 1.442695
        %v1096 = vpow.pop %v1095
        %v1097 = vsel %vm466, %v1066, 0.0
        %1098 = vadd.xlane.f32.xlu0 %v1097
        %v1099 = vpop.xlane.xlu0 %1098
        %v1100 = vsel %vm466, %v1068, 0.0
        %1101 = vadd.xlane.f32.xlu0 %v1100
        %v1102 = vpop.xlane.xlu0 %1101
        %v1103 = vsel %vm466, %v1070, 0.0
        %1104 = vadd.xlane.f32.xlu0 %v1103
        %v1105 = vpop.xlane.xlu0 %1104
        %v1106 = vsel %vm466, %v1072, 0.0
        %1107 = vadd.xlane.f32.xlu0 %v1106
        %v1108 = vpop.xlane.xlu0 %1107
        %v1109 = vsel %vm466, %v1074, 0.0
        %1110 = vadd.xlane.f32.xlu0 %v1109
        %v1111 = vpop.xlane.xlu0 %1110
        %v1112 = vsel %vm466, %v1076, 0.0
        %1113 = vadd.xlane.f32.xlu0 %v1112
        %v1114 = vpop.xlane.xlu0 %1113
        %v1115 = vsel %vm466, %v1078, 0.0
        %1116 = vadd.xlane.f32.xlu0 %v1115
        %v1117 = vpop.xlane.xlu0 %1116
        %v1118 = vsel %vm466, %v1080, 0.0
        %1119 = vadd.xlane.f32.xlu0 %v1118
        %v1120 = vpop.xlane.xlu0 %1119
        %v1121 = vsel %vm466, %v1082, 0.0
        %1122 = vadd.xlane.f32.xlu0 %v1121
        %v1123 = vpop.xlane.xlu0 %1122
        %v1124 = vsel %vm466, %v1084, 0.0
        %1125 = vadd.xlane.f32.xlu0 %v1124
        %v1126 = vpop.xlane.xlu0 %1125
        %v1127 = vsel %vm466, %v1086, 0.0
        %1128 = vadd.xlane.f32.xlu0 %v1127
        %v1129 = vpop.xlane.xlu0 %1128
        %v1130 = vsel %vm466, %v1088, 0.0
        %1131 = vadd.xlane.f32.xlu0 %v1130
        %v1132 = vpop.xlane.xlu0 %1131
        %v1133 = vsel %vm466, %v1090, 0.0
        %1134 = vadd.xlane.f32.xlu0 %v1133
        %v1135 = vpop.xlane.xlu0 %1134
        %v1136 = vsel %vm466, %v1092, 0.0
        %1137 = vadd.xlane.f32.xlu0 %v1136
        %v1138 = vpop.xlane.xlu0 %1137
        %v1139 = vsel %vm466, %v1094, 0.0
        %1140 = vadd.xlane.f32.xlu0 %v1139
        %v1141 = vpop.xlane.xlu0 %1140
        %v1142 = vsel %vm466, %v1096, 0.0
        %1143 = vadd.xlane.f32.xlu0 %v1142
        %v1144 = vpop.xlane.xlu0 %1143
        %v1145 = vrcp.pop %v1099
        %v1146 = vrcp.pop %v1102
        %v1147 = vrcp.pop %v1105
        %v1148 = vrcp.pop %v1108
        %v1149 = vrcp.pop %v1111
        %v1150 = vrcp.pop %v1114
        %v1151 = vrcp.pop %v1117
        %v1152 = vrcp.pop %v1120
        %v1153 = vrcp.pop %v1123
        %v1154 = vrcp.pop %v1126
        %v1155 = vrcp.pop %v1129
        %v1156 = vrcp.pop %v1132
        %v1157 = vrcp.pop %v1135
        %v1158 = vrcp.pop %v1138
        %v1159 = vrcp.pop %v1141
        %v1160 = vrcp.pop %v1144
        %v1161 = vmul.f32 %v1066, %v1145
        %v1162 = vmul.f32 %v1068, %v1146
        %v1163 = vmul.f32 %v1070, %v1147
        %v1164 = vmul.f32 %v1072, %v1148
        %v1165 = vmul.f32 %v1074, %v1149
        %v1166 = vmul.f32 %v1076, %v1150
        %v1167 = vmul.f32 %v1078, %v1151
        %v1168 = vmul.f32 %v1080, %v1152
        %v1169 = vmul.f32 %v1082, %v1153
        %v1170 = vmul.f32 %v1084, %v1154
        %v1171 = vmul.f32 %v1086, %v1155
        %v1172 = vmul.f32 %v1088, %v1156
        %v1173 = vmul.f32 %v1090, %v1157
        %v1174 = vmul.f32 %v1092, %v1158
        %v1175 = vmul.f32 %v1094, %v1159
        %v1176 = vmul.f32 %v1096, %v1160
        %v1177 = vpack.c.bf16 %v1161, %v1161
        %v1178 = vpack.c.bf16 %v1162, %v1162
        %v1179 = vpack.c.bf16 %v1163, %v1163
        %v1180 = vpack.c.bf16 %v1164, %v1164
        %v1181 = vpack.c.bf16 %v1165, %v1165
        %v1182 = vpack.c.bf16 %v1166, %v1166
        %v1183 = vpack.c.bf16 %v1167, %v1167
        %v1184 = vpack.c.bf16 %v1168, %v1168
        %v1185 = vpack.c.bf16 %v1169, %v1169
        %v1186 = vpack.c.bf16 %v1170, %v1170
        %v1187 = vpack.c.bf16 %v1171, %v1171
        %v1188 = vpack.c.bf16 %v1172, %v1172
        %v1189 = vpack.c.bf16 %v1173, %v1173
        %v1190 = vpack.c.bf16 %v1174, %v1174
        %v1191 = vpack.c.bf16 %v1175, %v1175
        %v1192 = vpack.c.bf16 %v1176, %v1176
        %v1201 = vunpack.c.l.b16 %v1177
        %v1202 = vunpack.c.l.b16 %v1178
        %v1203 = vunpack.c.l.b16 %v1179
        %v1204 = vunpack.c.l.b16 %v1180
        %v1205 = vunpack.c.l.b16 %v1181
        %v1206 = vunpack.c.l.b16 %v1182
        %v1207 = vunpack.c.l.b16 %v1183
        %v1208 = vunpack.c.l.b16 %v1184
        %v1209 = vpack.c.b16 %v1202, %v1201
        %v1210 = vpack.c.b16 %v1204, %v1203
        %v1211 = vpack.c.b16 %v1206, %v1205
        %v1212 = vpack.c.b16 %v1208, %v1207
        %v1221 = vunpack.c.l.b16 %v742
        %v1222 = vunpack.c.l.b16 %v743
        %v1223 = vunpack.c.l.b16 %v744
        %v1224 = vunpack.c.l.b16 %v745
        %v1225 = vunpack.c.l.b16 %v746
        %v1226 = vunpack.c.l.b16 %v747
        %v1227 = vunpack.c.l.b16 %v748
        %v1228 = vunpack.c.l.b16 %v749
        %v1229 = vpack.c.b16 %v1222, %v1221
        %v1230 = vpack.c.b16 %v1224, %v1223
        %v1231 = vpack.c.b16 %v1226, %v1225
        %v1232 = vpack.c.b16 %v1228, %v1227
        %v1238 = vsel %vm466, %v1209, 0
        %v1241 = vsel %vm466, %v1210, 0
        %v1244 = vsel %vm466, %v1211, 0
        %v1247 = vsel %vm466, %v1212, 0
        %1249 = vmatpush.bf16.msra.mxu0 0
        %1250 = vmatpush.bf16.msra.mxu0 0
        %1251 = vmatpush.bf16.msra.mxu0 0
        %1252 = vmatpush.bf16.msra.mxu0 0
        %1253 = vmatpush.bf16.msra.mxu0 %v1232
        %1254 = vmatpush.bf16.msra.mxu0 %v1231
        %1255 = vmatpush.bf16.msra.mxu0 %v1230
        %1256 = vmatpush.bf16.msra.mxu0 %v1229
        %1257 = vmatmul.bf16.gmra.mxu0 %v1238
        %v1258 = vpop.f32.mrf.mxu0
        %v1259 = vadd.f32 0.0, %v1258
        %v1260 = vpop.f32.mrf.mxu0
        %v1261 = vadd.f32 0.0, %v1260
        %1262 = vmatmul.bf16.gmra.mxu0 %v1241
        %v1263 = vpop.f32.mrf.mxu0
        %v1264 = vadd.f32 0.0, %v1263
        %v1265 = vpop.f32.mrf.mxu0
        %v1266 = vadd.f32 0.0, %v1265
        %1267 = vmatmul.bf16.gmra.mxu0 %v1244
        %v1268 = vpop.f32.mrf.mxu0
        %v1269 = vadd.f32 0.0, %v1268
        %v1270 = vpop.f32.mrf.mxu0
        %v1271 = vadd.f32 0.0, %v1270
        %1272 = vmatmul.bf16.gmra.mxu0 %v1247
        %v1273 = vpop.f32.mrf.mxu0
        %v1274 = vadd.f32 0.0, %v1273
        %v1275 = vpop.f32.mrf.mxu0
        %v1276 = vadd.f32 0.0, %v1275
        %1277 = vdwg.mxu0
        %v1286 = vunpack.c.l.b16 %v1185
        %v1287 = vunpack.c.l.b16 %v1186
        %v1288 = vunpack.c.l.b16 %v1187
        %v1289 = vunpack.c.l.b16 %v1188
        %v1290 = vunpack.c.l.b16 %v1189
        %v1291 = vunpack.c.l.b16 %v1190
        %v1292 = vunpack.c.l.b16 %v1191
        %v1293 = vunpack.c.l.b16 %v1192
        %v1294 = vpack.c.b16 %v1287, %v1286
        %v1295 = vpack.c.b16 %v1289, %v1288
        %v1296 = vpack.c.b16 %v1291, %v1290
        %v1297 = vpack.c.b16 %v1293, %v1292
        %v1306 = vunpack.c.l.b16 %v750
        %v1307 = vunpack.c.l.b16 %v751
        %v1308 = vunpack.c.l.b16 %v752
        %v1309 = vunpack.c.l.b16 %v753
        %v1310 = vunpack.c.l.b16 %v754
        %v1311 = vunpack.c.l.b16 %v755
        %v1312 = vunpack.c.l.b16 %v756
        %v1313 = vunpack.c.l.b16 %v757
        %v1314 = vpack.c.b16 %v1307, %v1306
        %v1315 = vpack.c.b16 %v1309, %v1308
        %v1316 = vpack.c.b16 %v1311, %v1310
        %v1317 = vpack.c.b16 %v1313, %v1312
        %v1323 = vsel %vm466, %v1294, 0
        %v1326 = vsel %vm466, %v1295, 0
        %v1329 = vsel %vm466, %v1296, 0
        %v1332 = vsel %vm466, %v1297, 0
        %1334 = vmatpush.bf16.msra.mxu0 0
        %1335 = vmatpush.bf16.msra.mxu0 0
        %1336 = vmatpush.bf16.msra.mxu0 0
        %1337 = vmatpush.bf16.msra.mxu0 0
        %1338 = vmatpush.bf16.msra.mxu0 %v1317
        %1339 = vmatpush.bf16.msra.mxu0 %v1316
        %1340 = vmatpush.bf16.msra.mxu0 %v1315
        %1341 = vmatpush.bf16.msra.mxu0 %v1314
        %1342 = vmatmul.bf16.gmra.mxu0 %v1323
        %v1343 = vpop.f32.mrf.mxu0
        %v1344 = vadd.f32 0.0, %v1343
        %v1345 = vpop.f32.mrf.mxu0
        %v1346 = vadd.f32 0.0, %v1345
        %1347 = vmatmul.bf16.gmra.mxu0 %v1326
        %v1348 = vpop.f32.mrf.mxu0
        %v1349 = vadd.f32 0.0, %v1348
        %v1350 = vpop.f32.mrf.mxu0
        %v1351 = vadd.f32 0.0, %v1350
        %1352 = vmatmul.bf16.gmra.mxu0 %v1329
        %v1353 = vpop.f32.mrf.mxu0
        %v1354 = vadd.f32 0.0, %v1353
        %v1355 = vpop.f32.mrf.mxu0
        %v1356 = vadd.f32 0.0, %v1355
        %1357 = vmatmul.bf16.gmra.mxu0 %v1332
        %v1358 = vpop.f32.mrf.mxu0
        %v1359 = vadd.f32 0.0, %v1358
        %v1360 = vpop.f32.mrf.mxu0
        %v1361 = vadd.f32 0.0, %v1360
        %1362 = vdwg.mxu0
        %v1363 = vpack.c.bf16 %v1259, %v1259
        %v1364 = vpack.c.bf16 %v1261, %v1261
        %v1365 = vpack.c.bf16 %v1264, %v1264
        %v1366 = vpack.c.bf16 %v1266, %v1266
        %v1367 = vpack.c.bf16 %v1269, %v1269
        %v1368 = vpack.c.bf16 %v1271, %v1271
        %v1369 = vpack.c.bf16 %v1274, %v1274
        %v1370 = vpack.c.bf16 %v1276, %v1276
        %v1371 = vpack.c.bf16 %v1344, %v1344
        %v1372 = vpack.c.bf16 %v1346, %v1346
        %v1373 = vpack.c.bf16 %v1349, %v1349
        %v1374 = vpack.c.bf16 %v1351, %v1351
        %v1375 = vpack.c.bf16 %v1354, %v1354
        %v1376 = vpack.c.bf16 %v1356, %v1356
        %v1377 = vpack.c.bf16 %v1359, %v1359
        %v1378 = vpack.c.bf16 %v1361, %v1361
        %vm1379 = vcmask 257024
        %1380 = vst.msk [vmem:[#allocation2] sm:$0xf] %vm1379, %v1363
        %1381 = vst.msk [vmem:[#allocation2 + $0x4] sm:$0xf] %vm1379, %v1364
        %1382 = vst.msk [vmem:[#allocation2 + $0x8] sm:$0xf] %vm1379, %v1365
        %1383 = vst.msk [vmem:[#allocation2 + $0xc] sm:$0xf] %vm1379, %v1366
        %1384 = vst.msk [vmem:[#allocation2 + $0x10] sm:$0xf] %vm1379, %v1367
        %1385 = vst.msk [vmem:[#allocation2 + $0x14] sm:$0xf] %vm1379, %v1368
        %1386 = vst.msk [vmem:[#allocation2 + $0x18] sm:$0xf] %vm1379, %v1369
        %1387 = vst.msk [vmem:[#allocation2 + $0x1c] sm:$0xf] %vm1379, %v1370
        %1388 = vst.msk [vmem:[#allocation2 + $0x20] sm:$0xf] %vm1379, %v1371
        %1389 = vst.msk [vmem:[#allocation2 + $0x24] sm:$0xf] %vm1379, %v1372
        %1390 = vst.msk [vmem:[#allocation2 + $0x28] sm:$0xf] %vm1379, %v1373
        %1391 = vst.msk [vmem:[#allocation2 + $0x2c] sm:$0xf] %vm1379, %v1374
        %1392 = vst.msk [vmem:[#allocation2 + $0x30] sm:$0xf] %vm1379, %v1375
        %1393 = vst.msk [vmem:[#allocation2 + $0x34] sm:$0xf] %vm1379, %v1376
        %1394 = vst.msk [vmem:[#allocation2 + $0x38] sm:$0xf] %vm1379, %v1377
        %1395 = vst.msk [vmem:[#allocation2 + $0x3c] sm:$0xf] %vm1379, %v1378
        %1396 = vrot.lane.b32.xlu0 %v790, 96
        %v1397 = vpop.permute.xlu0 %1396
        %1398 = vrot.lane.b32.xlu0 %v791, 96
        %v1399 = vpop.permute.xlu0 %1398
        %1400 = vrot.lane.b32.xlu0 %v792, 96
        %v1401 = vpop.permute.xlu0 %1400
        %1402 = vrot.lane.b32.xlu0 %v793, 96
        %v1403 = vpop.permute.xlu0 %1402
        %1404 = vrot.lane.b32.xlu0 %v810, 96
        %v1405 = vpop.permute.xlu0 %1404
        %1406 = vrot.lane.b32.xlu0 %v811, 96
        %v1407 = vpop.permute.xlu0 %1406
        %1408 = vrot.lane.b32.xlu0 %v812, 96
        %v1409 = vpop.permute.xlu0 %1408
        %1410 = vrot.lane.b32.xlu0 %v813, 96
        %v1411 = vpop.permute.xlu0 %1410
        %v1413 = vsel %vm814, %v1397, 0
        %v1416 = vsel %vm814, %v1399, 0
        %v1419 = vsel %vm814, %v1401, 0
        %v1422 = vsel %vm814, %v1403, 0
        %v1425 = vsel %vm814, %v1405, 0
        %v1428 = vsel %vm814, %v1407, 0
        %v1431 = vsel %vm814, %v1409, 0
        %v1434 = vsel %vm814, %v1411, 0
        %1436 = vmatpush.bf16.xpose.msra.mxu0 0
        %1437 = vmatpush.bf16.xpose.msra.mxu0 0
        %1438 = vmatpush.bf16.xpose.msra.mxu0 0
        %1439 = vmatpush.bf16.xpose.msra.mxu0 0
        %1440 = vmatpush.bf16.xpose.msra.mxu0 %v1434
        %1441 = vmatpush.bf16.xpose.msra.mxu0 %v1431
        %1442 = vmatpush.bf16.xpose.msra.mxu0 %v1428
        %1443 = vmatpush.bf16.xpose.msra.mxu0 %v1425
        %1444 = vmatmul.bf16.gmra.mxu0 %v1413
        %v1445 = vpop.f32.mrf.mxu0
        %v1446 = vadd.f32 0.0, %v1445
        %v1447 = vpop.f32.mrf.mxu0
        %v1448 = vadd.f32 0.0, %v1447
        %1449 = vmatmul.bf16.gmra.mxu0 %v1416
        %v1450 = vpop.f32.mrf.mxu0
        %v1451 = vadd.f32 0.0, %v1450
        %v1452 = vpop.f32.mrf.mxu0
        %v1453 = vadd.f32 0.0, %v1452
        %1454 = vmatmul.bf16.gmra.mxu0 %v1419
        %v1455 = vpop.f32.mrf.mxu0
        %v1456 = vadd.f32 0.0, %v1455
        %v1457 = vpop.f32.mrf.mxu0
        %v1458 = vadd.f32 0.0, %v1457
        %1459 = vmatmul.bf16.gmra.mxu0 %v1422
        %v1460 = vpop.f32.mrf.mxu0
        %v1461 = vadd.f32 0.0, %v1460
        %v1462 = vpop.f32.mrf.mxu0
        %v1463 = vadd.f32 0.0, %v1462
        %1464 = vdwg.mxu0
        %1465 = vrot.lane.b32.xlu0 %v884, 96
        %v1466 = vpop.permute.xlu0 %1465
        %1467 = vrot.lane.b32.xlu0 %v885, 96
        %v1468 = vpop.permute.xlu0 %1467
        %1469 = vrot.lane.b32.xlu0 %v886, 96
        %v1470 = vpop.permute.xlu0 %1469
        %1471 = vrot.lane.b32.xlu0 %v887, 96
        %v1472 = vpop.permute.xlu0 %1471
        %1473 = vrot.lane.b32.xlu0 %v904, 96
        %v1474 = vpop.permute.xlu0 %1473
        %1475 = vrot.lane.b32.xlu0 %v905, 96
        %v1476 = vpop.permute.xlu0 %1475
        %1477 = vrot.lane.b32.xlu0 %v906, 96
        %v1478 = vpop.permute.xlu0 %1477
        %1479 = vrot.lane.b32.xlu0 %v907, 96
        %v1480 = vpop.permute.xlu0 %1479
        %v1482 = vsel %vm814, %v1466, 0
        %v1485 = vsel %vm814, %v1468, 0
        %v1488 = vsel %vm814, %v1470, 0
        %v1491 = vsel %vm814, %v1472, 0
        %v1494 = vsel %vm814, %v1474, 0
        %v1497 = vsel %vm814, %v1476, 0
        %v1500 = vsel %vm814, %v1478, 0
        %v1503 = vsel %vm814, %v1480, 0
        %1505 = vmatpush.bf16.xpose.msra.mxu0 0
        %1506 = vmatpush.bf16.xpose.msra.mxu0 0
        %1507 = vmatpush.bf16.xpose.msra.mxu0 0
        %1508 = vmatpush.bf16.xpose.msra.mxu0 0
        %1509 = vmatpush.bf16.xpose.msra.mxu0 %v1503
        %1510 = vmatpush.bf16.xpose.msra.mxu0 %v1500
        %1511 = vmatpush.bf16.xpose.msra.mxu0 %v1497
        %1512 = vmatpush.bf16.xpose.msra.mxu0 %v1494
        %1513 = vmatmul.bf16.gmra.mxu0 %v1482
        %v1514 = vpop.f32.mrf.mxu0
        %v1515 = vadd.f32 0.0, %v1514
        %v1516 = vpop.f32.mrf.mxu0
        %v1517 = vadd.f32 0.0, %v1516
        %1518 = vmatmul.bf16.gmra.mxu0 %v1485
        %v1519 = vpop.f32.mrf.mxu0
        %v1520 = vadd.f32 0.0, %v1519
        %v1521 = vpop.f32.mrf.mxu0
        %v1522 = vadd.f32 0.0, %v1521
        %1523 = vmatmul.bf16.gmra.mxu0 %v1488
        %v1524 = vpop.f32.mrf.mxu0
        %v1525 = vadd.f32 0.0, %v1524
        %v1526 = vpop.f32.mrf.mxu0
        %v1527 = vadd.f32 0.0, %v1526
        %1528 = vmatmul.bf16.gmra.mxu0 %v1491
        %v1529 = vpop.f32.mrf.mxu0
        %v1530 = vadd.f32 0.0, %v1529
        %v1531 = vpop.f32.mrf.mxu0
        %v1532 = vadd.f32 0.0, %v1531
        %1533 = vdwg.mxu0
        %s1534 = scalar_lea.vmem %s7, 64
        %v1535 = vld [vmem:[%s1534] sm:$0xff]
        %v1536 = vld [vmem:[%s1534 + $0x8] sm:$0xff]
        %v1537 = vld [vmem:[%s1534 + $0x10] sm:$0xff]
        %v1538 = vld [vmem:[%s1534 + $0x18] sm:$0xff]
        %v1539 = vld [vmem:[%s1534 + $0x20] sm:$0xff]
        %v1540 = vld [vmem:[%s1534 + $0x28] sm:$0xff]
        %v1541 = vld [vmem:[%s1534 + $0x30] sm:$0xff]
        %v1542 = vld [vmem:[%s1534 + $0x38] sm:$0xff]
        %v1543 = vadd.f32 %v1535, %v758
        %v1544 = vadd.f32 %v1536, %v759
        %v1545 = vadd.f32 %v1537, %v760
        %v1546 = vadd.f32 %v1538, %v761
        %v1547 = vadd.f32 %v1539, %v762
        %v1548 = vadd.f32 %v1540, %v763
        %v1549 = vadd.f32 %v1541, %v764
        %v1550 = vadd.f32 %v1542, %v765
        %v1551 = vadd.f32 %v1535, %v766
        %v1552 = vadd.f32 %v1536, %v767
        %v1553 = vadd.f32 %v1537, %v768
        %v1554 = vadd.f32 %v1538, %v769
        %v1555 = vadd.f32 %v1539, %v770
        %v1556 = vadd.f32 %v1540, %v771
        %v1557 = vadd.f32 %v1541, %v772
        %v1558 = vadd.f32 %v1542, %v773
        %v1559 = vadd.f32 %v1446, %v1543
        %v1560 = vadd.f32 %v1448, %v1544
        %v1561 = vadd.f32 %v1451, %v1545
        %v1562 = vadd.f32 %v1453, %v1546
        %v1563 = vadd.f32 %v1456, %v1547
        %v1564 = vadd.f32 %v1458, %v1548
        %v1565 = vadd.f32 %v1461, %v1549
        %v1566 = vadd.f32 %v1463, %v1550
        %v1567 = vadd.f32 %v1515, %v1551
        %v1568 = vadd.f32 %v1517, %v1552
        %v1569 = vadd.f32 %v1520, %v1553
        %v1570 = vadd.f32 %v1522, %v1554
        %v1571 = vadd.f32 %v1525, %v1555
        %v1572 = vadd.f32 %v1527, %v1556
        %v1573 = vadd.f32 %v1530, %v1557
        %v1574 = vadd.f32 %v1532, %v1558
        %v1575 = vsel %vm466, %v1559, -inf
        %1576 = vmax.xlane.f32.xlu0 %v1575
        %v1577 = vpop.xlane.xlu0 %1576
        %v1578 = vsel %vm466, %v1560, -inf
        %1579 = vmax.xlane.f32.xlu0 %v1578
        %v1580 = vpop.xlane.xlu0 %1579
        %v1581 = vsel %vm466, %v1561, -inf
        %1582 = vmax.xlane.f32.xlu0 %v1581
        %v1583 = vpop.xlane.xlu0 %1582
        %v1584 = vsel %vm466, %v1562, -inf
        %1585 = vmax.xlane.f32.xlu0 %v1584
        %v1586 = vpop.xlane.xlu0 %1585
        %v1587 = vsel %vm466, %v1563, -inf
        %1588 = vmax.xlane.f32.xlu0 %v1587
        %v1589 = vpop.xlane.xlu0 %1588
        %v1590 = vsel %vm466, %v1564, -inf
        %1591 = vmax.xlane.f32.xlu0 %v1590
        %v1592 = vpop.xlane.xlu0 %1591
        %v1593 = vsel %vm466, %v1565, -inf
        %1594 = vmax.xlane.f32.xlu0 %v1593
        %v1595 = vpop.xlane.xlu0 %1594
        %v1596 = vsel %vm466, %v1566, -inf
        %1597 = vmax.xlane.f32.xlu0 %v1596
        %v1598 = vpop.xlane.xlu0 %1597
        %v1599 = vsel %vm466, %v1567, -inf
        %1600 = vmax.xlane.f32.xlu0 %v1599
        %v1601 = vpop.xlane.xlu0 %1600
        %v1602 = vsel %vm466, %v1568, -inf
        %1603 = vmax.xlane.f32.xlu0 %v1602
        %v1604 = vpop.xlane.xlu0 %1603
        %v1605 = vsel %vm466, %v1569, -inf
        %1606 = vmax.xlane.f32.xlu0 %v1605
        %v1607 = vpop.xlane.xlu0 %1606
        %v1608 = vsel %vm466, %v1570, -inf
        %1609 = vmax.xlane.f32.xlu0 %v1608
        %v1610 = vpop.xlane.xlu0 %1609
        %v1611 = vsel %vm466, %v1571, -inf
        %1612 = vmax.xlane.f32.xlu0 %v1611
        %v1613 = vpop.xlane.xlu0 %1612
        %v1614 = vsel %vm466, %v1572, -inf
        %1615 = vmax.xlane.f32.xlu0 %v1614
        %v1616 = vpop.xlane.xlu0 %1615
        %v1617 = vsel %vm466, %v1573, -inf
        %1618 = vmax.xlane.f32.xlu0 %v1617
        %v1619 = vpop.xlane.xlu0 %1618
        %v1620 = vsel %vm466, %v1574, -inf
        %1621 = vmax.xlane.f32.xlu0 %v1620
        %v1622 = vpop.xlane.xlu0 %1621
        %v1623 = vsub.f32 %v1559, %v1577
        %v1624 = vsub.f32 %v1560, %v1580
        %v1625 = vsub.f32 %v1561, %v1583
        %v1626 = vsub.f32 %v1562, %v1586
        %v1627 = vsub.f32 %v1563, %v1589
        %v1628 = vsub.f32 %v1564, %v1592
        %v1629 = vsub.f32 %v1565, %v1595
        %v1630 = vsub.f32 %v1566, %v1598
        %v1631 = vsub.f32 %v1567, %v1601
        %v1632 = vsub.f32 %v1568, %v1604
        %v1633 = vsub.f32 %v1569, %v1607
        %v1634 = vsub.f32 %v1570, %v1610
        %v1635 = vsub.f32 %v1571, %v1613
        %v1636 = vsub.f32 %v1572, %v1616
        %v1637 = vsub.f32 %v1573, %v1619
        %v1638 = vsub.f32 %v1574, %v1622
        %v1639 = vmul.f32 %v1623, 1.442695
        %v1640 = vpow.pop %v1639
        %v1641 = vmul.f32 %v1624, 1.442695
        %v1642 = vpow.pop %v1641
        %v1643 = vmul.f32 %v1625, 1.442695
        %v1644 = vpow.pop %v1643
        %v1645 = vmul.f32 %v1626, 1.442695
        %v1646 = vpow.pop %v1645
        %v1647 = vmul.f32 %v1627, 1.442695
        %v1648 = vpow.pop %v1647
        %v1649 = vmul.f32 %v1628, 1.442695
        %v1650 = vpow.pop %v1649
        %v1651 = vmul.f32 %v1629, 1.442695
        %v1652 = vpow.pop %v1651
        %v1653 = vmul.f32 %v1630, 1.442695
        %v1654 = vpow.pop %v1653
        %v1655 = vmul.f32 %v1631, 1.442695
        %v1656 = vpow.pop %v1655
        %v1657 = vmul.f32 %v1632, 1.442695
        %v1658 = vpow.pop %v1657
        %v1659 = vmul.f32 %v1633, 1.442695
        %v1660 = vpow.pop %v1659
        %v1661 = vmul.f32 %v1634, 1.442695
        %v1662 = vpow.pop %v1661
        %v1663 = vmul.f32 %v1635, 1.442695
        %v1664 = vpow.pop %v1663
        %v1665 = vmul.f32 %v1636, 1.442695
        %v1666 = vpow.pop %v1665
        %v1667 = vmul.f32 %v1637, 1.442695
        %v1668 = vpow.pop %v1667
        %v1669 = vmul.f32 %v1638, 1.442695
        %v1670 = vpow.pop %v1669
        %v1671 = vsel %vm466, %v1640, 0.0
        %1672 = vadd.xlane.f32.xlu0 %v1671
        %v1673 = vpop.xlane.xlu0 %1672
        %v1674 = vsel %vm466, %v1642, 0.0
        %1675 = vadd.xlane.f32.xlu0 %v1674
        %v1676 = vpop.xlane.xlu0 %1675
        %v1677 = vsel %vm466, %v1644, 0.0
        %1678 = vadd.xlane.f32.xlu0 %v1677
        %v1679 = vpop.xlane.xlu0 %1678
        %v1680 = vsel %vm466, %v1646, 0.0
        %1681 = vadd.xlane.f32.xlu0 %v1680
        %v1682 = vpop.xlane.xlu0 %1681
        %v1683 = vsel %vm466, %v1648, 0.0
        %1684 = vadd.xlane.f32.xlu0 %v1683
        %v1685 = vpop.xlane.xlu0 %1684
        %v1686 = vsel %vm466, %v1650, 0.0
        %1687 = vadd.xlane.f32.xlu0 %v1686
        %v1688 = vpop.xlane.xlu0 %1687
        %v1689 = vsel %vm466, %v1652, 0.0
        %1690 = vadd.xlane.f32.xlu0 %v1689
        %v1691 = vpop.xlane.xlu0 %1690
        %v1692 = vsel %vm466, %v1654, 0.0
        %1693 = vadd.xlane.f32.xlu0 %v1692
        %v1694 = vpop.xlane.xlu0 %1693
        %v1695 = vsel %vm466, %v1656, 0.0
        %1696 = vadd.xlane.f32.xlu0 %v1695
        %v1697 = vpop.xlane.xlu0 %1696
        %v1698 = vsel %vm466, %v1658, 0.0
        %1699 = vadd.xlane.f32.xlu0 %v1698
        %v1700 = vpop.xlane.xlu0 %1699
        %v1701 = vsel %vm466, %v1660, 0.0
        %1702 = vadd.xlane.f32.xlu0 %v1701
        %v1703 = vpop.xlane.xlu0 %1702
        %v1704 = vsel %vm466, %v1662, 0.0
        %1705 = vadd.xlane.f32.xlu0 %v1704
        %v1706 = vpop.xlane.xlu0 %1705
        %v1707 = vsel %vm466, %v1664, 0.0
        %1708 = vadd.xlane.f32.xlu0 %v1707
        %v1709 = vpop.xlane.xlu0 %1708
        %v1710 = vsel %vm466, %v1666, 0.0
        %1711 = vadd.xlane.f32.xlu0 %v1710
        %v1712 = vpop.xlane.xlu0 %1711
        %v1713 = vsel %vm466, %v1668, 0.0
        %1714 = vadd.xlane.f32.xlu0 %v1713
        %v1715 = vpop.xlane.xlu0 %1714
        %v1716 = vsel %vm466, %v1670, 0.0
        %1717 = vadd.xlane.f32.xlu0 %v1716
        %v1718 = vpop.xlane.xlu0 %1717
        %v1719 = vrcp.pop %v1673
        %v1720 = vrcp.pop %v1676
        %v1721 = vrcp.pop %v1679
        %v1722 = vrcp.pop %v1682
        %v1723 = vrcp.pop %v1685
        %v1724 = vrcp.pop %v1688
        %v1725 = vrcp.pop %v1691
        %v1726 = vrcp.pop %v1694
        %v1727 = vrcp.pop %v1697
        %v1728 = vrcp.pop %v1700
        %v1729 = vrcp.pop %v1703
        %v1730 = vrcp.pop %v1706
        %v1731 = vrcp.pop %v1709
        %v1732 = vrcp.pop %v1712
        %v1733 = vrcp.pop %v1715
        %v1734 = vrcp.pop %v1718
        %v1735 = vmul.f32 %v1640, %v1719
        %v1736 = vmul.f32 %v1642, %v1720
        %v1737 = vmul.f32 %v1644, %v1721
        %v1738 = vmul.f32 %v1646, %v1722
        %v1739 = vmul.f32 %v1648, %v1723
        %v1740 = vmul.f32 %v1650, %v1724
        %v1741 = vmul.f32 %v1652, %v1725
        %v1742 = vmul.f32 %v1654, %v1726
        %v1743 = vmul.f32 %v1656, %v1727
        %v1744 = vmul.f32 %v1658, %v1728
        %v1745 = vmul.f32 %v1660, %v1729
        %v1746 = vmul.f32 %v1662, %v1730
        %v1747 = vmul.f32 %v1664, %v1731
        %v1748 = vmul.f32 %v1666, %v1732
        %v1749 = vmul.f32 %v1668, %v1733
        %v1750 = vmul.f32 %v1670, %v1734
        %v1751 = vpack.c.bf16 %v1735, %v1735
        %v1752 = vpack.c.bf16 %v1736, %v1736
        %v1753 = vpack.c.bf16 %v1737, %v1737
        %v1754 = vpack.c.bf16 %v1738, %v1738
        %v1755 = vpack.c.bf16 %v1739, %v1739
        %v1756 = vpack.c.bf16 %v1740, %v1740
        %v1757 = vpack.c.bf16 %v1741, %v1741
        %v1758 = vpack.c.bf16 %v1742, %v1742
        %v1759 = vpack.c.bf16 %v1743, %v1743
        %v1760 = vpack.c.bf16 %v1744, %v1744
        %v1761 = vpack.c.bf16 %v1745, %v1745
        %v1762 = vpack.c.bf16 %v1746, %v1746
        %v1763 = vpack.c.bf16 %v1747, %v1747
        %v1764 = vpack.c.bf16 %v1748, %v1748
        %v1765 = vpack.c.bf16 %v1749, %v1749
        %v1766 = vpack.c.bf16 %v1750, %v1750
        %v1775 = vunpack.c.l.b16 %v1751
        %v1776 = vunpack.c.l.b16 %v1752
        %v1777 = vunpack.c.l.b16 %v1753
        %v1778 = vunpack.c.l.b16 %v1754
        %v1779 = vunpack.c.l.b16 %v1755
        %v1780 = vunpack.c.l.b16 %v1756
        %v1781 = vunpack.c.l.b16 %v1757
        %v1782 = vunpack.c.l.b16 %v1758
        %v1783 = vpack.c.b16 %v1776, %v1775
        %v1784 = vpack.c.b16 %v1778, %v1777
        %v1785 = vpack.c.b16 %v1780, %v1779
        %v1786 = vpack.c.b16 %v1782, %v1781
        %1787 = vrot.lane.b32.xlu0 %v1229, 96
        %v1788 = vpop.permute.xlu0 %1787
        %1789 = vrot.lane.b32.xlu0 %v1230, 96
        %v1790 = vpop.permute.xlu0 %1789
        %1791 = vrot.lane.b32.xlu0 %v1231, 96
        %v1792 = vpop.permute.xlu0 %1791
        %1793 = vrot.lane.b32.xlu0 %v1232, 96
        %v1794 = vpop.permute.xlu0 %1793
        %v1800 = vsel %vm466, %v1783, 0
        %v1803 = vsel %vm466, %v1784, 0
        %v1806 = vsel %vm466, %v1785, 0
        %v1809 = vsel %vm466, %v1786, 0
        %1811 = vmatpush.bf16.msra.mxu0 0
        %1812 = vmatpush.bf16.msra.mxu0 0
        %1813 = vmatpush.bf16.msra.mxu0 0
        %1814 = vmatpush.bf16.msra.mxu0 0
        %1815 = vmatpush.bf16.msra.mxu0 %v1794
        %1816 = vmatpush.bf16.msra.mxu0 %v1792
        %1817 = vmatpush.bf16.msra.mxu0 %v1790
        %1818 = vmatpush.bf16.msra.mxu0 %v1788
        %1819 = vmatmul.bf16.gmra.mxu0 %v1800
        %v1820 = vpop.f32.mrf.mxu0
        %v1821 = vadd.f32 0.0, %v1820
        %v1822 = vpop.f32.mrf.mxu0
        %v1823 = vadd.f32 0.0, %v1822
        %1824 = vmatmul.bf16.gmra.mxu0 %v1803
        %v1825 = vpop.f32.mrf.mxu0
        %v1826 = vadd.f32 0.0, %v1825
        %v1827 = vpop.f32.mrf.mxu0
        %v1828 = vadd.f32 0.0, %v1827
        %1829 = vmatmul.bf16.gmra.mxu0 %v1806
        %v1830 = vpop.f32.mrf.mxu0
        %v1831 = vadd.f32 0.0, %v1830
        %v1832 = vpop.f32.mrf.mxu0
        %v1833 = vadd.f32 0.0, %v1832
        %1834 = vmatmul.bf16.gmra.mxu0 %v1809
        %v1835 = vpop.f32.mrf.mxu0
        %v1836 = vadd.f32 0.0, %v1835
        %v1837 = vpop.f32.mrf.mxu0
        %v1838 = vadd.f32 0.0, %v1837
        %1839 = vdwg.mxu0
        %v1848 = vunpack.c.l.b16 %v1759
        %v1849 = vunpack.c.l.b16 %v1760
        %v1850 = vunpack.c.l.b16 %v1761
        %v1851 = vunpack.c.l.b16 %v1762
        %v1852 = vunpack.c.l.b16 %v1763
        %v1853 = vunpack.c.l.b16 %v1764
        %v1854 = vunpack.c.l.b16 %v1765
        %v1855 = vunpack.c.l.b16 %v1766
        %v1856 = vpack.c.b16 %v1849, %v1848
        %v1857 = vpack.c.b16 %v1851, %v1850
        %v1858 = vpack.c.b16 %v1853, %v1852
        %v1859 = vpack.c.b16 %v1855, %v1854
        %1860 = vrot.lane.b32.xlu0 %v1314, 96
        %v1861 = vpop.permute.xlu0 %1860
        %1862 = vrot.lane.b32.xlu0 %v1315, 96
        %v1863 = vpop.permute.xlu0 %1862
        %1864 = vrot.lane.b32.xlu0 %v1316, 96
        %v1865 = vpop.permute.xlu0 %1864
        %1866 = vrot.lane.b32.xlu0 %v1317, 96
        %v1867 = vpop.permute.xlu0 %1866
        %v1873 = vsel %vm466, %v1856, 0
        %v1876 = vsel %vm466, %v1857, 0
        %v1879 = vsel %vm466, %v1858, 0
        %v1882 = vsel %vm466, %v1859, 0
        %1884 = vmatpush.bf16.msra.mxu0 0
        %1885 = vmatpush.bf16.msra.mxu0 0
        %1886 = vmatpush.bf16.msra.mxu0 0
        %1887 = vmatpush.bf16.msra.mxu0 0
        %1888 = vmatpush.bf16.msra.mxu0 %v1867
        %1889 = vmatpush.bf16.msra.mxu0 %v1865
        %1890 = vmatpush.bf16.msra.mxu0 %v1863
        %1891 = vmatpush.bf16.msra.mxu0 %v1861
        %1892 = vmatmul.bf16.gmra.mxu0 %v1873
        %v1893 = vpop.f32.mrf.mxu0
        %v1894 = vadd.f32 0.0, %v1893
        %v1895 = vpop.f32.mrf.mxu0
        %v1896 = vadd.f32 0.0, %v1895
        %1897 = vmatmul.bf16.gmra.mxu0 %v1876
        %v1898 = vpop.f32.mrf.mxu0
        %v1899 = vadd.f32 0.0, %v1898
        %v1900 = vpop.f32.mrf.mxu0
        %v1901 = vadd.f32 0.0, %v1900
        %1902 = vmatmul.bf16.gmra.mxu0 %v1879
        %v1903 = vpop.f32.mrf.mxu0
        %v1904 = vadd.f32 0.0, %v1903
        %v1905 = vpop.f32.mrf.mxu0
        %v1906 = vadd.f32 0.0, %v1905
        %1907 = vmatmul.bf16.gmra.mxu0 %v1882
        %v1908 = vpop.f32.mrf.mxu0
        %v1909 = vadd.f32 0.0, %v1908
        %v1910 = vpop.f32.mrf.mxu0
        %v1911 = vadd.f32 0.0, %v1910
        %1912 = vdwg.mxu0
        %v1913 = vpack.c.bf16 %v1821, %v1821
        %v1914 = vpack.c.bf16 %v1823, %v1823
        %v1915 = vpack.c.bf16 %v1826, %v1826
        %v1916 = vpack.c.bf16 %v1828, %v1828
        %v1917 = vpack.c.bf16 %v1831, %v1831
        %v1918 = vpack.c.bf16 %v1833, %v1833
        %v1919 = vpack.c.bf16 %v1836, %v1836
        %v1920 = vpack.c.bf16 %v1838, %v1838
        %v1921 = vpack.c.bf16 %v1894, %v1894
        %v1922 = vpack.c.bf16 %v1896, %v1896
        %v1923 = vpack.c.bf16 %v1899, %v1899
        %v1924 = vpack.c.bf16 %v1901, %v1901
        %v1925 = vpack.c.bf16 %v1904, %v1904
        %v1926 = vpack.c.bf16 %v1906, %v1906
        %v1927 = vpack.c.bf16 %v1909, %v1909
        %v1928 = vpack.c.bf16 %v1911, %v1911
        %1945 = vrot.lane.b32.xlu0 %v1913, 32
        %v1946 = vpop.permute.xlu0 %1945
        %1947 = vrot.lane.b32.xlu0 %v1914, 32
        %v1948 = vpop.permute.xlu0 %1947
        %1949 = vrot.lane.b32.xlu0 %v1915, 32
        %v1950 = vpop.permute.xlu0 %1949
        %1951 = vrot.lane.b32.xlu0 %v1916, 32
        %v1952 = vpop.permute.xlu0 %1951
        %1953 = vrot.lane.b32.xlu0 %v1917, 32
        %v1954 = vpop.permute.xlu0 %1953
        %1955 = vrot.lane.b32.xlu0 %v1918, 32
        %v1956 = vpop.permute.xlu0 %1955
        %1957 = vrot.lane.b32.xlu0 %v1919, 32
        %v1958 = vpop.permute.xlu0 %1957
        %1959 = vrot.lane.b32.xlu0 %v1920, 32
        %v1960 = vpop.permute.xlu0 %1959
        %1961 = vrot.lane.b32.xlu0 %v1921, 32
        %v1962 = vpop.permute.xlu0 %1961
        %1963 = vrot.lane.b32.xlu0 %v1922, 32
        %v1964 = vpop.permute.xlu0 %1963
        %1965 = vrot.lane.b32.xlu0 %v1923, 32
        %v1966 = vpop.permute.xlu0 %1965
        %1967 = vrot.lane.b32.xlu0 %v1924, 32
        %v1968 = vpop.permute.xlu0 %1967
        %1969 = vrot.lane.b32.xlu0 %v1925, 32
        %v1970 = vpop.permute.xlu0 %1969
        %1971 = vrot.lane.b32.xlu0 %v1926, 32
        %v1972 = vpop.permute.xlu0 %1971
        %1973 = vrot.lane.b32.xlu0 %v1927, 32
        %v1974 = vpop.permute.xlu0 %1973
        %1975 = vrot.lane.b32.xlu0 %v1928, 32
        %v1976 = vpop.permute.xlu0 %1975
        %vm1993 = vcmask 519424
        %1994 = vst.msk [vmem:[#allocation2] sm:$0xf] %vm1993, %v1946
        %1995 = vst.msk [vmem:[#allocation2 + $0x4] sm:$0xf] %vm1993, %v1948
        %1996 = vst.msk [vmem:[#allocation2 + $0x8] sm:$0xf] %vm1993, %v1950
        %1997 = vst.msk [vmem:[#allocation2 + $0xc] sm:$0xf] %vm1993, %v1952
        %1998 = vst.msk [vmem:[#allocation2 + $0x10] sm:$0xf] %vm1993, %v1954
        %1999 = vst.msk [vmem:[#allocation2 + $0x14] sm:$0xf] %vm1993, %v1956
        %2000 = vst.msk [vmem:[#allocation2 + $0x18] sm:$0xf] %vm1993, %v1958
        %2001 = vst.msk [vmem:[#allocation2 + $0x1c] sm:$0xf] %vm1993, %v1960
        %2002 = vst.msk [vmem:[#allocation2 + $0x20] sm:$0xf] %vm1993, %v1962
        %2003 = vst.msk [vmem:[#allocation2 + $0x24] sm:$0xf] %vm1993, %v1964
        %2004 = vst.msk [vmem:[#allocation2 + $0x28] sm:$0xf] %vm1993, %v1966
        %2005 = vst.msk [vmem:[#allocation2 + $0x2c] sm:$0xf] %vm1993, %v1968
        %2006 = vst.msk [vmem:[#allocation2 + $0x30] sm:$0xf] %vm1993, %v1970
        %2007 = vst.msk [vmem:[#allocation2 + $0x34] sm:$0xf] %vm1993, %v1972
        %2008 = vst.msk [vmem:[#allocation2 + $0x38] sm:$0xf] %vm1993, %v1974
        %2009 = vst.msk [vmem:[#allocation2 + $0x3c] sm:$0xf] %vm1993, %v1976
        %v2010 = vld [vmem:[#allocation2] sm:$0xf]
        %v2011 = vld [vmem:[#allocation2 + $0x4] sm:$0xf]
        %v2012 = vld [vmem:[#allocation2 + $0x8] sm:$0xf]
        %v2013 = vld [vmem:[#allocation2 + $0xc] sm:$0xf]
        %v2014 = vld [vmem:[#allocation2 + $0x10] sm:$0xf]
        %v2015 = vld [vmem:[#allocation2 + $0x14] sm:$0xf]
        %v2016 = vld [vmem:[#allocation2 + $0x18] sm:$0xf]
        %v2017 = vld [vmem:[#allocation2 + $0x1c] sm:$0xf]
        %v2018 = vld [vmem:[#allocation2 + $0x20] sm:$0xf]
        %v2019 = vld [vmem:[#allocation2 + $0x24] sm:$0xf]
        %v2020 = vld [vmem:[#allocation2 + $0x28] sm:$0xf]
        %v2021 = vld [vmem:[#allocation2 + $0x2c] sm:$0xf]
        %v2022 = vld [vmem:[#allocation2 + $0x30] sm:$0xf]
        %v2023 = vld [vmem:[#allocation2 + $0x34] sm:$0xf]
        %v2024 = vld [vmem:[#allocation2 + $0x38] sm:$0xf]
        %v2025 = vld [vmem:[#allocation2 + $0x3c] sm:$0xf]
        %v2026 = vld [vmem:[%s9] sm:$0xf]
        %v2027 = vld [vmem:[%s9 + $0x4] sm:$0xf]
        %v2028 = vld [vmem:[%s9 + $0x8] sm:$0xf]
        %v2029 = vld [vmem:[%s9 + $0xc] sm:$0xf]
        %v2030 = vld [vmem:[%s9 + $0x10] sm:$0xf]
        %v2031 = vld [vmem:[%s9 + $0x14] sm:$0xf]
        %v2032 = vld [vmem:[%s9 + $0x18] sm:$0xf]
        %v2033 = vld [vmem:[%s9 + $0x1c] sm:$0xf]
        %v2034 = vld [vmem:[%s10] sm:$0x1]
        %v2036 = vperm.slane %v2034, 0
        %v2054 = vunpack.c.l.b16 %v2010
        %v2055 = vunpack.c.l.b16 %v2011
        %v2056 = vunpack.c.l.b16 %v2012
        %v2057 = vunpack.c.l.b16 %v2013
        %v2058 = vunpack.c.l.b16 %v2014
        %v2059 = vunpack.c.l.b16 %v2015
        %v2060 = vunpack.c.l.b16 %v2016
        %v2061 = vunpack.c.l.b16 %v2017
        %v2062 = vunpack.c.l.b16 %v2018
        %v2063 = vunpack.c.l.b16 %v2019
        %v2064 = vunpack.c.l.b16 %v2020
        %v2065 = vunpack.c.l.b16 %v2021
        %v2066 = vunpack.c.l.b16 %v2022
        %v2067 = vunpack.c.l.b16 %v2023
        %v2068 = vunpack.c.l.b16 %v2024
        %v2069 = vunpack.c.l.b16 %v2025
        %v2070 = vpack.c.b16 %v2055, %v2054
        %v2071 = vpack.c.b16 %v2057, %v2056
        %v2072 = vpack.c.b16 %v2059, %v2058
        %v2073 = vpack.c.b16 %v2061, %v2060
        %v2074 = vpack.c.b16 %v2063, %v2062
        %v2075 = vpack.c.b16 %v2065, %v2064
        %v2076 = vpack.c.b16 %v2067, %v2066
        %v2077 = vpack.c.b16 %v2069, %v2068
        %v2086 = vunpack.c.l.b16 %v2026
        %v2087 = vunpack.c.l.b16 %v2027
        %v2088 = vunpack.c.l.b16 %v2028
        %v2089 = vunpack.c.l.b16 %v2029
        %v2090 = vunpack.c.l.b16 %v2030
        %v2091 = vunpack.c.l.b16 %v2031
        %v2092 = vunpack.c.l.b16 %v2032
        %v2093 = vunpack.c.l.b16 %v2033
        %v2094 = vpack.c.b16 %v2087, %v2086
        %v2095 = vpack.c.b16 %v2089, %v2088
        %v2096 = vpack.c.b16 %v2091, %v2090
        %v2097 = vpack.c.b16 %v2093, %v2092
        %v2103 = vsel %vm466, %v2070, 0
        %v2106 = vsel %vm466, %v2071, 0
        %v2109 = vsel %vm466, %v2072, 0
        %v2112 = vsel %vm466, %v2073, 0
        %v2115 = vsel %vm466, %v2074, 0
        %v2118 = vsel %vm466, %v2075, 0
        %v2121 = vsel %vm466, %v2076, 0
        %v2124 = vsel %vm466, %v2077, 0
        %2126 = vmatpush.bf16.msra.mxu0 0
        %2127 = vmatpush.bf16.msra.mxu0 0
        %2128 = vmatpush.bf16.msra.mxu0 0
        %2129 = vmatpush.bf16.msra.mxu0 0
        %2130 = vmatpush.bf16.msra.mxu0 %v2097
        %2131 = vmatpush.bf16.msra.mxu0 %v2096
        %2132 = vmatpush.bf16.msra.mxu0 %v2095
        %2133 = vmatpush.bf16.msra.mxu0 %v2094
        %2134 = vmatmul.bf16.gmra.mxu0 %v2103
        %v2135 = vpop.f32.mrf.mxu0
        %v2136 = vadd.f32 %v2036, %v2135
        %v2137 = vpop.f32.mrf.mxu0
        %v2138 = vadd.f32 %v2036, %v2137
        %2139 = vmatmul.bf16.gmra.mxu0 %v2106
        %v2140 = vpop.f32.mrf.mxu0
        %v2141 = vadd.f32 %v2036, %v2140
        %v2142 = vpop.f32.mrf.mxu0
        %v2143 = vadd.f32 %v2036, %v2142
        %2144 = vmatmul.bf16.gmra.mxu0 %v2109
        %v2145 = vpop.f32.mrf.mxu0
        %v2146 = vadd.f32 %v2036, %v2145
        %v2147 = vpop.f32.mrf.mxu0
        %v2148 = vadd.f32 %v2036, %v2147
        %2149 = vmatmul.bf16.gmra.mxu0 %v2112
        %v2150 = vpop.f32.mrf.mxu0
        %v2151 = vadd.f32 %v2036, %v2150
        %v2152 = vpop.f32.mrf.mxu0
        %v2153 = vadd.f32 %v2036, %v2152
        %2154 = vmatmul.bf16.gmra.mxu0 %v2115
        %v2155 = vpop.f32.mrf.mxu0
        %v2156 = vadd.f32 %v2036, %v2155
        %v2157 = vpop.f32.mrf.mxu0
        %v2158 = vadd.f32 %v2036, %v2157
        %2159 = vmatmul.bf16.gmra.mxu0 %v2118
        %v2160 = vpop.f32.mrf.mxu0
        %v2161 = vadd.f32 %v2036, %v2160
        %v2162 = vpop.f32.mrf.mxu0
        %v2163 = vadd.f32 %v2036, %v2162
        %2164 = vmatmul.bf16.gmra.mxu0 %v2121
        %v2165 = vpop.f32.mrf.mxu0
        %v2166 = vadd.f32 %v2036, %v2165
        %v2167 = vpop.f32.mrf.mxu0
        %v2168 = vadd.f32 %v2036, %v2167
        %2169 = vmatmul.bf16.gmra.mxu0 %v2124
        %v2170 = vpop.f32.mrf.mxu0
        %v2171 = vadd.f32 %v2036, %v2170
        %v2172 = vpop.f32.mrf.mxu0
        %v2173 = vadd.f32 %v2036, %v2172
        %2174 = vdwg.mxu0
        %2175 = vst.msk [vmem:[%s403] sm:$0xff] %vm466, %v2136
        %2176 = vst.msk [vmem:[%s403 + $0x8] sm:$0xff] %vm466, %v2138
        %2177 = vst.msk [vmem:[%s403 + $0x10] sm:$0xff] %vm466, %v2141
        %2178 = vst.msk [vmem:[%s403 + $0x18] sm:$0xff] %vm466, %v2143
        %2179 = vst.msk [vmem:[%s403 + $0x20] sm:$0xff] %vm466, %v2146
        %2180 = vst.msk [vmem:[%s403 + $0x28] sm:$0xff] %vm466, %v2148
        %2181 = vst.msk [vmem:[%s403 + $0x30] sm:$0xff] %vm466, %v2151
        %2182 = vst.msk [vmem:[%s403 + $0x38] sm:$0xff] %vm466, %v2153
        %2183 = vst.msk [vmem:[%s403 + $0x40] sm:$0xff] %vm466, %v2156
        %2184 = vst.msk [vmem:[%s403 + $0x48] sm:$0xff] %vm466, %v2158
        %2185 = vst.msk [vmem:[%s403 + $0x50] sm:$0xff] %vm466, %v2161
        %2186 = vst.msk [vmem:[%s403 + $0x58] sm:$0xff] %vm466, %v2163
        %2187 = vst.msk [vmem:[%s403 + $0x60] sm:$0xff] %vm466, %v2166
        %2188 = vst.msk [vmem:[%s403 + $0x68] sm:$0xff] %vm466, %v2168
        %2189 = vst.msk [vmem:[%s403 + $0x70] sm:$0xff] %vm466, %v2171
        %2190 = vst.msk [vmem:[%s403 + $0x78] sm:$0xff] %vm466, %v2173
        %s2191 = smul.u32 16, %s23
        %p2192 = scmp.lt.s32.totalorder %s2191, 31
        %s2193 = scalar_select %p2192, %s2191, 31
        %s2194 = smul.addr %s2193, 8
        %s2195 = scalar_lea.vmem %s11, %s2194
        // Predicated region
        $region69: #{tpu_custom_call.1} parent=63 // pred_check
          %p2196 = pneg %p277
        $region70: #{tpu_custom_call.1} parent=63 // pred_check_branch
          %2198 = sbr.rel (%p2196) target = $region72
        $region71: #{tpu_custom_call.1} parent=63 // pred_region
          %s2199 = smul.u32 16, %s23
        $region72: #{tpu_custom_call.1} parent=63 // pred_fallthru
          _
      $region64: #{tpu_custom_call.1} parent=5 // pred_fallthru
        _
      %p2200 = scmp.le.s32.totalorder 2, %s18
      // Predicated region
      $region73: #{tpu_custom_call.1} parent=5 // pred_check
        %p2201 = pneg %p2200
      $region74: #{tpu_custom_call.1} parent=5 // pred_check_branch
        %2203 = sbr.rel (%p2201) target = $region76
      $region75: #{tpu_custom_call.1} parent=5 // pred_region
        %s2204 = ssub.s32 %s18, 2
        // Predicated region
        $region77: #{tpu_custom_call.1} parent=75 // pred_check
          %p2205 = pneg %p283
        $region78: #{tpu_custom_call.1} parent=75 // pred_check_branch
          %2207 = sbr.rel (%p2205) target = $region80
        $region79: #{tpu_custom_call.1} parent=75 // pred_region
          %s2208 = smul.u32 16, %s24
          %p2209 = scmp.lt.s32.totalorder %s2208, 31
          %s2210 = scalar_select %p2209, %s2208, 31
          %s2211 = smul.addr %s2210, 8
          %s2212 = scalar_lea.vmem %s11, %s2211
        $region80: #{tpu_custom_call.1} parent=75 // pred_fallthru
          _
      $region76: #{tpu_custom_call.1} parent=5 // pred_fallthru
        _
    $region6: #{tpu_custom_call.1} parent=1 // loop_footer
      %s22 = sadd.s32 1, %s18
    $region7: #{tpu_custom_call.1} parent=1 // loop_footer_branch
      %17 = sbr.rel target = $region3
    $region8: #{tpu_custom_call.1} parent=1 // loop_exit
      _
    %2213 = vsyncpa [#allocation4], 1
    %s2214 = scalar_lea.sflag [#allocation4], 1
    %2215 = vsyncpa %s2214, 1

</llo_original>
